<compile_context>
chip_gen: v7x
topology: tpu7x:2x2x1
jax: 0.10.0
libtpu: 0.0.40
codegen_flags: <defaults>
</compile_context>

<pallas_src>
import functools
import math

import jax
import jax.numpy as jnp
from jax.experimental import pallas as pl
from jax.experimental.pallas import tpu as pltpu

# ----------------------------------------------------------------------------
# Observation layout constants (mirrors the PyTorch module)
# ----------------------------------------------------------------------------
KV = 9                       # DEFAULT_KEY_VALUE_SIZE
LEN_JOINTS, NUM_JOINTS = 27, 3
JOINT_LEN = LEN_JOINTS // NUM_JOINTS          # 9
LEN_OBJECT, NUM_OBJECTS = 17, 10
LEN_GOAL, NUM_GOALS = 11, 10
LEN_BLOCK, NUM_BLOCKS = 11, 2

OBJ_START = LEN_JOINTS                                    # 27
GOAL_START = OBJ_START + NUM_OBJECTS * LEN_OBJECT         # 197
BLOCK_START = GOAL_START + NUM_GOALS * LEN_GOAL           # 307
OBS_FULL = BLOCK_START + NUM_BLOCKS * LEN_BLOCK           # 329

NUM_QUERIES = NUM_JOINTS + NUM_OBJECTS + NUM_GOALS + NUM_BLOCKS   # 25
ATT_LEN = KV * NUM_QUERIES                                        # 225

LN_EPS = 1e-5


# ----------------------------------------------------------------------------
# Fused kernel.
# ----------------------------------------------------------------------------
def _fused_kernel(x_ref, st_ref,
                  wkvr_ref, bkvr_ref, segrep_ref, attg_ref, attb_ref,
                  wih0_ref, whh0_ref, b0_ref, wih1_ref, whh1_ref, b1_ref,
                  lng_ref, lnb_ref, wres_ref, bres_ref,
                  out_ref):
    H = lng_ref.shape[-1]
    f32 = jnp.float32
    bf16 = jnp.bfloat16

    x = x_ref[...]                                   # (TB, 329) bf16
    seg_rep = segrep_ref[...]                        # (225, 225) bf16 (exact 0/1)

    # ---- single lane-dense block-diagonal [K|K|V|V|R] projection ------------
    # key columns are pre-scaled by KV**-0.25 wrapper-side, so the key dot
    # products below come out already divided by sqrt(KV).
    kvr = jnp.dot(x, wkvr_ref[...], preferred_element_type=f32) + bkvr_ref[...]
    keys2 = kvr[:, 0:2 * ATT_LEN]                    # (TB, 450) tokens duplicated
    vals2 = kvr[:, 2 * ATT_LEN:4 * ATT_LEN]          # (TB, 450)
    resid = kvr[:, 4 * ATT_LEN:5 * ATT_LEN]          # (TB, 225)
    keys = keys2[:, :ATT_LEN]
    vals = vals2[:, :ATT_LEN]

    # ---- 25x25 self-attention: diagonal sweep + online softmax --------------
    # Diagonal j holds score[b, t, (t+j) % 25] for every token t at once,
    # already replicated over the 9-dim axis by the segment-sum matmul, so the
    # softmax recurrence is purely element-wise (no cross-lane reductions).
    s0 = jnp.dot((keys * keys).astype(bf16), seg_rep,
                 preferred_element_type=f32)                     # (TB, 225)
    m = s0                                    # running max  (replicated over d)
    l = jnp.ones_like(s0)                     # running denominator
    acc = vals                                # running weighted-value sum

    for j in range(1, NUM_QUERIES):           # static unroll (24)
        k_sh = keys2[:, j * KV:j * KV + ATT_LEN]                 # K_{(t+j)%25}
        v_sh = vals2[:, j * KV:j * KV + ATT_LEN]                 # V_{(t+j)%25}
        s = jnp.dot((keys * k_sh).astype(bf16), seg_rep,
                    preferred_element_type=f32)                  # (TB, 225)
        m_new = jnp.maximum(m, s)
        alpha = jnp.exp(m - m_new)
        p = jnp.exp(s - m_new)
        l = alpha * l + p
        acc = alpha * acc + p * v_sh
        m = m_new

    att = acc * pl.reciprocal(l, approx=True) + resid            # (TB, 225)

    # ---- per-token LayerNorm (mean/var folded into segment-sum matmuls) -----
    inv_kv = 1.0 / KV
    mu = jnp.dot(att.astype(bf16), seg_rep, preferred_element_type=f32) * inv_kv
    cent = att - mu
    var = jnp.dot((cent * cent).astype(bf16), seg_rep,
                  preferred_element_type=f32) * inv_kv
    att_ln = cent * jax.lax.rsqrt(var + LN_EPS) * attg_ref[...] + attb_ref[...]

    # ---- 2-layer LSTM single step (PyTorch i, f, g, o gate order) -----------
    st = st_ref[...]                          # (TB, 4H) f32 = [h0|h1|c0|c1]
    h0 = st[:, 0:H]
    h1 = st[:, H:2 * H]
    c0 = st[:, 2 * H:3 * H]
    c1 = st[:, 3 * H:4 * H]

    def lstm_cell(gates, c):
        i = jax.nn.sigmoid(gates[:, 0:H])
        f = jax.nn.sigmoid(gates[:, H:2 * H])
        g = jnp.tanh(gates[:, 2 * H:3 * H])
        o = jax.nn.sigmoid(gates[:, 3 * H:4 * H])
        cn = f * c + i * g
        return o * jnp.tanh(cn), cn

    gates0 = (jnp.dot(att_ln.astype(bf16), wih0_ref[...],
                      preferred_element_type=f32)
              + jnp.dot(h0.astype(bf16), whh0_ref[...],
                        preferred_element_type=f32)
              + b0_ref[...])
    h0n, c0n = lstm_cell(gates0, c0)

    gates1 = (jnp.dot(h0n.astype(bf16), wih1_ref[...],
                      preferred_element_type=f32)
              + jnp.dot(h1.astype(bf16), whh1_ref[...],
                        preferred_element_type=f32)
              + b1_ref[...])
    h1n, c1n = lstm_cell(gates1, c1)

    # ---- final layernorm + residual linear ----------------------------------
    mu2 = jnp.mean(h1n, axis=-1, keepdims=True)
    var2 = jnp.mean((h1n - mu2) ** 2, axis=-1, keepdims=True)
    ln = (h1n - mu2) * jax.lax.rsqrt(var2 + LN_EPS) * lng_ref[...] + lnb_ref[...]

    y = (jnp.dot(x, wres_ref[...], preferred_element_type=f32)
         + bres_ref[...] + ln)

    # packed lane-dense output row: [y | h0' | h1' | c0' | c1']
    out_ref[:, 0:H] = y
    out_ref[:, H:2 * H] = h0n
    out_ref[:, 2 * H:3 * H] = h1n
    out_ref[:, 3 * H:4 * H] = c0n
    out_ref[:, 4 * H:5 * H] = c1n


# ----------------------------------------------------------------------------
# Wrapper glue (weight packing + state packing in plain JAX)
# ----------------------------------------------------------------------------
def _pick_batch_tile(B, cap=256):
    """Batch tile <= cap, multiple of 8 (or full B), dividing B.  Prefers a
    >=2-step grid when cleanly possible so both v7x TensorCores are used."""
    if B <= cap:
        if B % 2 == 0 and (B // 2) % 8 == 0:
            return B // 2
        return B
    for tb in range(cap, 7, -1):
        if B % tb == 0 and tb % 8 == 0:
            return tb
    return B


def _role_blockdiag(params, role):
    """Pack the 4 per-group nn.Linear layers of one role into a block-diagonal
    (329, 225) weight and a flat (225,) per-token bias."""
    w = jax.scipy.linalg.block_diag(
        jnp.kron(jnp.eye(NUM_JOINTS, dtype=jnp.float32), params[f"joint_{role}_w"]),
        jnp.kron(jnp.eye(NUM_OBJECTS, dtype=jnp.float32), params[f"object_{role}_w"]),
        jnp.kron(jnp.eye(NUM_GOALS, dtype=jnp.float32), params[f"goal_{role}_w"]),
        jnp.kron(jnp.eye(NUM_BLOCKS, dtype=jnp.float32), params[f"block_{role}_w"]),
    )                                                         # (329, 225)
    b = jnp.concatenate([
        jnp.tile(params[f"joint_{role}_b"], NUM_JOINTS),
        jnp.tile(params[f"object_{role}_b"], NUM_OBJECTS),
        jnp.tile(params[f"goal_{role}_b"], NUM_GOALS),
        jnp.tile(params[f"block_{role}_b"], NUM_BLOCKS),
    ])                                                        # (225,)
    return w, b


@functools.partial(jax.jit, static_argnames=("hidden_size",))
def lazy_planner_starter(params, x, current_hidden_state, current_cell_state,
                         hidden_size):
    B = x.shape[0]
    H = hidden_size
    TB = _pick_batch_tile(B)
    x329 = x[:, :OBS_FULL].astype(jnp.bfloat16)

    # [K|K|V|V|R] block-diagonal projection; key columns pre-scaled so that
    # K.K already carries the 1/sqrt(KV) attention scale.
    key_scale = float(KV) ** -0.25
    wk, bk = _role_blockdiag(params, "K")
    wk, bk = wk * key_scale, bk * key_scale
    wv, bv = _role_blockdiag(params, "V")
    wr, br = _role_blockdiag(params, "R")
    wkvr = jnp.concatenate([wk, wk, wv, wv, wr], axis=1).astype(jnp.bfloat16)  # (329, 1125)
    bkvr = jnp.concatenate([bk, bk, bv, bv, br])[None, :]                      # (1, 1125) f32

    # (225, 225) segment-sum-and-replicate matrix (exact 0/1 in bf16).
    tok = jnp.arange(ATT_LEN) // KV
    seg_rep = (tok[:, None] == tok[None, :]).astype(jnp.bfloat16)

    # per-token LN params tiled to the flat 225-lane domain (free, wrapper-side)
    attg = jnp.tile(params["att_ln_g"], NUM_QUERIES)[None, :]                  # (1, 225)
    attb = jnp.tile(params["att_ln_b"], NUM_QUERIES)[None, :]

    # lane-dense LSTM state slab [h0|h1|c0|c1]  (cell state kept in f32)
    state = jnp.concatenate(
        [current_hidden_state.reshape(B, 2 * H),
         current_cell_state.reshape(B, 2 * H)], axis=1).astype(jnp.float32)    # (B, 4H)

    bf = lambda a: a.astype(jnp.bfloat16)
    rep = lambda shape: pl.BlockSpec(shape, lambda i: (0, 0))

    operands = (
        x329, state,
        wkvr, bkvr, seg_rep, attg, attb,
        bf(params["wih0"]), bf(params["whh0"]), params["b0"][None, :],
        bf(params["wih1"]), bf(params["whh1"]), params["b1"][None, :],
        params["ln_g"][None, :], params["ln_b"][None, :],
        bf(params["wres"]), params["bres"][None, :],
    )
    in_specs = [
        pl.BlockSpec((TB, OBS_FULL), lambda i: (i, 0)),
        pl.BlockSpec((TB, 4 * H), lambda i: (i, 0)),
        rep((OBS_FULL, 5 * ATT_LEN)), rep((1, 5 * ATT_LEN)),
        rep((ATT_LEN, ATT_LEN)), rep((1, ATT_LEN)), rep((1, ATT_LEN)),
        rep((ATT_LEN, 4 * H)), rep((H, 4 * H)), rep((1, 4 * H)),
        rep((H, 4 * H)), rep((H, 4 * H)), rep((1, 4 * H)),
        rep((1, H)), rep((1, H)),
        rep((OBS_FULL, H)), rep((1, H)),
    ]

    packed = pl.pallas_call(
        _fused_kernel,
        out_shape=jax.ShapeDtypeStruct((B, 5 * H), jnp.float32),
        grid=(B // TB,),
        in_specs=in_specs,
        out_specs=pl.BlockSpec((TB, 5 * H), lambda i: (i, 0)),
        compiler_params=pltpu.CompilerParams(
            dimension_semantics=("parallel",)),
    )(*operands)

    y = packed[:, 0:H]                                        # (B, H)
    next_hidden = packed[:, H:3 * H].reshape(B, 2, H)         # (B, 2, H)
    next_cell = packed[:, 3 * H:5 * H].reshape(B, 2, H)       # (B, 2, H)
    return y, next_hidden, next_cell


# ----------------------------------------------------------------------------
# Parameter construction (deterministic, weights in (in, out) layout).
# ----------------------------------------------------------------------------
def make_params(key, hidden_size):
    H = hidden_size
    keys = jax.random.split(key, 64)
    ki = iter(keys)
    n = lambda shape, s=0.1: s * jax.random.normal(next(ki), shape, dtype=jnp.float32)

    p = {}
    for grp, d in (("joint", JOINT_LEN), ("object", LEN_OBJECT),
                   ("goal", LEN_GOAL), ("block", LEN_BLOCK)):
        for role in ("K", "V", "R"):
            p[f"{grp}_{role}_w"] = n((d, KV))
            p[f"{grp}_{role}_b"] = n((KV,))
    p["att_ln_g"] = jnp.ones((KV,), jnp.float32)
    p["att_ln_b"] = jnp.zeros((KV,), jnp.float32)

    # LSTM (PyTorch gate order i, f, g, o), combined bias = b_ih + b_hh
    p["wih0"] = n((ATT_LEN, 4 * H))
    p["whh0"] = n((H, 4 * H))
    p["b0"] = n((4 * H,)) + n((4 * H,))
    p["wih1"] = n((H, 4 * H))
    p["whh1"] = n((H, 4 * H))
    p["b1"] = n((4 * H,)) + n((4 * H,))

    p["ln_g"] = jnp.ones((H,), jnp.float32)
    p["ln_b"] = jnp.zeros((H,), jnp.float32)
    p["wres"] = n((OBS_FULL, H))
    p["bres"] = n((H,))
    return p


# ----------------------------------------------------------------------------
# Pure-JAX f32 reference (same math) for verification.
# ----------------------------------------------------------------------------
def reference(params, x, hidden, cell, hidden_size):
    B = x.shape[0]
    x329 = x[:, :OBS_FULL]

    def group_proj(xg, w, b):
        return jnp.einsum("btf,fk->btk", xg, w) + b

    joint = x329[:, :LEN_JOINTS].reshape(B, NUM_JOINTS, JOINT_LEN)
    obj = x329[:, OBJ_START:GOAL_START].reshape(B, NUM_OBJECTS, LEN_OBJECT)
    goal = x329[:, GOAL_START:BLOCK_START].reshape(B, NUM_GOALS, LEN_GOAL)
    block = x329[:, BLOCK_START:OBS_FULL].reshape(B, NUM_BLOCKS, LEN_BLOCK)
    grps = {"joint": joint, "object": obj, "goal": goal, "block": block}

    def cat(role):
        return jnp.concatenate([group_proj(grps[g], params[f"{g}_{role}_w"],
                                           params[f"{g}_{role}_b"])
                                for g in ("joint", "object", "goal", "block")],
                               axis=1)

    keys, values, resid = cat("K"), cat("V"), cat("R")
    scores = jnp.einsum("bqd,bkd->bqk", keys, keys) / math.sqrt(KV)
    attn = jax.nn.softmax(scores, axis=-1)
    att = jnp.einsum("bqk,bkd->bqd", attn, values) + resid
    mu = att.mean(-1, keepdims=True)
    var = ((att - mu) ** 2).mean(-1, keepdims=True)
    att = (att - mu) / jnp.sqrt(var + LN_EPS) * params["att_ln_g"] + params["att_ln_b"]

    a = att.reshape(B, ATT_LEN)

    def cell_fn(x_in, h, c, wih, whh, b):
        gates = x_in @ wih + h @ whh + b
        i, f, g, o = jnp.split(gates, 4, axis=-1)
        cn = jax.nn.sigmoid(f) * c + jax.nn.sigmoid(i) * jnp.tanh(g)
        hn = jax.nn.sigmoid(o) * jnp.tanh(cn)
        return hn, cn

    h0n, c0n = cell_fn(a, hidden[:, 0], cell[:, 0],
                       params["wih0"], params["whh0"], params["b0"])
    h1n, c1n = cell_fn(h0n, hidden[:, 1], cell[:, 1],
                       params["wih1"], params["whh1"], params["b1"])

    mu = h1n.mean(-1, keepdims=True)
    var = ((h1n - mu) ** 2).mean(-1, keepdims=True)
    ln = (h1n - mu) / jnp.sqrt(var + LN_EPS) * params["ln_g"] + params["ln_b"]
    y = x329 @ params["wres"] + params["bres"] + ln
    return y, jnp.stack([h0n, h1n], 1), jnp.stack([c0n, c1n], 1)


# ----------------------------------------------------------------------------
if __name__ == "__main__":
    B, H = 2, 32
    key = jax.random.PRNGKey(0)
    k_p, k_x, k_h, k_c = jax.random.split(key, 4)

    params = make_params(k_p, H)
    x = jax.random.normal(k_x, (B, OBS_FULL), dtype=jnp.float32)
    hidden = jax.random.normal(k_h, (B, 2, H), dtype=jnp.float32)
    cell = jax.random.normal(k_c, (B, 2, H), dtype=jnp.float32)

    y, nh, nc = lazy_planner_starter(params, x, hidden, cell, hidden_size=H)
    jax.block_until_ready((y, nh, nc))

    y_ref, nh_ref, nc_ref = reference(params, x, hidden, cell, H)
    assert y.shape == (B, H) and nh.shape == (B, 2, H) and nc.shape == (B, 2, H)
    # bf16 MXU operands (f32 accumulation) vs the f32 reference.
    TOL = dict(atol=3e-2, rtol=3e-2)
    assert jnp.allclose(y, y_ref, **TOL), "y mismatch"
    assert jnp.allclose(nh, nh_ref, **TOL), "hidden mismatch"
    assert jnp.allclose(nc, nc_ref, **TOL), "cell mismatch"

    print("KERNEL_OK")
</pallas_src>

<mosaic_0001>
module attributes {stable_mosaic.version = 11 : i64} {
  func.func @_fused_kernel(%arg0: i32, %arg1: memref<2x329xbf16, #tpu.memory_space<vmem>>, %arg2: memref<2x128xf32, #tpu.memory_space<vmem>>, %arg3: memref<329x1125xbf16, #tpu.memory_space<vmem>>, %arg4: memref<1x1125xf32, #tpu.memory_space<vmem>>, %arg5: memref<225x225xbf16, #tpu.memory_space<vmem>>, %arg6: memref<1x225xf32, #tpu.memory_space<vmem>>, %arg7: memref<1x225xf32, #tpu.memory_space<vmem>>, %arg8: memref<225x128xbf16, #tpu.memory_space<vmem>>, %arg9: memref<32x128xbf16, #tpu.memory_space<vmem>>, %arg10: memref<1x128xf32, #tpu.memory_space<vmem>>, %arg11: memref<32x128xbf16, #tpu.memory_space<vmem>>, %arg12: memref<32x128xbf16, #tpu.memory_space<vmem>>, %arg13: memref<1x128xf32, #tpu.memory_space<vmem>>, %arg14: memref<1x32xf32, #tpu.memory_space<vmem>>, %arg15: memref<1x32xf32, #tpu.memory_space<vmem>>, %arg16: memref<329x32xbf16, #tpu.memory_space<vmem>>, %arg17: memref<1x32xf32, #tpu.memory_space<vmem>>, %arg18: memref<2x160xf32, #tpu.memory_space<vmem>>) attributes {dimension_semantics = [#tpu.dimension_semantics<parallel>], iteration_bounds = array<i64: 1>, scalar_prefetch = 0 : i64, scratch_operands = 0 : i64, tpu.core_type = #tpu.core_type<tc>, window_params = [{transform_indices = @transform_0, window_bounds = array<i64: 2, 329>}, {transform_indices = @transform_1, window_bounds = array<i64: 2, 128>}, {pipeline_mode = #tpu.pipeline_mode<synchronous>, transform_indices = @transform_2, window_bounds = array<i64: 329, 1125>}, {pipeline_mode = #tpu.pipeline_mode<synchronous>, transform_indices = @transform_3, window_bounds = array<i64: 1, 1125>}, {pipeline_mode = #tpu.pipeline_mode<synchronous>, transform_indices = @transform_4, window_bounds = array<i64: 225, 225>}, {pipeline_mode = #tpu.pipeline_mode<synchronous>, transform_indices = @transform_5, window_bounds = array<i64: 1, 225>}, {pipeline_mode = #tpu.pipeline_mode<synchronous>, transform_indices = @transform_6, window_bounds = array<i64: 1, 225>}, {pipeline_mode = #tpu.pipeline_mode<synchronous>, transform_indices = @transform_7, window_bounds = array<i64: 225, 128>}, {pipeline_mode = #tpu.pipeline_mode<synchronous>, transform_indices = @transform_8, window_bounds = array<i64: 32, 128>}, {pipeline_mode = #tpu.pipeline_mode<synchronous>, transform_indices = @transform_9, window_bounds = array<i64: 1, 128>}, {pipeline_mode = #tpu.pipeline_mode<synchronous>, transform_indices = @transform_10, window_bounds = array<i64: 32, 128>}, {pipeline_mode = #tpu.pipeline_mode<synchronous>, transform_indices = @transform_11, window_bounds = array<i64: 32, 128>}, {pipeline_mode = #tpu.pipeline_mode<synchronous>, transform_indices = @transform_12, window_bounds = array<i64: 1, 128>}, {pipeline_mode = #tpu.pipeline_mode<synchronous>, transform_indices = @transform_13, window_bounds = array<i64: 1, 32>}, {pipeline_mode = #tpu.pipeline_mode<synchronous>, transform_indices = @transform_14, window_bounds = array<i64: 1, 32>}, {pipeline_mode = #tpu.pipeline_mode<synchronous>, transform_indices = @transform_15, window_bounds = array<i64: 329, 32>}, {pipeline_mode = #tpu.pipeline_mode<synchronous>, transform_indices = @transform_16, window_bounds = array<i64: 1, 32>}, {transform_indices = @transform_17, window_bounds = array<i64: 2, 160>}]} {
    %c0 = arith.constant 0 : index
    %c0_0 = arith.constant 0 : index
    %0 = vector.load %arg1[%c0, %c0_0] : memref<2x329xbf16, #tpu.memory_space<vmem>>, vector<2x329xbf16>
    %c0_1 = arith.constant 0 : index
    %c0_2 = arith.constant 0 : index
    %1 = vector.load %arg5[%c0_1, %c0_2] : memref<225x225xbf16, #tpu.memory_space<vmem>>, vector<225x225xbf16>
    %c0_3 = arith.constant 0 : index
    %c0_4 = arith.constant 0 : index
    %2 = vector.load %arg3[%c0_3, %c0_4] : memref<329x1125xbf16, #tpu.memory_space<vmem>>, vector<329x1125xbf16>
    %cst = arith.constant dense<0.000000e+00> : vector<2x1125xf32>
    %3 = tpu.matmul %0, %2, %cst {dimension_numbers = #tpu.dot_dimension_numbers<[1], [0], [0], [1], [0, 0, 1, 1], [], []>} : vector<2x329xbf16>, vector<329x1125xbf16>, vector<2x1125xf32> -> vector<2x1125xf32>
    %c0_5 = arith.constant 0 : index
    %c0_6 = arith.constant 0 : index
    %4 = vector.load %arg4[%c0_5, %c0_6] : memref<1x1125xf32, #tpu.memory_space<vmem>>, vector<1x1125xf32>
    %5 = vector.broadcast %4 : vector<1x1125xf32> to vector<2x1125xf32>
    %6 = arith.addf %3, %5 : vector<2x1125xf32>
    %7 = vector.extract_strided_slice %6 {offsets = [0, 0], sizes = [2, 450], strides = [1, 1]} : vector<2x1125xf32> to vector<2x450xf32>
    %8 = vector.extract_strided_slice %6 {offsets = [0, 450], sizes = [2, 450], strides = [1, 1]} : vector<2x1125xf32> to vector<2x450xf32>
    %9 = vector.extract_strided_slice %6 {offsets = [0, 900], sizes = [2, 225], strides = [1, 1]} : vector<2x1125xf32> to vector<2x225xf32>
    %10 = vector.extract_strided_slice %7 {offsets = [0, 0], sizes = [2, 225], strides = [1, 1]} : vector<2x450xf32> to vector<2x225xf32>
    %11 = vector.extract_strided_slice %8 {offsets = [0, 0], sizes = [2, 225], strides = [1, 1]} : vector<2x450xf32> to vector<2x225xf32>
    %12 = arith.mulf %10, %10 : vector<2x225xf32>
    %13 = arith.truncf %12 : vector<2x225xf32> to vector<2x225xbf16>
    %cst_7 = arith.constant dense<0.000000e+00> : vector<2x225xf32>
    %14 = tpu.matmul %13, %1, %cst_7 {dimension_numbers = #tpu.dot_dimension_numbers<[1], [0], [0], [1], [0, 0, 1, 1], [], []>} : vector<2x225xbf16>, vector<225x225xbf16>, vector<2x225xf32> -> vector<2x225xf32>
    %cst_8 = arith.constant 1.000000e+00 : f32
    %15 = vector.broadcast %cst_8 : f32 to vector<2x225xf32>
    %16 = vector.extract_strided_slice %7 {offsets = [0, 9], sizes = [2, 225], strides = [1, 1]} : vector<2x450xf32> to vector<2x225xf32>
    %17 = vector.extract_strided_slice %8 {offsets = [0, 9], sizes = [2, 225], strides = [1, 1]} : vector<2x450xf32> to vector<2x225xf32>
    %18 = arith.mulf %10, %16 : vector<2x225xf32>
    %19 = arith.truncf %18 : vector<2x225xf32> to vector<2x225xbf16>
    %cst_9 = arith.constant dense<0.000000e+00> : vector<2x225xf32>
    %20 = tpu.matmul %19, %1, %cst_9 {dimension_numbers = #tpu.dot_dimension_numbers<[1], [0], [0], [1], [0, 0, 1, 1], [], []>} : vector<2x225xbf16>, vector<225x225xbf16>, vector<2x225xf32> -> vector<2x225xf32>
    %21 = arith.maximumf %14, %20 : vector<2x225xf32>
    %22 = arith.subf %14, %21 : vector<2x225xf32>
    %23 = math.exp %22 : vector<2x225xf32>
    %24 = arith.subf %20, %21 : vector<2x225xf32>
    %25 = math.exp %24 : vector<2x225xf32>
    %26 = arith.mulf %23, %15 : vector<2x225xf32>
    %27 = arith.addf %26, %25 : vector<2x225xf32>
    %28 = arith.mulf %23, %11 : vector<2x225xf32>
    %29 = arith.mulf %25, %17 : vector<2x225xf32>
    %30 = arith.addf %28, %29 : vector<2x225xf32>
    %31 = vector.extract_strided_slice %7 {offsets = [0, 18], sizes = [2, 225], strides = [1, 1]} : vector<2x450xf32> to vector<2x225xf32>
    %32 = vector.extract_strided_slice %8 {offsets = [0, 18], sizes = [2, 225], strides = [1, 1]} : vector<2x450xf32> to vector<2x225xf32>
    %33 = arith.mulf %10, %31 : vector<2x225xf32>
    %34 = arith.truncf %33 : vector<2x225xf32> to vector<2x225xbf16>
    %cst_10 = arith.constant dense<0.000000e+00> : vector<2x225xf32>
    %35 = tpu.matmul %34, %1, %cst_10 {dimension_numbers = #tpu.dot_dimension_numbers<[1], [0], [0], [1], [0, 0, 1, 1], [], []>} : vector<2x225xbf16>, vector<225x225xbf16>, vector<2x225xf32> -> vector<2x225xf32>
    %36 = arith.maximumf %21, %35 : vector<2x225xf32>
    %37 = arith.subf %21, %36 : vector<2x225xf32>
    %38 = math.exp %37 : vector<2x225xf32>
    %39 = arith.subf %35, %36 : vector<2x225xf32>
    %40 = math.exp %39 : vector<2x225xf32>
    %41 = arith.mulf %38, %27 : vector<2x225xf32>
    %42 = arith.addf %41, %40 : vector<2x225xf32>
    %43 = arith.mulf %38, %30 : vector<2x225xf32>
    %44 = arith.mulf %40, %32 : vector<2x225xf32>
    %45 = arith.addf %43, %44 : vector<2x225xf32>
    %46 = vector.extract_strided_slice %7 {offsets = [0, 27], sizes = [2, 225], strides = [1, 1]} : vector<2x450xf32> to vector<2x225xf32>
    %47 = vector.extract_strided_slice %8 {offsets = [0, 27], sizes = [2, 225], strides = [1, 1]} : vector<2x450xf32> to vector<2x225xf32>
    %48 = arith.mulf %10, %46 : vector<2x225xf32>
    %49 = arith.truncf %48 : vector<2x225xf32> to vector<2x225xbf16>
    %cst_11 = arith.constant dense<0.000000e+00> : vector<2x225xf32>
    %50 = tpu.matmul %49, %1, %cst_11 {dimension_numbers = #tpu.dot_dimension_numbers<[1], [0], [0], [1], [0, 0, 1, 1], [], []>} : vector<2x225xbf16>, vector<225x225xbf16>, vector<2x225xf32> -> vector<2x225xf32>
    %51 = arith.maximumf %36, %50 : vector<2x225xf32>
    %52 = arith.subf %36, %51 : vector<2x225xf32>
    %53 = math.exp %52 : vector<2x225xf32>
    %54 = arith.subf %50, %51 : vector<2x225xf32>
    %55 = math.exp %54 : vector<2x225xf32>
    %56 = arith.mulf %53, %42 : vector<2x225xf32>
    %57 = arith.addf %56, %55 : vector<2x225xf32>
    %58 = arith.mulf %53, %45 : vector<2x225xf32>
    %59 = arith.mulf %55, %47 : vector<2x225xf32>
    %60 = arith.addf %58, %59 : vector<2x225xf32>
    %61 = vector.extract_strided_slice %7 {offsets = [0, 36], sizes = [2, 225], strides = [1, 1]} : vector<2x450xf32> to vector<2x225xf32>
    %62 = vector.extract_strided_slice %8 {offsets = [0, 36], sizes = [2, 225], strides = [1, 1]} : vector<2x450xf32> to vector<2x225xf32>
    %63 = arith.mulf %10, %61 : vector<2x225xf32>
    %64 = arith.truncf %63 : vector<2x225xf32> to vector<2x225xbf16>
    %cst_12 = arith.constant dense<0.000000e+00> : vector<2x225xf32>
    %65 = tpu.matmul %64, %1, %cst_12 {dimension_numbers = #tpu.dot_dimension_numbers<[1], [0], [0], [1], [0, 0, 1, 1], [], []>} : vector<2x225xbf16>, vector<225x225xbf16>, vector<2x225xf32> -> vector<2x225xf32>
    %66 = arith.maximumf %51, %65 : vector<2x225xf32>
    %67 = arith.subf %51, %66 : vector<2x225xf32>
    %68 = math.exp %67 : vector<2x225xf32>
    %69 = arith.subf %65, %66 : vector<2x225xf32>
    %70 = math.exp %69 : vector<2x225xf32>
    %71 = arith.mulf %68, %57 : vector<2x225xf32>
    %72 = arith.addf %71, %70 : vector<2x225xf32>
    %73 = arith.mulf %68, %60 : vector<2x225xf32>
    %74 = arith.mulf %70, %62 : vector<2x225xf32>
    %75 = arith.addf %73, %74 : vector<2x225xf32>
    %76 = vector.extract_strided_slice %7 {offsets = [0, 45], sizes = [2, 225], strides = [1, 1]} : vector<2x450xf32> to vector<2x225xf32>
    %77 = vector.extract_strided_slice %8 {offsets = [0, 45], sizes = [2, 225], strides = [1, 1]} : vector<2x450xf32> to vector<2x225xf32>
    %78 = arith.mulf %10, %76 : vector<2x225xf32>
    %79 = arith.truncf %78 : vector<2x225xf32> to vector<2x225xbf16>
    %cst_13 = arith.constant dense<0.000000e+00> : vector<2x225xf32>
    %80 = tpu.matmul %79, %1, %cst_13 {dimension_numbers = #tpu.dot_dimension_numbers<[1], [0], [0], [1], [0, 0, 1, 1], [], []>} : vector<2x225xbf16>, vector<225x225xbf16>, vector<2x225xf32> -> vector<2x225xf32>
    %81 = arith.maximumf %66, %80 : vector<2x225xf32>
    %82 = arith.subf %66, %81 : vector<2x225xf32>
    %83 = math.exp %82 : vector<2x225xf32>
    %84 = arith.subf %80, %81 : vector<2x225xf32>
    %85 = math.exp %84 : vector<2x225xf32>
    %86 = arith.mulf %83, %72 : vector<2x225xf32>
    %87 = arith.addf %86, %85 : vector<2x225xf32>
    %88 = arith.mulf %83, %75 : vector<2x225xf32>
    %89 = arith.mulf %85, %77 : vector<2x225xf32>
    %90 = arith.addf %88, %89 : vector<2x225xf32>
    %91 = vector.extract_strided_slice %7 {offsets = [0, 54], sizes = [2, 225], strides = [1, 1]} : vector<2x450xf32> to vector<2x225xf32>
    %92 = vector.extract_strided_slice %8 {offsets = [0, 54], sizes = [2, 225], strides = [1, 1]} : vector<2x450xf32> to vector<2x225xf32>
    %93 = arith.mulf %10, %91 : vector<2x225xf32>
    %94 = arith.truncf %93 : vector<2x225xf32> to vector<2x225xbf16>
    %cst_14 = arith.constant dense<0.000000e+00> : vector<2x225xf32>
    %95 = tpu.matmul %94, %1, %cst_14 {dimension_numbers = #tpu.dot_dimension_numbers<[1], [0], [0], [1], [0, 0, 1, 1], [], []>} : vector<2x225xbf16>, vector<225x225xbf16>, vector<2x225xf32> -> vector<2x225xf32>
    %96 = arith.maximumf %81, %95 : vector<2x225xf32>
    %97 = arith.subf %81, %96 : vector<2x225xf32>
    %98 = math.exp %97 : vector<2x225xf32>
    %99 = arith.subf %95, %96 : vector<2x225xf32>
    %100 = math.exp %99 : vector<2x225xf32>
    %101 = arith.mulf %98, %87 : vector<2x225xf32>
    %102 = arith.addf %101, %100 : vector<2x225xf32>
    %103 = arith.mulf %98, %90 : vector<2x225xf32>
    %104 = arith.mulf %100, %92 : vector<2x225xf32>
    %105 = arith.addf %103, %104 : vector<2x225xf32>
    %106 = vector.extract_strided_slice %7 {offsets = [0, 63], sizes = [2, 225], strides = [1, 1]} : vector<2x450xf32> to vector<2x225xf32>
    %107 = vector.extract_strided_slice %8 {offsets = [0, 63], sizes = [2, 225], strides = [1, 1]} : vector<2x450xf32> to vector<2x225xf32>
    %108 = arith.mulf %10, %106 : vector<2x225xf32>
    %109 = arith.truncf %108 : vector<2x225xf32> to vector<2x225xbf16>
    %cst_15 = arith.constant dense<0.000000e+00> : vector<2x225xf32>
    %110 = tpu.matmul %109, %1, %cst_15 {dimension_numbers = #tpu.dot_dimension_numbers<[1], [0], [0], [1], [0, 0, 1, 1], [], []>} : vector<2x225xbf16>, vector<225x225xbf16>, vector<2x225xf32> -> vector<2x225xf32>
    %111 = arith.maximumf %96, %110 : vector<2x225xf32>
    %112 = arith.subf %96, %111 : vector<2x225xf32>
    %113 = math.exp %112 : vector<2x225xf32>
    %114 = arith.subf %110, %111 : vector<2x225xf32>
    %115 = math.exp %114 : vector<2x225xf32>
    %116 = arith.mulf %113, %102 : vector<2x225xf32>
    %117 = arith.addf %116, %115 : vector<2x225xf32>
    %118 = arith.mulf %113, %105 : vector<2x225xf32>
    %119 = arith.mulf %115, %107 : vector<2x225xf32>
    %120 = arith.addf %118, %119 : vector<2x225xf32>
    %121 = vector.extract_strided_slice %7 {offsets = [0, 72], sizes = [2, 225], strides = [1, 1]} : vector<2x450xf32> to vector<2x225xf32>
    %122 = vector.extract_strided_slice %8 {offsets = [0, 72], sizes = [2, 225], strides = [1, 1]} : vector<2x450xf32> to vector<2x225xf32>
    %123 = arith.mulf %10, %121 : vector<2x225xf32>
    %124 = arith.truncf %123 : vector<2x225xf32> to vector<2x225xbf16>
    %cst_16 = arith.constant dense<0.000000e+00> : vector<2x225xf32>
    %125 = tpu.matmul %124, %1, %cst_16 {dimension_numbers = #tpu.dot_dimension_numbers<[1], [0], [0], [1], [0, 0, 1, 1], [], []>} : vector<2x225xbf16>, vector<225x225xbf16>, vector<2x225xf32> -> vector<2x225xf32>
    %126 = arith.maximumf %111, %125 : vector<2x225xf32>
    %127 = arith.subf %111, %126 : vector<2x225xf32>
    %128 = math.exp %127 : vector<2x225xf32>
    %129 = arith.subf %125, %126 : vector<2x225xf32>
    %130 = math.exp %129 : vector<2x225xf32>
    %131 = arith.mulf %128, %117 : vector<2x225xf32>
    %132 = arith.addf %131, %130 : vector<2x225xf32>
    %133 = arith.mulf %128, %120 : vector<2x225xf32>
    %134 = arith.mulf %130, %122 : vector<2x225xf32>
    %135 = arith.addf %133, %134 : vector<2x225xf32>
    %136 = vector.extract_strided_slice %7 {offsets = [0, 81], sizes = [2, 225], strides = [1, 1]} : vector<2x450xf32> to vector<2x225xf32>
    %137 = vector.extract_strided_slice %8 {offsets = [0, 81], sizes = [2, 225], strides = [1, 1]} : vector<2x450xf32> to vector<2x225xf32>
    %138 = arith.mulf %10, %136 : vector<2x225xf32>
    %139 = arith.truncf %138 : vector<2x225xf32> to vector<2x225xbf16>
    %cst_17 = arith.constant dense<0.000000e+00> : vector<2x225xf32>
    %140 = tpu.matmul %139, %1, %cst_17 {dimension_numbers = #tpu.dot_dimension_numbers<[1], [0], [0], [1], [0, 0, 1, 1], [], []>} : vector<2x225xbf16>, vector<225x225xbf16>, vector<2x225xf32> -> vector<2x225xf32>
    %141 = arith.maximumf %126, %140 : vector<2x225xf32>
    %142 = arith.subf %126, %141 : vector<2x225xf32>
    %143 = math.exp %142 : vector<2x225xf32>
    %144 = arith.subf %140, %141 : vector<2x225xf32>
    %145 = math.exp %144 : vector<2x225xf32>
    %146 = arith.mulf %143, %132 : vector<2x225xf32>
    %147 = arith.addf %146, %145 : vector<2x225xf32>
    %148 = arith.mulf %143, %135 : vector<2x225xf32>
    %149 = arith.mulf %145, %137 : vector<2x225xf32>
    %150 = arith.addf %148, %149 : vector<2x225xf32>
    %151 = vector.extract_strided_slice %7 {offsets = [0, 90], sizes = [2, 225], strides = [1, 1]} : vector<2x450xf32> to vector<2x225xf32>
    %152 = vector.extract_strided_slice %8 {offsets = [0, 90], sizes = [2, 225], strides = [1, 1]} : vector<2x450xf32> to vector<2x225xf32>
    %153 = arith.mulf %10, %151 : vector<2x225xf32>
    %154 = arith.truncf %153 : vector<2x225xf32> to vector<2x225xbf16>
    %cst_18 = arith.constant dense<0.000000e+00> : vector<2x225xf32>
    %155 = tpu.matmul %154, %1, %cst_18 {dimension_numbers = #tpu.dot_dimension_numbers<[1], [0], [0], [1], [0, 0, 1, 1], [], []>} : vector<2x225xbf16>, vector<225x225xbf16>, vector<2x225xf32> -> vector<2x225xf32>
    %156 = arith.maximumf %141, %155 : vector<2x225xf32>
    %157 = arith.subf %141, %156 : vector<2x225xf32>
    %158 = math.exp %157 : vector<2x225xf32>
    %159 = arith.subf %155, %156 : vector<2x225xf32>
    %160 = math.exp %159 : vector<2x225xf32>
    %161 = arith.mulf %158, %147 : vector<2x225xf32>
    %162 = arith.addf %161, %160 : vector<2x225xf32>
    %163 = arith.mulf %158, %150 : vector<2x225xf32>
    %164 = arith.mulf %160, %152 : vector<2x225xf32>
    %165 = arith.addf %163, %164 : vector<2x225xf32>
    %166 = vector.extract_strided_slice %7 {offsets = [0, 99], sizes = [2, 225], strides = [1, 1]} : vector<2x450xf32> to vector<2x225xf32>
    %167 = vector.extract_strided_slice %8 {offsets = [0, 99], sizes = [2, 225], strides = [1, 1]} : vector<2x450xf32> to vector<2x225xf32>
    %168 = arith.mulf %10, %166 : vector<2x225xf32>
    %169 = arith.truncf %168 : vector<2x225xf32> to vector<2x225xbf16>
    %cst_19 = arith.constant dense<0.000000e+00> : vector<2x225xf32>
    %170 = tpu.matmul %169, %1, %cst_19 {dimension_numbers = #tpu.dot_dimension_numbers<[1], [0], [0], [1], [0, 0, 1, 1], [], []>} : vector<2x225xbf16>, vector<225x225xbf16>, vector<2x225xf32> -> vector<2x225xf32>
    %171 = arith.maximumf %156, %170 : vector<2x225xf32>
    %172 = arith.subf %156, %171 : vector<2x225xf32>
    %173 = math.exp %172 : vector<2x225xf32>
    %174 = arith.subf %170, %171 : vector<2x225xf32>
    %175 = math.exp %174 : vector<2x225xf32>
    %176 = arith.mulf %173, %162 : vector<2x225xf32>
    %177 = arith.addf %176, %175 : vector<2x225xf32>
    %178 = arith.mulf %173, %165 : vector<2x225xf32>
    %179 = arith.mulf %175, %167 : vector<2x225xf32>
    %180 = arith.addf %178, %179 : vector<2x225xf32>
    %181 = vector.extract_strided_slice %7 {offsets = [0, 108], sizes = [2, 225], strides = [1, 1]} : vector<2x450xf32> to vector<2x225xf32>
    %182 = vector.extract_strided_slice %8 {offsets = [0, 108], sizes = [2, 225], strides = [1, 1]} : vector<2x450xf32> to vector<2x225xf32>
    %183 = arith.mulf %10, %181 : vector<2x225xf32>
    %184 = arith.truncf %183 : vector<2x225xf32> to vector<2x225xbf16>
    %cst_20 = arith.constant dense<0.000000e+00> : vector<2x225xf32>
    %185 = tpu.matmul %184, %1, %cst_20 {dimension_numbers = #tpu.dot_dimension_numbers<[1], [0], [0], [1], [0, 0, 1, 1], [], []>} : vector<2x225xbf16>, vector<225x225xbf16>, vector<2x225xf32> -> vector<2x225xf32>
    %186 = arith.maximumf %171, %185 : vector<2x225xf32>
    %187 = arith.subf %171, %186 : vector<2x225xf32>
    %188 = math.exp %187 : vector<2x225xf32>
    %189 = arith.subf %185, %186 : vector<2x225xf32>
    %190 = math.exp %189 : vector<2x225xf32>
    %191 = arith.mulf %188, %177 : vector<2x225xf32>
    %192 = arith.addf %191, %190 : vector<2x225xf32>
    %193 = arith.mulf %188, %180 : vector<2x225xf32>
    %194 = arith.mulf %190, %182 : vector<2x225xf32>
    %195 = arith.addf %193, %194 : vector<2x225xf32>
    %196 = vector.extract_strided_slice %7 {offsets = [0, 117], sizes = [2, 225], strides = [1, 1]} : vector<2x450xf32> to vector<2x225xf32>
    %197 = vector.extract_strided_slice %8 {offsets = [0, 117], sizes = [2, 225], strides = [1, 1]} : vector<2x450xf32> to vector<2x225xf32>
    %198 = arith.mulf %10, %196 : vector<2x225xf32>
    %199 = arith.truncf %198 : vector<2x225xf32> to vector<2x225xbf16>
    %cst_21 = arith.constant dense<0.000000e+00> : vector<2x225xf32>
    %200 = tpu.matmul %199, %1, %cst_21 {dimension_numbers = #tpu.dot_dimension_numbers<[1], [0], [0], [1], [0, 0, 1, 1], [], []>} : vector<2x225xbf16>, vector<225x225xbf16>, vector<2x225xf32> -> vector<2x225xf32>
    %201 = arith.maximumf %186, %200 : vector<2x225xf32>
    %202 = arith.subf %186, %201 : vector<2x225xf32>
    %203 = math.exp %202 : vector<2x225xf32>
    %204 = arith.subf %200, %201 : vector<2x225xf32>
    %205 = math.exp %204 : vector<2x225xf32>
    %206 = arith.mulf %203, %192 : vector<2x225xf32>
    %207 = arith.addf %206, %205 : vector<2x225xf32>
    %208 = arith.mulf %203, %195 : vector<2x225xf32>
    %209 = arith.mulf %205, %197 : vector<2x225xf32>
    %210 = arith.addf %208, %209 : vector<2x225xf32>
    %211 = vector.extract_strided_slice %7 {offsets = [0, 126], sizes = [2, 225], strides = [1, 1]} : vector<2x450xf32> to vector<2x225xf32>
    %212 = vector.extract_strided_slice %8 {offsets = [0, 126], sizes = [2, 225], strides = [1, 1]} : vector<2x450xf32> to vector<2x225xf32>
    %213 = arith.mulf %10, %211 : vector<2x225xf32>
    %214 = arith.truncf %213 : vector<2x225xf32> to vector<2x225xbf16>
    %cst_22 = arith.constant dense<0.000000e+00> : vector<2x225xf32>
    %215 = tpu.matmul %214, %1, %cst_22 {dimension_numbers = #tpu.dot_dimension_numbers<[1], [0], [0], [1], [0, 0, 1, 1], [], []>} : vector<2x225xbf16>, vector<225x225xbf16>, vector<2x225xf32> -> vector<2x225xf32>
    %216 = arith.maximumf %201, %215 : vector<2x225xf32>
    %217 = arith.subf %201, %216 : vector<2x225xf32>
    %218 = math.exp %217 : vector<2x225xf32>
    %219 = arith.subf %215, %216 : vector<2x225xf32>
    %220 = math.exp %219 : vector<2x225xf32>
    %221 = arith.mulf %218, %207 : vector<2x225xf32>
    %222 = arith.addf %221, %220 : vector<2x225xf32>
    %223 = arith.mulf %218, %210 : vector<2x225xf32>
    %224 = arith.mulf %220, %212 : vector<2x225xf32>
    %225 = arith.addf %223, %224 : vector<2x225xf32>
    %226 = vector.extract_strided_slice %7 {offsets = [0, 135], sizes = [2, 225], strides = [1, 1]} : vector<2x450xf32> to vector<2x225xf32>
    %227 = vector.extract_strided_slice %8 {offsets = [0, 135], sizes = [2, 225], strides = [1, 1]} : vector<2x450xf32> to vector<2x225xf32>
    %228 = arith.mulf %10, %226 : vector<2x225xf32>
    %229 = arith.truncf %228 : vector<2x225xf32> to vector<2x225xbf16>
    %cst_23 = arith.constant dense<0.000000e+00> : vector<2x225xf32>
    %230 = tpu.matmul %229, %1, %cst_23 {dimension_numbers = #tpu.dot_dimension_numbers<[1], [0], [0], [1], [0, 0, 1, 1], [], []>} : vector<2x225xbf16>, vector<225x225xbf16>, vector<2x225xf32> -> vector<2x225xf32>
    %231 = arith.maximumf %216, %230 : vector<2x225xf32>
    %232 = arith.subf %216, %231 : vector<2x225xf32>
    %233 = math.exp %232 : vector<2x225xf32>
    %234 = arith.subf %230, %231 : vector<2x225xf32>
    %235 = math.exp %234 : vector<2x225xf32>
    %236 = arith.mulf %233, %222 : vector<2x225xf32>
    %237 = arith.addf %236, %235 : vector<2x225xf32>
    %238 = arith.mulf %233, %225 : vector<2x225xf32>
    %239 = arith.mulf %235, %227 : vector<2x225xf32>
    %240 = arith.addf %238, %239 : vector<2x225xf32>
    %241 = vector.extract_strided_slice %7 {offsets = [0, 144], sizes = [2, 225], strides = [1, 1]} : vector<2x450xf32> to vector<2x225xf32>
    %242 = vector.extract_strided_slice %8 {offsets = [0, 144], sizes = [2, 225], strides = [1, 1]} : vector<2x450xf32> to vector<2x225xf32>
    %243 = arith.mulf %10, %241 : vector<2x225xf32>
    %244 = arith.truncf %243 : vector<2x225xf32> to vector<2x225xbf16>
    %cst_24 = arith.constant dense<0.000000e+00> : vector<2x225xf32>
    %245 = tpu.matmul %244, %1, %cst_24 {dimension_numbers = #tpu.dot_dimension_numbers<[1], [0], [0], [1], [0, 0, 1, 1], [], []>} : vector<2x225xbf16>, vector<225x225xbf16>, vector<2x225xf32> -> vector<2x225xf32>
    %246 = arith.maximumf %231, %245 : vector<2x225xf32>
    %247 = arith.subf %231, %246 : vector<2x225xf32>
    %248 = math.exp %247 : vector<2x225xf32>
    %249 = arith.subf %245, %246 : vector<2x225xf32>
    %250 = math.exp %249 : vector<2x225xf32>
    %251 = arith.mulf %248, %237 : vector<2x225xf32>
    %252 = arith.addf %251, %250 : vector<2x225xf32>
    %253 = arith.mulf %248, %240 : vector<2x225xf32>
    %254 = arith.mulf %250, %242 : vector<2x225xf32>
    %255 = arith.addf %253, %254 : vector<2x225xf32>
    %256 = vector.extract_strided_slice %7 {offsets = [0, 153], sizes = [2, 225], strides = [1, 1]} : vector<2x450xf32> to vector<2x225xf32>
    %257 = vector.extract_strided_slice %8 {offsets = [0, 153], sizes = [2, 225], strides = [1, 1]} : vector<2x450xf32> to vector<2x225xf32>
    %258 = arith.mulf %10, %256 : vector<2x225xf32>
    %259 = arith.truncf %258 : vector<2x225xf32> to vector<2x225xbf16>
    %cst_25 = arith.constant dense<0.000000e+00> : vector<2x225xf32>
    %260 = tpu.matmul %259, %1, %cst_25 {dimension_numbers = #tpu.dot_dimension_numbers<[1], [0], [0], [1], [0, 0, 1, 1], [], []>} : vector<2x225xbf16>, vector<225x225xbf16>, vector<2x225xf32> -> vector<2x225xf32>
    %261 = arith.maximumf %246, %260 : vector<2x225xf32>
    %262 = arith.subf %246, %261 : vector<2x225xf32>
    %263 = math.exp %262 : vector<2x225xf32>
    %264 = arith.subf %260, %261 : vector<2x225xf32>
    %265 = math.exp %264 : vector<2x225xf32>
    %266 = arith.mulf %263, %252 : vector<2x225xf32>
    %267 = arith.addf %266, %265 : vector<2x225xf32>
    %268 = arith.mulf %263, %255 : vector<2x225xf32>
    %269 = arith.mulf %265, %257 : vector<2x225xf32>
    %270 = arith.addf %268, %269 : vector<2x225xf32>
    %271 = vector.extract_strided_slice %7 {offsets = [0, 162], sizes = [2, 225], strides = [1, 1]} : vector<2x450xf32> to vector<2x225xf32>
    %272 = vector.extract_strided_slice %8 {offsets = [0, 162], sizes = [2, 225], strides = [1, 1]} : vector<2x450xf32> to vector<2x225xf32>
    %273 = arith.mulf %10, %271 : vector<2x225xf32>
    %274 = arith.truncf %273 : vector<2x225xf32> to vector<2x225xbf16>
    %cst_26 = arith.constant dense<0.000000e+00> : vector<2x225xf32>
    %275 = tpu.matmul %274, %1, %cst_26 {dimension_numbers = #tpu.dot_dimension_numbers<[1], [0], [0], [1], [0, 0, 1, 1], [], []>} : vector<2x225xbf16>, vector<225x225xbf16>, vector<2x225xf32> -> vector<2x225xf32>
    %276 = arith.maximumf %261, %275 : vector<2x225xf32>
    %277 = arith.subf %261, %276 : vector<2x225xf32>
    %278 = math.exp %277 : vector<2x225xf32>
    %279 = arith.subf %275, %276 : vector<2x225xf32>
    %280 = math.exp %279 : vector<2x225xf32>
    %281 = arith.mulf %278, %267 : vector<2x225xf32>
    %282 = arith.addf %281, %280 : vector<2x225xf32>
    %283 = arith.mulf %278, %270 : vector<2x225xf32>
    %284 = arith.mulf %280, %272 : vector<2x225xf32>
    %285 = arith.addf %283, %284 : vector<2x225xf32>
    %286 = vector.extract_strided_slice %7 {offsets = [0, 171], sizes = [2, 225], strides = [1, 1]} : vector<2x450xf32> to vector<2x225xf32>
    %287 = vector.extract_strided_slice %8 {offsets = [0, 171], sizes = [2, 225], strides = [1, 1]} : vector<2x450xf32> to vector<2x225xf32>
    %288 = arith.mulf %10, %286 : vector<2x225xf32>
    %289 = arith.truncf %288 : vector<2x225xf32> to vector<2x225xbf16>
    %cst_27 = arith.constant dense<0.000000e+00> : vector<2x225xf32>
    %290 = tpu.matmul %289, %1, %cst_27 {dimension_numbers = #tpu.dot_dimension_numbers<[1], [0], [0], [1], [0, 0, 1, 1], [], []>} : vector<2x225xbf16>, vector<225x225xbf16>, vector<2x225xf32> -> vector<2x225xf32>
    %291 = arith.maximumf %276, %290 : vector<2x225xf32>
    %292 = arith.subf %276, %291 : vector<2x225xf32>
    %293 = math.exp %292 : vector<2x225xf32>
    %294 = arith.subf %290, %291 : vector<2x225xf32>
    %295 = math.exp %294 : vector<2x225xf32>
    %296 = arith.mulf %293, %282 : vector<2x225xf32>
    %297 = arith.addf %296, %295 : vector<2x225xf32>
    %298 = arith.mulf %293, %285 : vector<2x225xf32>
    %299 = arith.mulf %295, %287 : vector<2x225xf32>
    %300 = arith.addf %298, %299 : vector<2x225xf32>
    %301 = vector.extract_strided_slice %7 {offsets = [0, 180], sizes = [2, 225], strides = [1, 1]} : vector<2x450xf32> to vector<2x225xf32>
    %302 = vector.extract_strided_slice %8 {offsets = [0, 180], sizes = [2, 225], strides = [1, 1]} : vector<2x450xf32> to vector<2x225xf32>
    %303 = arith.mulf %10, %301 : vector<2x225xf32>
    %304 = arith.truncf %303 : vector<2x225xf32> to vector<2x225xbf16>
    %cst_28 = arith.constant dense<0.000000e+00> : vector<2x225xf32>
    %305 = tpu.matmul %304, %1, %cst_28 {dimension_numbers = #tpu.dot_dimension_numbers<[1], [0], [0], [1], [0, 0, 1, 1], [], []>} : vector<2x225xbf16>, vector<225x225xbf16>, vector<2x225xf32> -> vector<2x225xf32>
    %306 = arith.maximumf %291, %305 : vector<2x225xf32>
    %307 = arith.subf %291, %306 : vector<2x225xf32>
    %308 = math.exp %307 : vector<2x225xf32>
    %309 = arith.subf %305, %306 : vector<2x225xf32>
    %310 = math.exp %309 : vector<2x225xf32>
    %311 = arith.mulf %308, %297 : vector<2x225xf32>
    %312 = arith.addf %311, %310 : vector<2x225xf32>
    %313 = arith.mulf %308, %300 : vector<2x225xf32>
    %314 = arith.mulf %310, %302 : vector<2x225xf32>
    %315 = arith.addf %313, %314 : vector<2x225xf32>
    %316 = vector.extract_strided_slice %7 {offsets = [0, 189], sizes = [2, 225], strides = [1, 1]} : vector<2x450xf32> to vector<2x225xf32>
    %317 = vector.extract_strided_slice %8 {offsets = [0, 189], sizes = [2, 225], strides = [1, 1]} : vector<2x450xf32> to vector<2x225xf32>
    %318 = arith.mulf %10, %316 : vector<2x225xf32>
    %319 = arith.truncf %318 : vector<2x225xf32> to vector<2x225xbf16>
    %cst_29 = arith.constant dense<0.000000e+00> : vector<2x225xf32>
    %320 = tpu.matmul %319, %1, %cst_29 {dimension_numbers = #tpu.dot_dimension_numbers<[1], [0], [0], [1], [0, 0, 1, 1], [], []>} : vector<2x225xbf16>, vector<225x225xbf16>, vector<2x225xf32> -> vector<2x225xf32>
    %321 = arith.maximumf %306, %320 : vector<2x225xf32>
    %322 = arith.subf %306, %321 : vector<2x225xf32>
    %323 = math.exp %322 : vector<2x225xf32>
    %324 = arith.subf %320, %321 : vector<2x225xf32>
    %325 = math.exp %324 : vector<2x225xf32>
    %326 = arith.mulf %323, %312 : vector<2x225xf32>
    %327 = arith.addf %326, %325 : vector<2x225xf32>
    %328 = arith.mulf %323, %315 : vector<2x225xf32>
    %329 = arith.mulf %325, %317 : vector<2x225xf32>
    %330 = arith.addf %328, %329 : vector<2x225xf32>
    %331 = vector.extract_strided_slice %7 {offsets = [0, 198], sizes = [2, 225], strides = [1, 1]} : vector<2x450xf32> to vector<2x225xf32>
    %332 = vector.extract_strided_slice %8 {offsets = [0, 198], sizes = [2, 225], strides = [1, 1]} : vector<2x450xf32> to vector<2x225xf32>
    %333 = arith.mulf %10, %331 : vector<2x225xf32>
    %334 = arith.truncf %333 : vector<2x225xf32> to vector<2x225xbf16>
    %cst_30 = arith.constant dense<0.000000e+00> : vector<2x225xf32>
    %335 = tpu.matmul %334, %1, %cst_30 {dimension_numbers = #tpu.dot_dimension_numbers<[1], [0], [0], [1], [0, 0, 1, 1], [], []>} : vector<2x225xbf16>, vector<225x225xbf16>, vector<2x225xf32> -> vector<2x225xf32>
    %336 = arith.maximumf %321, %335 : vector<2x225xf32>
    %337 = arith.subf %321, %336 : vector<2x225xf32>
    %338 = math.exp %337 : vector<2x225xf32>
    %339 = arith.subf %335, %336 : vector<2x225xf32>
    %340 = math.exp %339 : vector<2x225xf32>
    %341 = arith.mulf %338, %327 : vector<2x225xf32>
    %342 = arith.addf %341, %340 : vector<2x225xf32>
    %343 = arith.mulf %338, %330 : vector<2x225xf32>
    %344 = arith.mulf %340, %332 : vector<2x225xf32>
    %345 = arith.addf %343, %344 : vector<2x225xf32>
    %346 = vector.extract_strided_slice %7 {offsets = [0, 207], sizes = [2, 225], strides = [1, 1]} : vector<2x450xf32> to vector<2x225xf32>
    %347 = vector.extract_strided_slice %8 {offsets = [0, 207], sizes = [2, 225], strides = [1, 1]} : vector<2x450xf32> to vector<2x225xf32>
    %348 = arith.mulf %10, %346 : vector<2x225xf32>
    %349 = arith.truncf %348 : vector<2x225xf32> to vector<2x225xbf16>
    %cst_31 = arith.constant dense<0.000000e+00> : vector<2x225xf32>
    %350 = tpu.matmul %349, %1, %cst_31 {dimension_numbers = #tpu.dot_dimension_numbers<[1], [0], [0], [1], [0, 0, 1, 1], [], []>} : vector<2x225xbf16>, vector<225x225xbf16>, vector<2x225xf32> -> vector<2x225xf32>
    %351 = arith.maximumf %336, %350 : vector<2x225xf32>
    %352 = arith.subf %336, %351 : vector<2x225xf32>
    %353 = math.exp %352 : vector<2x225xf32>
    %354 = arith.subf %350, %351 : vector<2x225xf32>
    %355 = math.exp %354 : vector<2x225xf32>
    %356 = arith.mulf %353, %342 : vector<2x225xf32>
    %357 = arith.addf %356, %355 : vector<2x225xf32>
    %358 = arith.mulf %353, %345 : vector<2x225xf32>
    %359 = arith.mulf %355, %347 : vector<2x225xf32>
    %360 = arith.addf %358, %359 : vector<2x225xf32>
    %361 = vector.extract_strided_slice %7 {offsets = [0, 216], sizes = [2, 225], strides = [1, 1]} : vector<2x450xf32> to vector<2x225xf32>
    %362 = vector.extract_strided_slice %8 {offsets = [0, 216], sizes = [2, 225], strides = [1, 1]} : vector<2x450xf32> to vector<2x225xf32>
    %363 = arith.mulf %10, %361 : vector<2x225xf32>
    %364 = arith.truncf %363 : vector<2x225xf32> to vector<2x225xbf16>
    %cst_32 = arith.constant dense<0.000000e+00> : vector<2x225xf32>
    %365 = tpu.matmul %364, %1, %cst_32 {dimension_numbers = #tpu.dot_dimension_numbers<[1], [0], [0], [1], [0, 0, 1, 1], [], []>} : vector<2x225xbf16>, vector<225x225xbf16>, vector<2x225xf32> -> vector<2x225xf32>
    %366 = arith.maximumf %351, %365 : vector<2x225xf32>
    %367 = arith.subf %351, %366 : vector<2x225xf32>
    %368 = math.exp %367 : vector<2x225xf32>
    %369 = arith.subf %365, %366 : vector<2x225xf32>
    %370 = math.exp %369 : vector<2x225xf32>
    %371 = arith.mulf %368, %357 : vector<2x225xf32>
    %372 = arith.addf %371, %370 : vector<2x225xf32>
    %373 = arith.mulf %368, %360 : vector<2x225xf32>
    %374 = arith.mulf %370, %362 : vector<2x225xf32>
    %375 = arith.addf %373, %374 : vector<2x225xf32>
    %376 = tpu.reciprocal %372 {approx = true} : vector<2x225xf32> -> vector<2x225xf32>
    %377 = arith.mulf %375, %376 : vector<2x225xf32>
    %378 = arith.addf %377, %9 : vector<2x225xf32>
    %379 = arith.truncf %378 : vector<2x225xf32> to vector<2x225xbf16>
    %cst_33 = arith.constant dense<0.000000e+00> : vector<2x225xf32>
    %380 = tpu.matmul %379, %1, %cst_33 {dimension_numbers = #tpu.dot_dimension_numbers<[1], [0], [0], [1], [0, 0, 1, 1], [], []>} : vector<2x225xbf16>, vector<225x225xbf16>, vector<2x225xf32> -> vector<2x225xf32>
    %cst_34 = arith.constant 0.111111112 : f32
    %381 = vector.broadcast %cst_34 : f32 to vector<2x225xf32>
    %382 = arith.mulf %380, %381 : vector<2x225xf32>
    %383 = arith.subf %378, %382 : vector<2x225xf32>
    %384 = arith.mulf %383, %383 : vector<2x225xf32>
    %385 = arith.truncf %384 : vector<2x225xf32> to vector<2x225xbf16>
    %cst_35 = arith.constant dense<0.000000e+00> : vector<2x225xf32>
    %386 = tpu.matmul %385, %1, %cst_35 {dimension_numbers = #tpu.dot_dimension_numbers<[1], [0], [0], [1], [0, 0, 1, 1], [], []>} : vector<2x225xbf16>, vector<225x225xbf16>, vector<2x225xf32> -> vector<2x225xf32>
    %cst_36 = arith.constant 0.111111112 : f32
    %387 = vector.broadcast %cst_36 : f32 to vector<2x225xf32>
    %388 = arith.mulf %386, %387 : vector<2x225xf32>
    %cst_37 = arith.constant 9.99999974E-6 : f32
    %389 = vector.broadcast %cst_37 : f32 to vector<2x225xf32>
    %390 = arith.addf %388, %389 : vector<2x225xf32>
    %391 = math.rsqrt %390 : vector<2x225xf32>
    %392 = arith.mulf %383, %391 : vector<2x225xf32>
    %c0_38 = arith.constant 0 : index
    %c0_39 = arith.constant 0 : index
    %393 = vector.load %arg6[%c0_38, %c0_39] : memref<1x225xf32, #tpu.memory_space<vmem>>, vector<1x225xf32>
    %394 = vector.broadcast %393 : vector<1x225xf32> to vector<2x225xf32>
    %395 = arith.mulf %392, %394 : vector<2x225xf32>
    %c0_40 = arith.constant 0 : index
    %c0_41 = arith.constant 0 : index
    %396 = vector.load %arg7[%c0_40, %c0_41] : memref<1x225xf32, #tpu.memory_space<vmem>>, vector<1x225xf32>
    %397 = vector.broadcast %396 : vector<1x225xf32> to vector<2x225xf32>
    %398 = arith.addf %395, %397 : vector<2x225xf32>
    %c0_42 = arith.constant 0 : index
    %c0_43 = arith.constant 0 : index
    %399 = vector.load %arg2[%c0_42, %c0_43] : memref<2x128xf32, #tpu.memory_space<vmem>>, vector<2x128xf32>
    %400 = vector.extract_strided_slice %399 {offsets = [0, 0], sizes = [2, 32], strides = [1, 1]} : vector<2x128xf32> to vector<2x32xf32>
    %401 = vector.extract_strided_slice %399 {offsets = [0, 32], sizes = [2, 32], strides = [1, 1]} : vector<2x128xf32> to vector<2x32xf32>
    %402 = vector.extract_strided_slice %399 {offsets = [0, 64], sizes = [2, 32], strides = [1, 1]} : vector<2x128xf32> to vector<2x32xf32>
    %403 = vector.extract_strided_slice %399 {offsets = [0, 96], sizes = [2, 32], strides = [1, 1]} : vector<2x128xf32> to vector<2x32xf32>
    %404 = arith.truncf %398 : vector<2x225xf32> to vector<2x225xbf16>
    %c0_44 = arith.constant 0 : index
    %c0_45 = arith.constant 0 : index
    %405 = vector.load %arg8[%c0_44, %c0_45] : memref<225x128xbf16, #tpu.memory_space<vmem>>, vector<225x128xbf16>
    %cst_46 = arith.constant dense<0.000000e+00> : vector<2x128xf32>
    %406 = tpu.matmul %404, %405, %cst_46 {dimension_numbers = #tpu.dot_dimension_numbers<[1], [0], [0], [1], [0, 0, 1, 1], [], []>} : vector<2x225xbf16>, vector<225x128xbf16>, vector<2x128xf32> -> vector<2x128xf32>
    %407 = arith.truncf %400 : vector<2x32xf32> to vector<2x32xbf16>
    %c0_47 = arith.constant 0 : index
    %c0_48 = arith.constant 0 : index
    %408 = vector.load %arg9[%c0_47, %c0_48] : memref<32x128xbf16, #tpu.memory_space<vmem>>, vector<32x128xbf16>
    %cst_49 = arith.constant dense<0.000000e+00> : vector<2x128xf32>
    %409 = tpu.matmul %407, %408, %cst_49 {dimension_numbers = #tpu.dot_dimension_numbers<[1], [0], [0], [1], [0, 0, 1, 1], [], []>} : vector<2x32xbf16>, vector<32x128xbf16>, vector<2x128xf32> -> vector<2x128xf32>
    %410 = arith.addf %406, %409 : vector<2x128xf32>
    %c0_50 = arith.constant 0 : index
    %c0_51 = arith.constant 0 : index
    %411 = vector.load %arg10[%c0_50, %c0_51] : memref<1x128xf32, #tpu.memory_space<vmem>>, vector<1x128xf32>
    %412 = vector.broadcast %411 : vector<1x128xf32> to vector<2x128xf32>
    %413 = arith.addf %410, %412 : vector<2x128xf32>
    %414 = vector.extract_strided_slice %413 {offsets = [0, 0], sizes = [2, 32], strides = [1, 1]} : vector<2x128xf32> to vector<2x32xf32>
    %415 = arith.negf %414 : vector<2x32xf32>
    %416 = math.exp %415 : vector<2x32xf32>
    %cst_52 = arith.constant 1.000000e+00 : f32
    %417 = vector.broadcast %cst_52 : f32 to vector<2x32xf32>
    %418 = arith.addf %417, %416 : vector<2x32xf32>
    %419 = arith.divf %417, %418 : vector<2x32xf32>
    %420 = vector.extract_strided_slice %413 {offsets = [0, 32], sizes = [2, 32], strides = [1, 1]} : vector<2x128xf32> to vector<2x32xf32>
    %421 = arith.negf %420 : vector<2x32xf32>
    %422 = math.exp %421 : vector<2x32xf32>
    %cst_53 = arith.constant 1.000000e+00 : f32
    %423 = vector.broadcast %cst_53 : f32 to vector<2x32xf32>
    %424 = arith.addf %423, %422 : vector<2x32xf32>
    %425 = arith.divf %423, %424 : vector<2x32xf32>
    %426 = vector.extract_strided_slice %413 {offsets = [0, 64], sizes = [2, 32], strides = [1, 1]} : vector<2x128xf32> to vector<2x32xf32>
    %427 = math.tanh %426 : vector<2x32xf32>
    %428 = vector.extract_strided_slice %413 {offsets = [0, 96], sizes = [2, 32], strides = [1, 1]} : vector<2x128xf32> to vector<2x32xf32>
    %429 = arith.negf %428 : vector<2x32xf32>
    %430 = math.exp %429 : vector<2x32xf32>
    %cst_54 = arith.constant 1.000000e+00 : f32
    %431 = vector.broadcast %cst_54 : f32 to vector<2x32xf32>
    %432 = arith.addf %431, %430 : vector<2x32xf32>
    %433 = arith.divf %431, %432 : vector<2x32xf32>
    %434 = arith.mulf %425, %402 : vector<2x32xf32>
    %435 = arith.mulf %419, %427 : vector<2x32xf32>
    %436 = arith.addf %434, %435 : vector<2x32xf32>
    %437 = math.tanh %436 : vector<2x32xf32>
    %438 = arith.mulf %433, %437 : vector<2x32xf32>
    %439 = arith.truncf %438 : vector<2x32xf32> to vector<2x32xbf16>
    %c0_55 = arith.constant 0 : index
    %c0_56 = arith.constant 0 : index
    %440 = vector.load %arg11[%c0_55, %c0_56] : memref<32x128xbf16, #tpu.memory_space<vmem>>, vector<32x128xbf16>
    %cst_57 = arith.constant dense<0.000000e+00> : vector<2x128xf32>
    %441 = tpu.matmul %439, %440, %cst_57 {dimension_numbers = #tpu.dot_dimension_numbers<[1], [0], [0], [1], [0, 0, 1, 1], [], []>} : vector<2x32xbf16>, vector<32x128xbf16>, vector<2x128xf32> -> vector<2x128xf32>
    %442 = arith.truncf %401 : vector<2x32xf32> to vector<2x32xbf16>
    %c0_58 = arith.constant 0 : index
    %c0_59 = arith.constant 0 : index
    %443 = vector.load %arg12[%c0_58, %c0_59] : memref<32x128xbf16, #tpu.memory_space<vmem>>, vector<32x128xbf16>
    %cst_60 = arith.constant dense<0.000000e+00> : vector<2x128xf32>
    %444 = tpu.matmul %442, %443, %cst_60 {dimension_numbers = #tpu.dot_dimension_numbers<[1], [0], [0], [1], [0, 0, 1, 1], [], []>} : vector<2x32xbf16>, vector<32x128xbf16>, vector<2x128xf32> -> vector<2x128xf32>
    %445 = arith.addf %441, %444 : vector<2x128xf32>
    %c0_61 = arith.constant 0 : index
    %c0_62 = arith.constant 0 : index
    %446 = vector.load %arg13[%c0_61, %c0_62] : memref<1x128xf32, #tpu.memory_space<vmem>>, vector<1x128xf32>
    %447 = vector.broadcast %446 : vector<1x128xf32> to vector<2x128xf32>
    %448 = arith.addf %445, %447 : vector<2x128xf32>
    %449 = vector.extract_strided_slice %448 {offsets = [0, 0], sizes = [2, 32], strides = [1, 1]} : vector<2x128xf32> to vector<2x32xf32>
    %450 = arith.negf %449 : vector<2x32xf32>
    %451 = math.exp %450 : vector<2x32xf32>
    %cst_63 = arith.constant 1.000000e+00 : f32
    %452 = vector.broadcast %cst_63 : f32 to vector<2x32xf32>
    %453 = arith.addf %452, %451 : vector<2x32xf32>
    %454 = arith.divf %452, %453 : vector<2x32xf32>
    %455 = vector.extract_strided_slice %448 {offsets = [0, 32], sizes = [2, 32], strides = [1, 1]} : vector<2x128xf32> to vector<2x32xf32>
    %456 = arith.negf %455 : vector<2x32xf32>
    %457 = math.exp %456 : vector<2x32xf32>
    %cst_64 = arith.constant 1.000000e+00 : f32
    %458 = vector.broadcast %cst_64 : f32 to vector<2x32xf32>
    %459 = arith.addf %458, %457 : vector<2x32xf32>
    %460 = arith.divf %458, %459 : vector<2x32xf32>
    %461 = vector.extract_strided_slice %448 {offsets = [0, 64], sizes = [2, 32], strides = [1, 1]} : vector<2x128xf32> to vector<2x32xf32>
    %462 = math.tanh %461 : vector<2x32xf32>
    %463 = vector.extract_strided_slice %448 {offsets = [0, 96], sizes = [2, 32], strides = [1, 1]} : vector<2x128xf32> to vector<2x32xf32>
    %464 = arith.negf %463 : vector<2x32xf32>
    %465 = math.exp %464 : vector<2x32xf32>
    %cst_65 = arith.constant 1.000000e+00 : f32
    %466 = vector.broadcast %cst_65 : f32 to vector<2x32xf32>
    %467 = arith.addf %466, %465 : vector<2x32xf32>
    %468 = arith.divf %466, %467 : vector<2x32xf32>
    %469 = arith.mulf %460, %403 : vector<2x32xf32>
    %470 = arith.mulf %454, %462 : vector<2x32xf32>
    %471 = arith.addf %469, %470 : vector<2x32xf32>
    %472 = math.tanh %471 : vector<2x32xf32>
    %473 = arith.mulf %468, %472 : vector<2x32xf32>
    %cst_66 = arith.constant dense<0.000000e+00> : vector<2xf32>
    %474 = vector.multi_reduction <add>, %473, %cst_66 [1] : vector<2x32xf32> to vector<2xf32>
    %475 = vector.shape_cast %474 : vector<2xf32> to vector<2x1xf32>
    %cst_67 = arith.constant 3.200000e+01 : f32
    %476 = vector.broadcast %cst_67 : f32 to vector<2x1xf32>
    %477 = arith.divf %475, %476 : vector<2x1xf32>
    %478 = vector.broadcast %477 : vector<2x1xf32> to vector<2x32xf32>
    %479 = arith.subf %473, %478 : vector<2x32xf32>
    %480 = arith.mulf %479, %479 : vector<2x32xf32>
    %cst_68 = arith.constant dense<0.000000e+00> : vector<2xf32>
    %481 = vector.multi_reduction <add>, %480, %cst_68 [1] : vector<2x32xf32> to vector<2xf32>
    %482 = vector.shape_cast %481 : vector<2xf32> to vector<2x1xf32>
    %cst_69 = arith.constant 3.200000e+01 : f32
    %483 = vector.broadcast %cst_69 : f32 to vector<2x1xf32>
    %484 = arith.divf %482, %483 : vector<2x1xf32>
    %485 = vector.broadcast %477 : vector<2x1xf32> to vector<2x32xf32>
    %486 = arith.subf %473, %485 : vector<2x32xf32>
    %cst_70 = arith.constant 9.99999974E-6 : f32
    %487 = vector.broadcast %cst_70 : f32 to vector<2x1xf32>
    %488 = arith.addf %484, %487 : vector<2x1xf32>
    %489 = math.rsqrt %488 : vector<2x1xf32>
    %490 = vector.broadcast %489 : vector<2x1xf32> to vector<2x32xf32>
    %491 = arith.mulf %486, %490 : vector<2x32xf32>
    %c0_71 = arith.constant 0 : index
    %c0_72 = arith.constant 0 : index
    %492 = vector.load %arg14[%c0_71, %c0_72] : memref<1x32xf32, #tpu.memory_space<vmem>>, vector<1x32xf32>
    %493 = vector.broadcast %492 : vector<1x32xf32> to vector<2x32xf32>
    %494 = arith.mulf %491, %493 : vector<2x32xf32>
    %c0_73 = arith.constant 0 : index
    %c0_74 = arith.constant 0 : index
    %495 = vector.load %arg15[%c0_73, %c0_74] : memref<1x32xf32, #tpu.memory_space<vmem>>, vector<1x32xf32>
    %496 = vector.broadcast %495 : vector<1x32xf32> to vector<2x32xf32>
    %497 = arith.addf %494, %496 : vector<2x32xf32>
    %c0_75 = arith.constant 0 : index
    %c0_76 = arith.constant 0 : index
    %498 = vector.load %arg16[%c0_75, %c0_76] : memref<329x32xbf16, #tpu.memory_space<vmem>>, vector<329x32xbf16>
    %cst_77 = arith.constant dense<0.000000e+00> : vector<2x32xf32>
    %499 = tpu.matmul %0, %498, %cst_77 {dimension_numbers = #tpu.dot_dimension_numbers<[1], [0], [0], [1], [0, 0, 1, 1], [], []>} : vector<2x329xbf16>, vector<329x32xbf16>, vector<2x32xf32> -> vector<2x32xf32>
    %c0_78 = arith.constant 0 : index
    %c0_79 = arith.constant 0 : index
    %500 = vector.load %arg17[%c0_78, %c0_79] : memref<1x32xf32, #tpu.memory_space<vmem>>, vector<1x32xf32>
    %501 = vector.broadcast %500 : vector<1x32xf32> to vector<2x32xf32>
    %502 = arith.addf %499, %501 : vector<2x32xf32>
    %503 = arith.addf %502, %497 : vector<2x32xf32>
    %c0_80 = arith.constant 0 : index
    %c0_81 = arith.constant 0 : index
    %504 = vector.load %arg18[%c0_80, %c0_81] : memref<2x160xf32, #tpu.memory_space<vmem>>, vector<2x32xf32>
    tpu.vector_store %arg18[%c0_80, %c0_81], %503 {strides = array<i32>} : memref<2x160xf32, #tpu.memory_space<vmem>>, vector<2x32xf32>,
    %c0_82 = arith.constant 0 : index
    %c32 = arith.constant 32 : index
    %505 = vector.load %arg18[%c0_82, %c32] : memref<2x160xf32, #tpu.memory_space<vmem>>, vector<2x32xf32>
    tpu.vector_store %arg18[%c0_82, %c32], %438 {strides = array<i32>} : memref<2x160xf32, #tpu.memory_space<vmem>>, vector<2x32xf32>,
    %c0_83 = arith.constant 0 : index
    %c64 = arith.constant 64 : index
    %506 = vector.load %arg18[%c0_83, %c64] : memref<2x160xf32, #tpu.memory_space<vmem>>, vector<2x32xf32>
    tpu.vector_store %arg18[%c0_83, %c64], %473 {strides = array<i32>} : memref<2x160xf32, #tpu.memory_space<vmem>>, vector<2x32xf32>,
    %c0_84 = arith.constant 0 : index
    %c96 = arith.constant 96 : index
    %507 = vector.load %arg18[%c0_84, %c96] : memref<2x160xf32, #tpu.memory_space<vmem>>, vector<2x32xf32>
    tpu.vector_store %arg18[%c0_84, %c96], %436 {strides = array<i32>} : memref<2x160xf32, #tpu.memory_space<vmem>>, vector<2x32xf32>,
    %c0_85 = arith.constant 0 : index
    %c128 = arith.constant 128 : index
    %508 = vector.load %arg18[%c0_85, %c128] : memref<2x160xf32, #tpu.memory_space<vmem>>, vector<2x32xf32>
    tpu.vector_store %arg18[%c0_85, %c128], %471 {strides = array<i32>} : memref<2x160xf32, #tpu.memory_space<vmem>>, vector<2x32xf32>,
    return
  }
  func.func @transform_0(%arg0: i32) -> (i32, i32) {
    %c0_i32 = arith.constant 0 : i32
    %c0_i32_0 = arith.constant 0 : i32
    return %arg0, %c0_i32 : i32, i32
  }
  func.func @transform_1(%arg0: i32) -> (i32, i32) {
    %c0_i32 = arith.constant 0 : i32
    %c0_i32_0 = arith.constant 0 : i32
    return %arg0, %c0_i32 : i32, i32
  }
  func.func @transform_2(%arg0: i32) -> (i32, i32) {
    %c0_i32 = arith.constant 0 : i32
    %c0_i32_0 = arith.constant 0 : i32
    %c0_i32_1 = arith.constant 0 : i32
    return %c0_i32, %c0_i32_0 : i32, i32
  }
  func.func @transform_3(%arg0: i32) -> (i32, i32) {
    %c0_i32 = arith.constant 0 : i32
    %c0_i32_0 = arith.constant 0 : i32
    %c0_i32_1 = arith.constant 0 : i32
    return %c0_i32, %c0_i32_0 : i32, i32
  }
  func.func @transform_4(%arg0: i32) -> (i32, i32) {
    %c0_i32 = arith.constant 0 : i32
    %c0_i32_0 = arith.constant 0 : i32
    %c0_i32_1 = arith.constant 0 : i32
    return %c0_i32, %c0_i32_0 : i32, i32
  }
  func.func @transform_5(%arg0: i32) -> (i32, i32) {
    %c0_i32 = arith.constant 0 : i32
    %c0_i32_0 = arith.constant 0 : i32
    %c0_i32_1 = arith.constant 0 : i32
    return %c0_i32, %c0_i32_0 : i32, i32
  }
  func.func @transform_6(%arg0: i32) -> (i32, i32) {
    %c0_i32 = arith.constant 0 : i32
    %c0_i32_0 = arith.constant 0 : i32
    %c0_i32_1 = arith.constant 0 : i32
    return %c0_i32, %c0_i32_0 : i32, i32
  }
  func.func @transform_7(%arg0: i32) -> (i32, i32) {
    %c0_i32 = arith.constant 0 : i32
    %c0_i32_0 = arith.constant 0 : i32
    %c0_i32_1 = arith.constant 0 : i32
    return %c0_i32, %c0_i32_0 : i32, i32
  }
  func.func @transform_8(%arg0: i32) -> (i32, i32) {
    %c0_i32 = arith.constant 0 : i32
    %c0_i32_0 = arith.constant 0 : i32
    %c0_i32_1 = arith.constant 0 : i32
    return %c0_i32, %c0_i32_0 : i32, i32
  }
  func.func @transform_9(%arg0: i32) -> (i32, i32) {
    %c0_i32 = arith.constant 0 : i32
    %c0_i32_0 = arith.constant 0 : i32
    %c0_i32_1 = arith.constant 0 : i32
    return %c0_i32, %c0_i32_0 : i32, i32
  }
  func.func @transform_10(%arg0: i32) -> (i32, i32) {
    %c0_i32 = arith.constant 0 : i32
    %c0_i32_0 = arith.constant 0 : i32
    %c0_i32_1 = arith.constant 0 : i32
    return %c0_i32, %c0_i32_0 : i32, i32
  }
  func.func @transform_11(%arg0: i32) -> (i32, i32) {
    %c0_i32 = arith.constant 0 : i32
    %c0_i32_0 = arith.constant 0 : i32
    %c0_i32_1 = arith.constant 0 : i32
    return %c0_i32, %c0_i32_0 : i32, i32
  }
  func.func @transform_12(%arg0: i32) -> (i32, i32) {
    %c0_i32 = arith.constant 0 : i32
    %c0_i32_0 = arith.constant 0 : i32
    %c0_i32_1 = arith.constant 0 : i32
    return %c0_i32, %c0_i32_0 : i32, i32
  }
  func.func @transform_13(%arg0: i32) -> (i32, i32) {
    %c0_i32 = arith.constant 0 : i32
    %c0_i32_0 = arith.constant 0 : i32
    %c0_i32_1 = arith.constant 0 : i32
    return %c0_i32, %c0_i32_0 : i32, i32
  }
  func.func @transform_14(%arg0: i32) -> (i32, i32) {
    %c0_i32 = arith.constant 0 : i32
    %c0_i32_0 = arith.constant 0 : i32
    %c0_i32_1 = arith.constant 0 : i32
    return %c0_i32, %c0_i32_0 : i32, i32
  }
  func.func @transform_15(%arg0: i32) -> (i32, i32) {
    %c0_i32 = arith.constant 0 : i32
    %c0_i32_0 = arith.constant 0 : i32
    %c0_i32_1 = arith.constant 0 : i32
    return %c0_i32, %c0_i32_0 : i32, i32
  }
  func.func @transform_16(%arg0: i32) -> (i32, i32) {
    %c0_i32 = arith.constant 0 : i32
    %c0_i32_0 = arith.constant 0 : i32
    %c0_i32_1 = arith.constant 0 : i32
    return %c0_i32, %c0_i32_0 : i32, i32
  }
  func.func @transform_17(%arg0: i32) -> (i32, i32) {
    %c0_i32 = arith.constant 0 : i32
    %c0_i32_0 = arith.constant 0 : i32
    return %arg0, %c0_i32 : i32, i32
  }
}

</mosaic_0001>

<llo_original>
// kernel: tile.88
$region0: #{tile.88}
  #allocation0 [shape = 's32[1]{0}', space=sflag, size = 0x4, scoped, tag = 'scoped memory for tile.88']
  %s0 = inlined_call_operand.vmem [shape: f32[9], index: 0, kind: input, shape index: {}]
  %s1 = inlined_call_operand.vmem [shape: f32[2,9], index: 1, kind: output, shape index: {}]
  // Predicated region
  $region2: #{tile.88} parent=0 // pred_check
    _
  $region3: #{tile.88} parent=0 // pred_check_branch
    %3 = sbr.rel (0) target = $region5
  $region4: #{tile.88} parent=0 // pred_region
    _
  $region5: #{tile.88} parent=0 // pred_fallthru
    _
  %v4 = vld [vmem:[%s0] ss:$0 sm:$0xff]
  %5 = vst [vmem:[%s1] sm:$0x3] %v4

// kernel: tile.89
$region0: #{tile.89}
  %s0 = inlined_call_operand.vmem [shape: f32[2,9], index: 0, kind: input, shape index: {}]
  %s1 = inlined_call_operand.vmem [shape: f32[18], index: 1, kind: output, shape index: {}]
  $region1: #{tile.89} parent=0
    #allocation0 [shape = 'u8[4096]{0}', space=vmem, size = 0x1000, scoped, tag = 'scoped mem for output reshape']
    #allocation1 [shape = 'u8[4096]{0}', space=vmem, size = 0x1000, scoped, tag = 'scoped mem for input reshape']
    %s3 = sshllo.u32 0, 2
    %v4 = vld [vmem:[%s0] sm:%s3]
    %5 = vst [vmem:[#allocation1] sm:%s3] %v4
    %v6 = vld [vmem:[#allocation1] sm:$0x1]
    %vm7 = vcmask 72704
    %8 = vst.msk [vmem:[#allocation0] sm:$0x1] %vm7, %v6
    %s9 = scalar_lea.vmem [#allocation1], 1
    %v10 = vld [vmem:[%s9] sm:$0x1]
    %11 = vrot.lane.b32.xlu0 %v10, 9
    %v12 = vpop.permute.xlu0 %11
    %vm13 = vcmask 146504
    %14 = vst.msk [vmem:[#allocation0] sm:$0x1] %vm13, %v12
    %s16 = sshllo.u32 0, 1
    %v18 = vld [vmem:[#allocation0] sm:%s16]
    %s19 = sshllo.u32 0, 1
    %20 = vst [vmem:[%s1] sm:%s19] %v18

// kernel: tile.83
$region0: #{tile.83}
  #allocation0 [shape = 's32[1]{0}', space=sflag, size = 0x4, scoped, tag = 'scoped memory for tile.83']
  %s0 = inlined_call_operand.vmem [shape: f32[9], index: 0, kind: input, shape index: {}]
  %s1 = inlined_call_operand.vmem [shape: f32[10,9], index: 1, kind: output, shape index: {}]
  // Predicated region
  $region2: #{tile.83} parent=0 // pred_check
    _
  $region3: #{tile.83} parent=0 // pred_check_branch
    %3 = sbr.rel (0) target = $region5
  $region4: #{tile.83} parent=0 // pred_region
    _
  $region5: #{tile.83} parent=0 // pred_fallthru
    _
  %v4 = vld [vmem:[%s0] ss:$0 sm:$0xff]
  %5 = vst [vmem:[%s1] sm:$0xff] %v4
  %s6 = scalar_lea.vmem %s1, 8
  %7 = vst [vmem:[%s6] sm:$0xff] %v4

// kernel: tile.84
$region0: #{tile.84}
  %s0 = inlined_call_operand.vmem [shape: f32[10,9], index: 0, kind: input, shape index: {}]
  %s1 = inlined_call_operand.vmem [shape: f32[90], index: 1, kind: output, shape index: {}]
  $region1: #{tile.84} parent=0
    #allocation0 [shape = 'u8[4096]{0}', space=vmem, size = 0x1000, scoped, tag = 'scoped mem for output reshape']
    %v2 = vld [vmem:[%s0] sm:$0x1]
    %vm3 = vcmask 72704
    %4 = vst.msk [vmem:[#allocation0] sm:$0x1] %vm3, %v2
    %s5 = scalar_lea.vmem %s0, 9
    %v6 = vld [vmem:[%s5] sm:$0x1]
    %7 = vrot.lane.b32.xlu0 %v6, 81
    %v8 = vpop.permute.xlu0 %7
    %vm9 = vcmask 736904
    %10 = vst.msk [vmem:[#allocation0] sm:$0x1] %vm9, %v8
    %s11 = scalar_lea.vmem %s0, 8
    %v12 = vld [vmem:[%s11] sm:$0x1]
    %13 = vrot.lane.b32.xlu0 %v12, 72
    %v14 = vpop.permute.xlu0 %13
    %vm15 = vcmask 663104
    %16 = vst.msk [vmem:[#allocation0] sm:$0x1] %vm15, %v14
    %s17 = scalar_lea.vmem %s0, 7
    %v18 = vld [vmem:[%s17] sm:$0x1]
    %19 = vrot.lane.b32.xlu0 %v18, 63
    %v20 = vpop.permute.xlu0 %19
    %vm21 = vcmask 589304
    %22 = vst.msk [vmem:[#allocation0] sm:$0x1] %vm21, %v20
    %s23 = scalar_lea.vmem %s0, 6
    %v24 = vld [vmem:[%s23] sm:$0x1]
    %25 = vrot.lane.b32.xlu0 %v24, 54
    %v26 = vpop.permute.xlu0 %25
    %vm27 = vcmask 515504
    %28 = vst.msk [vmem:[#allocation0] sm:$0x1] %vm27, %v26
    %s29 = scalar_lea.vmem %s0, 5
    %v30 = vld [vmem:[%s29] sm:$0x1]
    %31 = vrot.lane.b32.xlu0 %v30, 45
    %v32 = vpop.permute.xlu0 %31
    %vm33 = vcmask 441704
    %34 = vst.msk [vmem:[#allocation0] sm:$0x1] %vm33, %v32
    %s35 = scalar_lea.vmem %s0, 4
    %v36 = vld [vmem:[%s35] sm:$0x1]
    %37 = vrot.lane.b32.xlu0 %v36, 36
    %v38 = vpop.permute.xlu0 %37
    %vm39 = vcmask 367904
    %40 = vst.msk [vmem:[#allocation0] sm:$0x1] %vm39, %v38
    %s41 = scalar_lea.vmem %s0, 3
    %v42 = vld [vmem:[%s41] sm:$0x1]
    %43 = vrot.lane.b32.xlu0 %v42, 27
    %v44 = vpop.permute.xlu0 %43
    %vm45 = vcmask 294104
    %46 = vst.msk [vmem:[#allocation0] sm:$0x1] %vm45, %v44
    %s47 = scalar_lea.vmem %s0, 2
    %v48 = vld [vmem:[%s47] sm:$0x1]
    %49 = vrot.lane.b32.xlu0 %v48, 18
    %v50 = vpop.permute.xlu0 %49
    %vm51 = vcmask 220304
    %52 = vst.msk [vmem:[#allocation0] sm:$0x1] %vm51, %v50
    %s53 = scalar_lea.vmem %s0, 1
    %v54 = vld [vmem:[%s53] sm:$0x1]
    %55 = vrot.lane.b32.xlu0 %v54, 9
    %v56 = vpop.permute.xlu0 %55
    %vm57 = vcmask 146504
    %58 = vst.msk [vmem:[#allocation0] sm:$0x1] %vm57, %v56
    %s60 = sshllo.u32 0, 1
    %v62 = vld [vmem:[#allocation0] sm:%s60]
    %s63 = sshllo.u32 0, 1
    %64 = vst [vmem:[%s1] sm:%s63] %v62

// kernel: tile.73
$region0: #{tile.73}
  #allocation0 [shape = 's32[1]{0}', space=sflag, size = 0x4, scoped, tag = 'scoped memory for tile.73']
  %s0 = inlined_call_operand.vmem [shape: f32[9], index: 0, kind: input, shape index: {}]
  %s1 = inlined_call_operand.vmem [shape: f32[3,9], index: 1, kind: output, shape index: {}]
  // Predicated region
  $region2: #{tile.73} parent=0 // pred_check
    _
  $region3: #{tile.73} parent=0 // pred_check_branch
    %3 = sbr.rel (0) target = $region5
  $region4: #{tile.73} parent=0 // pred_region
    _
  $region5: #{tile.73} parent=0 // pred_fallthru
    _
  %v4 = vld [vmem:[%s0] ss:$0 sm:$0xff]
  %5 = vst [vmem:[%s1] sm:$0xf] %v4

// kernel: tile.74
$region0: #{tile.74}
  %s0 = inlined_call_operand.vmem [shape: f32[3,9], index: 0, kind: input, shape index: {}]
  %s1 = inlined_call_operand.vmem [shape: f32[27], index: 1, kind: output, shape index: {}]
  $region1: #{tile.74} parent=0
    #allocation0 [shape = 'u8[4096]{0}', space=vmem, size = 0x1000, scoped, tag = 'scoped mem for output reshape']
    #allocation1 [shape = 'u8[4096]{0}', space=vmem, size = 0x1000, scoped, tag = 'scoped mem for input reshape']
    %s3 = sshllo.u32 0, 4
    %v4 = vld [vmem:[%s0] sm:%s3]
    %5 = vst [vmem:[#allocation1] sm:%s3] %v4
    %v6 = vld [vmem:[#allocation1] sm:$0x1]
    %vm7 = vcmask 72704
    %8 = vst.msk [vmem:[#allocation0] sm:$0x1] %vm7, %v6
    %s9 = scalar_lea.vmem [#allocation1], 2
    %v10 = vld [vmem:[%s9] sm:$0x1]
    %11 = vrot.lane.b32.xlu0 %v10, 18
    %v12 = vpop.permute.xlu0 %11
    %vm13 = vcmask 220304
    %14 = vst.msk [vmem:[#allocation0] sm:$0x1] %vm13, %v12
    %s15 = scalar_lea.vmem [#allocation1], 1
    %v16 = vld [vmem:[%s15] sm:$0x1]
    %17 = vrot.lane.b32.xlu0 %v16, 9
    %v18 = vpop.permute.xlu0 %17
    %vm19 = vcmask 146504
    %20 = vst.msk [vmem:[#allocation0] sm:$0x1] %vm19, %v18
    %s22 = sshllo.u32 0, 1
    %v24 = vld [vmem:[#allocation0] sm:%s22]
    %s25 = sshllo.u32 0, 1
    %26 = vst [vmem:[%s1] sm:%s25] %v24

// kernel: tile.133
$region0: #{tile.133}
  #allocation0 [shape = 's32[1]{0}', space=sflag, size = 0x4, scoped, tag = 'scoped memory for tile.133']
  %s0 = inlined_call_operand.vmem [shape: f32[9], index: 0, kind: input, shape index: {}]
  %s1 = inlined_call_operand.vmem [shape: f32[25,9], index: 1, kind: output, shape index: {}]
  // Predicated region
  $region2: #{tile.133} parent=0 // pred_check
    _
  $region3: #{tile.133} parent=0 // pred_check_branch
    %3 = sbr.rel (0) target = $region5
  $region4: #{tile.133} parent=0 // pred_region
    _
  $region5: #{tile.133} parent=0 // pred_fallthru
    _
  %v4 = vld [vmem:[%s0] ss:$0 sm:$0xff]
  %5 = vst [vmem:[%s1] sm:$0xff] %v4
  %s6 = scalar_lea.vmem %s1, 8
  %7 = vst [vmem:[%s6] sm:$0xff] %v4
  %s8 = scalar_lea.vmem %s1, 16
  %9 = vst [vmem:[%s8] sm:$0xff] %v4
  %s10 = scalar_lea.vmem %s1, 24
  %11 = vst [vmem:[%s10] sm:$0xff] %v4

// kernel: tile.134
$region0: #{tile.134}
  %s0 = inlined_call_operand.vmem [shape: f32[25,9], index: 0, kind: input, shape index: {}]
  %s1 = inlined_call_operand.vmem [shape: f32[1,225], index: 1, kind: output, shape index: {}]
  $region1: #{tile.134} parent=0
    #allocation0 [shape = 'u8[8192]{0}', space=vmem, size = 0x2000, scoped, tag = 'scoped mem for output reshape']
    %v2 = vld [vmem:[%s0] sm:$0x1]
    %vm3 = vcmask 72704
    %4 = vst.msk [vmem:[#allocation0] sm:$0x1] %vm3, %v2
    %s5 = scalar_lea.vmem %s0, 14
    %v6 = vld [vmem:[%s5] sm:$0x1]
    %s7 = scalar_lea.vmem %s0, 14
    %v8 = vld [vmem:[%s7] sm:$0x1]
    %vm9 = vcmask 15360
    %v10 = vsel %vm9, %v8, %v6
    %11 = vrot.lane.b32.xlu0 %v10, 126
    %v12 = vpop.permute.xlu0 %11
    %vm13 = vcmask 56320
    %s14 = scalar_lea.vmem [#allocation0], 8
    %15 = vst.msk [vmem:[%s14] sm:$0x1] %vm13, %v12
    %vm16 = vcmask 1048560
    %17 = vst.msk [vmem:[#allocation0] sm:$0x1] %vm16, %v12
    %s18 = scalar_lea.vmem %s0, 13
    %v19 = vld [vmem:[%s18] sm:$0x1]
    %20 = vrot.lane.b32.xlu0 %v19, 117
    %v21 = vpop.permute.xlu0 %20
    %vm22 = vcmask 1032104
    %23 = vst.msk [vmem:[#allocation0] sm:$0x1] %vm22, %v21
    %s24 = scalar_lea.vmem %s0, 12
    %v25 = vld [vmem:[%s24] sm:$0x1]
    %26 = vrot.lane.b32.xlu0 %v25, 108
    %v27 = vpop.permute.xlu0 %26
    %vm28 = vcmask 958304
    %29 = vst.msk [vmem:[#allocation0] sm:$0x1] %vm28, %v27
    %s30 = scalar_lea.vmem %s0, 11
    %v31 = vld [vmem:[%s30] sm:$0x1]
    %32 = vrot.lane.b32.xlu0 %v31, 99
    %v33 = vpop.permute.xlu0 %32
    %vm34 = vcmask 884504
    %35 = vst.msk [vmem:[#allocation0] sm:$0x1] %vm34, %v33
    %s36 = scalar_lea.vmem %s0, 10
    %v37 = vld [vmem:[%s36] sm:$0x1]
    %38 = vrot.lane.b32.xlu0 %v37, 90
    %v39 = vpop.permute.xlu0 %38
    %vm40 = vcmask 810704
    %41 = vst.msk [vmem:[#allocation0] sm:$0x1] %vm40, %v39
    %s42 = scalar_lea.vmem %s0, 24
    %v43 = vld [vmem:[%s42] sm:$0x1]
    %44 = vrot.lane.b32.xlu0 %v43, 88
    %v45 = vpop.permute.xlu0 %44
    %vm46 = vcmask 794304
    %s47 = scalar_lea.vmem [#allocation0], 8
    %48 = vst.msk [vmem:[%s47] sm:$0x1] %vm46, %v45
    %s49 = scalar_lea.vmem %s0, 9
    %v50 = vld [vmem:[%s49] sm:$0x1]
    %51 = vrot.lane.b32.xlu0 %v50, 81
    %v52 = vpop.permute.xlu0 %51
    %vm53 = vcmask 736904
    %54 = vst.msk [vmem:[#allocation0] sm:$0x1] %vm53, %v52
    %s55 = scalar_lea.vmem %s0, 23
    %v56 = vld [vmem:[%s55] sm:$0x1]
    %57 = vrot.lane.b32.xlu0 %v56, 79
    %v58 = vpop.permute.xlu0 %57
    %vm59 = vcmask 720504
    %s60 = scalar_lea.vmem [#allocation0], 8
    %61 = vst.msk [vmem:[%s60] sm:$0x1] %vm59, %v58
    %s62 = scalar_lea.vmem %s0, 8
    %v63 = vld [vmem:[%s62] sm:$0x1]
    %64 = vrot.lane.b32.xlu0 %v63, 72
    %v65 = vpop.permute.xlu0 %64
    %vm66 = vcmask 663104
    %67 = vst.msk [vmem:[#allocation0] sm:$0x1] %vm66, %v65
    %s68 = scalar_lea.vmem %s0, 22
    %v69 = vld [vmem:[%s68] sm:$0x1]
    %70 = vrot.lane.b32.xlu0 %v69, 70
    %v71 = vpop.permute.xlu0 %70
    %vm72 = vcmask 646704
    %s73 = scalar_lea.vmem [#allocation0], 8
    %74 = vst.msk [vmem:[%s73] sm:$0x1] %vm72, %v71
    %s75 = scalar_lea.vmem %s0, 7
    %v76 = vld [vmem:[%s75] sm:$0x1]
    %77 = vrot.lane.b32.xlu0 %v76, 63
    %v78 = vpop.permute.xlu0 %77
    %vm79 = vcmask 589304
    %80 = vst.msk [vmem:[#allocation0] sm:$0x1] %vm79, %v78
    %s81 = scalar_lea.vmem %s0, 21
    %v82 = vld [vmem:[%s81] sm:$0x1]
    %83 = vrot.lane.b32.xlu0 %v82, 61
    %v84 = vpop.permute.xlu0 %83
    %vm85 = vcmask 572904
    %s86 = scalar_lea.vmem [#allocation0], 8
    %87 = vst.msk [vmem:[%s86] sm:$0x1] %vm85, %v84
    %s88 = scalar_lea.vmem %s0, 6
    %v89 = vld [vmem:[%s88] sm:$0x1]
    %90 = vrot.lane.b32.xlu0 %v89, 54
    %v91 = vpop.permute.xlu0 %90
    %vm92 = vcmask 515504
    %93 = vst.msk [vmem:[#allocation0] sm:$0x1] %vm92, %v91
    %s94 = scalar_lea.vmem %s0, 20
    %v95 = vld [vmem:[%s94] sm:$0x1]
    %96 = vrot.lane.b32.xlu0 %v95, 52
    %v97 = vpop.permute.xlu0 %96
    %vm98 = vcmask 499104
    %s99 = scalar_lea.vmem [#allocation0], 8
    %100 = vst.msk [vmem:[%s99] sm:$0x1] %vm98, %v97
    %s101 = scalar_lea.vmem %s0, 5
    %v102 = vld [vmem:[%s101] sm:$0x1]
    %103 = vrot.lane.b32.xlu0 %v102, 45
    %v104 = vpop.permute.xlu0 %103
    %vm105 = vcmask 441704
    %106 = vst.msk [vmem:[#allocation0] sm:$0x1] %vm105, %v104
    %s107 = scalar_lea.vmem %s0, 19
    %v108 = vld [vmem:[%s107] sm:$0x1]
    %109 = vrot.lane.b32.xlu0 %v108, 43
    %v110 = vpop.permute.xlu0 %109
    %vm111 = vcmask 425304
    %s112 = scalar_lea.vmem [#allocation0], 8
    %113 = vst.msk [vmem:[%s112] sm:$0x1] %vm111, %v110
    %s114 = scalar_lea.vmem %s0, 4
    %v115 = vld [vmem:[%s114] sm:$0x1]
    %116 = vrot.lane.b32.xlu0 %v115, 36
    %v117 = vpop.permute.xlu0 %116
    %vm118 = vcmask 367904
    %119 = vst.msk [vmem:[#allocation0] sm:$0x1] %vm118, %v117
    %s120 = scalar_lea.vmem %s0, 18
    %v121 = vld [vmem:[%s120] sm:$0x1]
    %122 = vrot.lane.b32.xlu0 %v121, 34
    %v123 = vpop.permute.xlu0 %122
    %vm124 = vcmask 351504
    %s125 = scalar_lea.vmem [#allocation0], 8
    %126 = vst.msk [vmem:[%s125] sm:$0x1] %vm124, %v123
    %s127 = scalar_lea.vmem %s0, 3
    %v128 = vld [vmem:[%s127] sm:$0x1]
    %129 = vrot.lane.b32.xlu0 %v128, 27
    %v130 = vpop.permute.xlu0 %129
    %vm131 = vcmask 294104
    %132 = vst.msk [vmem:[#allocation0] sm:$0x1] %vm131, %v130
    %s133 = scalar_lea.vmem %s0, 17
    %v134 = vld [vmem:[%s133] sm:$0x1]
    %135 = vrot.lane.b32.xlu0 %v134, 25
    %v136 = vpop.permute.xlu0 %135
    %vm137 = vcmask 277704
    %s138 = scalar_lea.vmem [#allocation0], 8
    %139 = vst.msk [vmem:[%s138] sm:$0x1] %vm137, %v136
    %s140 = scalar_lea.vmem %s0, 2
    %v141 = vld [vmem:[%s140] sm:$0x1]
    %142 = vrot.lane.b32.xlu0 %v141, 18
    %v143 = vpop.permute.xlu0 %142
    %vm144 = vcmask 220304
    %145 = vst.msk [vmem:[#allocation0] sm:$0x1] %vm144, %v143
    %s146 = scalar_lea.vmem %s0, 16
    %v147 = vld [vmem:[%s146] sm:$0x1]
    %148 = vrot.lane.b32.xlu0 %v147, 16
    %v149 = vpop.permute.xlu0 %148
    %vm150 = vcmask 203904
    %s151 = scalar_lea.vmem [#allocation0], 8
    %152 = vst.msk [vmem:[%s151] sm:$0x1] %vm150, %v149
    %s153 = scalar_lea.vmem %s0, 1
    %v154 = vld [vmem:[%s153] sm:$0x1]
    %155 = vrot.lane.b32.xlu0 %v154, 9
    %v156 = vpop.permute.xlu0 %155
    %vm157 = vcmask 146504
    %158 = vst.msk [vmem:[#allocation0] sm:$0x1] %vm157, %v156
    %s159 = scalar_lea.vmem %s0, 15
    %v160 = vld [vmem:[%s159] sm:$0x1]
    %161 = vrot.lane.b32.xlu0 %v160, 7
    %v162 = vpop.permute.xlu0 %161
    %vm163 = vcmask 130104
    %s164 = scalar_lea.vmem [#allocation0], 8
    %165 = vst.msk [vmem:[%s164] sm:$0x1] %vm163, %v162
    %s167 = sshllo.u32 0, 1
    %v169 = vld [vmem:[#allocation0] sm:%s167]
    %s170 = sshllo.u32 0, 1
    %171 = vst [vmem:[%s1] sm:%s170] %v169
    %s172 = scalar_lea.vmem [#allocation0], 8
    %v173 = vld [vmem:[%s172] sm:%s167]
    %s174 = sshllo.u32 0, 1
    %s175 = scalar_lea.vmem %s1, 1
    %176 = vst [vmem:[%s175] sm:%s174] %v173

// kernel: lazy_planner_starter.1
$region0: #{lazy_planner_starter.1}
  #allocation0 [shape = 'u32[]', space=smem, size = 0x4, offset = 0x4, fixed_abs, tag = 'smem constant byte address 0x4 - core index']
  #allocation1 [shape = 'u32[144,128]{1,0:T(1,128)}', space=vmem, size = 0x12000, scoped, tag = 'internal scratch']
  %s0 = inlined_call_operand.vmem [shape: bf16[2,329], index: 0, kind: input, shape index: {}]
  %s1 = inlined_call_operand.vmem [shape: f32[2,128], index: 1, kind: input, shape index: {}]
  %s2 = inlined_call_operand.vmem [shape: bf16[329,1125], index: 2, kind: input, shape index: {}]
  %s3 = inlined_call_operand.vmem [shape: f32[1,1125], index: 3, kind: input, shape index: {}]
  %s4 = inlined_call_operand.vmem [shape: bf16[225,225], index: 4, kind: input, shape index: {}]
  %s5 = inlined_call_operand.vmem [shape: f32[1,225], index: 5, kind: input, shape index: {}]
  %s6 = inlined_call_operand.vmem [shape: f32[1,225], index: 6, kind: input, shape index: {}]
  %s7 = inlined_call_operand.vmem [shape: bf16[225,128], index: 7, kind: input, shape index: {}]
  %s8 = inlined_call_operand.vmem [shape: bf16[32,128], index: 8, kind: input, shape index: {}]
  %s9 = inlined_call_operand.vmem [shape: f32[1,128], index: 9, kind: input, shape index: {}]
  %s10 = inlined_call_operand.vmem [shape: bf16[32,128], index: 10, kind: input, shape index: {}]
  %s11 = inlined_call_operand.vmem [shape: bf16[32,128], index: 11, kind: input, shape index: {}]
  %s12 = inlined_call_operand.vmem [shape: f32[1,128], index: 12, kind: input, shape index: {}]
  %s13 = inlined_call_operand.vmem [shape: f32[1,32], index: 13, kind: input, shape index: {}]
  %s14 = inlined_call_operand.vmem [shape: f32[1,32], index: 14, kind: input, shape index: {}]
  %s15 = inlined_call_operand.vmem [shape: bf16[329,32], index: 15, kind: input, shape index: {}]
  %s16 = inlined_call_operand.vmem [shape: f32[1,32], index: 16, kind: input, shape index: {}]
  %s17 = inlined_call_operand.vmem [shape: f32[2,160], index: 17, kind: output, shape index: {}]
  %s18 = sld [smem:[#allocation0]]
  $region78: #{lazy_planner_starter.1} parent=0
    _
  %s20 = ssub.s32 1, %s18
  %s21 = scalar_select 0, %s20, %s18
  // Predicated region
  $region2: #{lazy_planner_starter.1} parent=0 // pred_check
    _
  $region3: #{lazy_planner_starter.1} parent=0 // pred_check_branch
    %23 = sbr.rel (0) target = $region5
  $region4: #{lazy_planner_starter.1} parent=0 // pred_region
    _
  $region5: #{lazy_planner_starter.1} parent=0 // pred_fallthru
    _
  // Predicated region
  $region6: #{lazy_planner_starter.1} parent=0 // pred_check
    _
  $region7: #{lazy_planner_starter.1} parent=0 // pred_check_branch
    %25 = sbr.rel (0) target = $region9
  $region8: #{lazy_planner_starter.1} parent=0 // pred_region
    _
  $region9: #{lazy_planner_starter.1} parent=0 // pred_fallthru
    _
  // Predicated region
  $region10: #{lazy_planner_starter.1} parent=0 // pred_check
    _
  $region11: #{lazy_planner_starter.1} parent=0 // pred_check_branch
    %27 = sbr.rel (0) target = $region13
  $region12: #{lazy_planner_starter.1} parent=0 // pred_region
    _
  $region13: #{lazy_planner_starter.1} parent=0 // pred_fallthru
    _
  // Predicated region
  $region14: #{lazy_planner_starter.1} parent=0 // pred_check
    _
  $region15: #{lazy_planner_starter.1} parent=0 // pred_check_branch
    %29 = sbr.rel (0) target = $region17
  $region16: #{lazy_planner_starter.1} parent=0 // pred_region
    _
  $region17: #{lazy_planner_starter.1} parent=0 // pred_fallthru
    _
  // Predicated region
  $region18: #{lazy_planner_starter.1} parent=0 // pred_check
    _
  $region19: #{lazy_planner_starter.1} parent=0 // pred_check_branch
    %31 = sbr.rel (0) target = $region21
  $region20: #{lazy_planner_starter.1} parent=0 // pred_region
    _
  $region21: #{lazy_planner_starter.1} parent=0 // pred_fallthru
    _
  // Predicated region
  $region22: #{lazy_planner_starter.1} parent=0 // pred_check
    _
  $region23: #{lazy_planner_starter.1} parent=0 // pred_check_branch
    %33 = sbr.rel (0) target = $region25
  $region24: #{lazy_planner_starter.1} parent=0 // pred_region
    _
  $region25: #{lazy_planner_starter.1} parent=0 // pred_fallthru
    _
  // Predicated region
  $region26: #{lazy_planner_starter.1} parent=0 // pred_check
    _
  $region27: #{lazy_planner_starter.1} parent=0 // pred_check_branch
    %35 = sbr.rel (0) target = $region29
  $region28: #{lazy_planner_starter.1} parent=0 // pred_region
    _
  $region29: #{lazy_planner_starter.1} parent=0 // pred_fallthru
    _
  // Predicated region
  $region30: #{lazy_planner_starter.1} parent=0 // pred_check
    _
  $region31: #{lazy_planner_starter.1} parent=0 // pred_check_branch
    %37 = sbr.rel (0) target = $region33
  $region32: #{lazy_planner_starter.1} parent=0 // pred_region
    _
  $region33: #{lazy_planner_starter.1} parent=0 // pred_fallthru
    _
  // Predicated region
  $region34: #{lazy_planner_starter.1} parent=0 // pred_check
    _
  $region35: #{lazy_planner_starter.1} parent=0 // pred_check_branch
    %39 = sbr.rel (0) target = $region37
  $region36: #{lazy_planner_starter.1} parent=0 // pred_region
    _
  $region37: #{lazy_planner_starter.1} parent=0 // pred_fallthru
    _
  // Predicated region
  $region38: #{lazy_planner_starter.1} parent=0 // pred_check
    _
  $region39: #{lazy_planner_starter.1} parent=0 // pred_check_branch
    %41 = sbr.rel (0) target = $region41
  $region40: #{lazy_planner_starter.1} parent=0 // pred_region
    _
  $region41: #{lazy_planner_starter.1} parent=0 // pred_fallthru
    _
  // Predicated region
  $region42: #{lazy_planner_starter.1} parent=0 // pred_check
    _
  $region43: #{lazy_planner_starter.1} parent=0 // pred_check_branch
    %43 = sbr.rel (0) target = $region45
  $region44: #{lazy_planner_starter.1} parent=0 // pred_region
    _
  $region45: #{lazy_planner_starter.1} parent=0 // pred_fallthru
    _
  // Predicated region
  $region46: #{lazy_planner_starter.1} parent=0 // pred_check
    _
  $region47: #{lazy_planner_starter.1} parent=0 // pred_check_branch
    %45 = sbr.rel (0) target = $region49
  $region48: #{lazy_planner_starter.1} parent=0 // pred_region
    _
  $region49: #{lazy_planner_starter.1} parent=0 // pred_fallthru
    _
  // Predicated region
  $region50: #{lazy_planner_starter.1} parent=0 // pred_check
    _
  $region51: #{lazy_planner_starter.1} parent=0 // pred_check_branch
    %47 = sbr.rel (0) target = $region53
  $region52: #{lazy_planner_starter.1} parent=0 // pred_region
    _
  $region53: #{lazy_planner_starter.1} parent=0 // pred_fallthru
    _
  // Predicated region
  $region54: #{lazy_planner_starter.1} parent=0 // pred_check
    _
  $region55: #{lazy_planner_starter.1} parent=0 // pred_check_branch
    %49 = sbr.rel (0) target = $region57
  $region56: #{lazy_planner_starter.1} parent=0 // pred_region
    _
  $region57: #{lazy_planner_starter.1} parent=0 // pred_fallthru
    _
  // Predicated region
  $region58: #{lazy_planner_starter.1} parent=0 // pred_check
    _
  $region59: #{lazy_planner_starter.1} parent=0 // pred_check_branch
    %51 = sbr.rel (0) target = $region61
  $region60: #{lazy_planner_starter.1} parent=0 // pred_region
    _
  $region61: #{lazy_planner_starter.1} parent=0 // pred_fallthru
    _
  // Predicated region
  $region62: #{lazy_planner_starter.1} parent=0 // pred_check
    _
  $region63: #{lazy_planner_starter.1} parent=0 // pred_check_branch
    %53 = sbr.rel (0) target = $region65
  $region64: #{lazy_planner_starter.1} parent=0 // pred_region
    _
  $region65: #{lazy_planner_starter.1} parent=0 // pred_fallthru
    _
  // Predicated region
  $region66: #{lazy_planner_starter.1} parent=0 // pred_check
    _
  $region67: #{lazy_planner_starter.1} parent=0 // pred_check_branch
    %55 = sbr.rel (0) target = $region69
  $region68: #{lazy_planner_starter.1} parent=0 // pred_region
    _
  $region69: #{lazy_planner_starter.1} parent=0 // pred_fallthru
    _
  %v57 = vld [vmem:[%s0] sm:$0x7]
  %v58 = vld [vmem:[%s4] sm:$0xff]
  %v59 = vld [vmem:[%s4 + $0x8] sm:$0xff]
  %v60 = vld [vmem:[%s4 + $0x10] sm:$0xff]
  %v61 = vld [vmem:[%s4 + $0x18] sm:$0xff]
  %v62 = vld [vmem:[%s4 + $0x20] sm:$0xff]
  %v63 = vld [vmem:[%s4 + $0x28] sm:$0xff]
  %v64 = vld [vmem:[%s4 + $0x30] sm:$0xff]
  %v65 = vld [vmem:[%s4 + $0x38] sm:$0xff]
  %v66 = vld [vmem:[%s4 + $0x40] sm:$0xff]
  %v67 = vld [vmem:[%s4 + $0x48] sm:$0xff]
  %v68 = vld [vmem:[%s4 + $0x50] sm:$0xff]
  %v69 = vld [vmem:[%s4 + $0x58] sm:$0xff]
  %v70 = vld [vmem:[%s4 + $0x60] sm:$0xff]
  %v71 = vld [vmem:[%s4 + $0x68] sm:$0xff]
  %v72 = vld [vmem:[%s4 + $0x70] sm:$0xff]
  %v73 = vld [vmem:[%s4 + $0x78] sm:$0xff]
  %v74 = vld [vmem:[%s4 + $0x80] sm:$0xff]
  %v75 = vld [vmem:[%s4 + $0x88] sm:$0xff]
  %v76 = vld [vmem:[%s4 + $0x90] sm:$0xff]
  %v77 = vld [vmem:[%s4 + $0x98] sm:$0xff]
  %v78 = vld [vmem:[%s4 + $0xa0] sm:$0xff]
  %v79 = vld [vmem:[%s4 + $0xa8] sm:$0xff]
  %v80 = vld [vmem:[%s4 + $0xb0] sm:$0xff]
  %v81 = vld [vmem:[%s4 + $0xb8] sm:$0xff]
  %v82 = vld [vmem:[%s4 + $0xc0] sm:$0xff]
  %v83 = vld [vmem:[%s4 + $0xc8] sm:$0xff]
  %v84 = vld [vmem:[%s4 + $0xd0] sm:$0xff]
  %v85 = vld [vmem:[%s4 + $0xd8] sm:$0xff]
  %v86 = vld [vmem:[%s4 + $0xe0] sm:$0x11]
  %v87 = vld [vmem:[%s2] sm:$0xff]
  %v88 = vld [vmem:[%s2 + $0x8] sm:$0xff]
  %v89 = vld [vmem:[%s2 + $0x10] sm:$0xff]
  %v90 = vld [vmem:[%s2 + $0x18] sm:$0xff]
  %v91 = vld [vmem:[%s2 + $0x20] sm:$0xf]
  %v92 = vld [vmem:[%s2 + $0x24] sm:$0xff]
  %v93 = vld [vmem:[%s2 + $0x2c] sm:$0xff]
  %v94 = vld [vmem:[%s2 + $0x34] sm:$0xff]
  %v95 = vld [vmem:[%s2 + $0x3c] sm:$0xff]
  %v96 = vld [vmem:[%s2 + $0x44] sm:$0xf]
  %v97 = vld [vmem:[%s2 + $0x48] sm:$0xff]
  %v98 = vld [vmem:[%s2 + $0x50] sm:$0xff]
  %v99 = vld [vmem:[%s2 + $0x58] sm:$0xff]
  %v100 = vld [vmem:[%s2 + $0x60] sm:$0xff]
  %v101 = vld [vmem:[%s2 + $0x68] sm:$0xf]
  %v102 = vld [vmem:[%s2 + $0x6c] sm:$0xff]
  %v103 = vld [vmem:[%s2 + $0x74] sm:$0xff]
  %v104 = vld [vmem:[%s2 + $0x7c] sm:$0xff]
  %v105 = vld [vmem:[%s2 + $0x84] sm:$0xff]
  %v106 = vld [vmem:[%s2 + $0x8c] sm:$0xf]
  %v107 = vld [vmem:[%s2 + $0x90] sm:$0xff]
  %v108 = vld [vmem:[%s2 + $0x98] sm:$0xff]
  %v109 = vld [vmem:[%s2 + $0xa0] sm:$0xff]
  %v110 = vld [vmem:[%s2 + $0xa8] sm:$0xff]
  %v111 = vld [vmem:[%s2 + $0xb0] sm:$0xf]
  %v112 = vld [vmem:[%s2 + $0xb4] sm:$0xff]
  %v113 = vld [vmem:[%s2 + $0xbc] sm:$0xff]
  %v114 = vld [vmem:[%s2 + $0xc4] sm:$0xff]
  %v115 = vld [vmem:[%s2 + $0xcc] sm:$0xff]
  %v116 = vld [vmem:[%s2 + $0xd4] sm:$0xf]
  %v117 = vld [vmem:[%s2 + $0xd8] sm:$0xff]
  %v118 = vld [vmem:[%s2 + $0xe0] sm:$0xff]
  %v119 = vld [vmem:[%s2 + $0xe8] sm:$0xff]
  %v120 = vld [vmem:[%s2 + $0xf0] sm:$0xff]
  %v121 = vld [vmem:[%s2 + $0xf8] sm:$0xf]
  %v122 = vld [vmem:[%s2 + $0xfc] sm:$0xff]
  %v123 = vld [vmem:[%s2 + $0x104] sm:$0xff]
  %v124 = vld [vmem:[%s2 + $0x10c] sm:$0xff]
  %v125 = vld [vmem:[%s2 + $0x114] sm:$0xff]
  %v126 = vld [vmem:[%s2 + $0x11c] sm:$0xf]
  %v127 = vld [vmem:[%s2 + $0x120] sm:$0xff]
  %v128 = vld [vmem:[%s2 + $0x128] sm:$0xff]
  %v129 = vld [vmem:[%s2 + $0x130] sm:$0xff]
  %v130 = vld [vmem:[%s2 + $0x138] sm:$0xff]
  %v131 = vld [vmem:[%s2 + $0x140] sm:$0xf]
  %v132 = vld [vmem:[%s2 + $0x144] sm:$0xff]
  %v133 = vld [vmem:[%s2 + $0x14c] sm:$0xff]
  %v134 = vld [vmem:[%s2 + $0x154] sm:$0xff]
  %v135 = vld [vmem:[%s2 + $0x15c] sm:$0xff]
  %v136 = vld [vmem:[%s2 + $0x164] sm:$0xf]
  %v137 = vld [vmem:[%s2 + $0x168] sm:$0xff]
  %v138 = vld [vmem:[%s2 + $0x170] sm:$0xff]
  %v139 = vld [vmem:[%s2 + $0x178] sm:$0xff]
  %v140 = vld [vmem:[%s2 + $0x180] sm:$0xff]
  %v141 = vld [vmem:[%s2 + $0x188] sm:$0xf]
  %v142 = vld [vmem:[%s2 + $0x18c] sm:$0xff]
  %v143 = vld [vmem:[%s2 + $0x194] sm:$0xff]
  %v144 = vld [vmem:[%s2 + $0x19c] sm:$0xff]
  %v145 = vld [vmem:[%s2 + $0x1a4] sm:$0xff]
  %v146 = vld [vmem:[%s2 + $0x1ac] sm:$0xf]
  %v147 = vld [vmem:[%s2 + $0x1b0] sm:$0xff]
  %v148 = vld [vmem:[%s2 + $0x1b8] sm:$0xff]
  %v149 = vld [vmem:[%s2 + $0x1c0] sm:$0xff]
  %v150 = vld [vmem:[%s2 + $0x1c8] sm:$0xff]
  %v151 = vld [vmem:[%s2 + $0x1d0] sm:$0xf]
  %v152 = vld [vmem:[%s2 + $0x1d4] sm:$0xff]
  %v153 = vld [vmem:[%s2 + $0x1dc] sm:$0xff]
  %v154 = vld [vmem:[%s2 + $0x1e4] sm:$0xff]
  %v155 = vld [vmem:[%s2 + $0x1ec] sm:$0xff]
  %v156 = vld [vmem:[%s2 + $0x1f4] sm:$0xf]
  %v157 = vld [vmem:[%s2 + $0x1f8] sm:$0xff]
  %v158 = vld [vmem:[%s2 + $0x200] sm:$0xff]
  %v159 = vld [vmem:[%s2 + $0x208] sm:$0xff]
  %v160 = vld [vmem:[%s2 + $0x210] sm:$0xff]
  %v161 = vld [vmem:[%s2 + $0x218] sm:$0xf]
  %v162 = vld [vmem:[%s2 + $0x21c] sm:$0xff]
  %v163 = vld [vmem:[%s2 + $0x224] sm:$0xff]
  %v164 = vld [vmem:[%s2 + $0x22c] sm:$0xff]
  %v165 = vld [vmem:[%s2 + $0x234] sm:$0xff]
  %v166 = vld [vmem:[%s2 + $0x23c] sm:$0xf]
  %v167 = vld [vmem:[%s2 + $0x240] sm:$0xff]
  %v168 = vld [vmem:[%s2 + $0x248] sm:$0xff]
  %v169 = vld [vmem:[%s2 + $0x250] sm:$0xff]
  %v170 = vld [vmem:[%s2 + $0x258] sm:$0xff]
  %v171 = vld [vmem:[%s2 + $0x260] sm:$0xf]
  %v172 = vld [vmem:[%s2 + $0x264] sm:$0xff]
  %v173 = vld [vmem:[%s2 + $0x26c] sm:$0xff]
  %v174 = vld [vmem:[%s2 + $0x274] sm:$0xff]
  %v175 = vld [vmem:[%s2 + $0x27c] sm:$0xff]
  %v176 = vld [vmem:[%s2 + $0x284] sm:$0xf]
  %v177 = vld [vmem:[%s2 + $0x288] sm:$0xff]
  %v178 = vld [vmem:[%s2 + $0x290] sm:$0xff]
  %v179 = vld [vmem:[%s2 + $0x298] sm:$0xff]
  %v180 = vld [vmem:[%s2 + $0x2a0] sm:$0xff]
  %v181 = vld [vmem:[%s2 + $0x2a8] sm:$0xf]
  %v182 = vld [vmem:[%s2 + $0x2ac] sm:$0xff]
  %v183 = vld [vmem:[%s2 + $0x2b4] sm:$0xff]
  %v184 = vld [vmem:[%s2 + $0x2bc] sm:$0xff]
  %v185 = vld [vmem:[%s2 + $0x2c4] sm:$0xff]
  %v186 = vld [vmem:[%s2 + $0x2cc] sm:$0xf]
  %v187 = vld [vmem:[%s2 + $0x2d0] sm:$0xff]
  %v188 = vld [vmem:[%s2 + $0x2d8] sm:$0xff]
  %v189 = vld [vmem:[%s2 + $0x2e0] sm:$0xff]
  %v190 = vld [vmem:[%s2 + $0x2e8] sm:$0xff]
  %v191 = vld [vmem:[%s2 + $0x2f0] sm:$0xf]
  %v192 = vld [vmem:[%s2 + $0x2f4] sm:$0xff]
  %v193 = vld [vmem:[%s2 + $0x2fc] sm:$0xff]
  %v194 = vld [vmem:[%s2 + $0x304] sm:$0xff]
  %v195 = vld [vmem:[%s2 + $0x30c] sm:$0xff]
  %v196 = vld [vmem:[%s2 + $0x314] sm:$0xf]
  %v197 = vld [vmem:[%s2 + $0x318] sm:$0xff]
  %v198 = vld [vmem:[%s2 + $0x320] sm:$0xff]
  %v199 = vld [vmem:[%s2 + $0x328] sm:$0xff]
  %v200 = vld [vmem:[%s2 + $0x330] sm:$0xff]
  %v201 = vld [vmem:[%s2 + $0x338] sm:$0xf]
  %v202 = vld [vmem:[%s2 + $0x33c] sm:$0xff]
  %v203 = vld [vmem:[%s2 + $0x344] sm:$0xff]
  %v204 = vld [vmem:[%s2 + $0x34c] sm:$0xff]
  %v205 = vld [vmem:[%s2 + $0x354] sm:$0xff]
  %v206 = vld [vmem:[%s2 + $0x35c] sm:$0xf]
  %v207 = vld [vmem:[%s2 + $0x360] sm:$0xff]
  %v208 = vld [vmem:[%s2 + $0x368] sm:$0xff]
  %v209 = vld [vmem:[%s2 + $0x370] sm:$0xff]
  %v210 = vld [vmem:[%s2 + $0x378] sm:$0xff]
  %v211 = vld [vmem:[%s2 + $0x380] sm:$0xf]
  %v212 = vld [vmem:[%s2 + $0x384] sm:$0xff]
  %v213 = vld [vmem:[%s2 + $0x38c] sm:$0xff]
  %v214 = vld [vmem:[%s2 + $0x394] sm:$0xff]
  %v215 = vld [vmem:[%s2 + $0x39c] sm:$0xff]
  %v216 = vld [vmem:[%s2 + $0x3a4] sm:$0xf]
  %v217 = vld [vmem:[%s2 + $0x3a8] sm:$0xff]
  %v218 = vld [vmem:[%s2 + $0x3b0] sm:$0xff]
  %v219 = vld [vmem:[%s2 + $0x3b8] sm:$0xff]
  %v220 = vld [vmem:[%s2 + $0x3c0] sm:$0xff]
  %v221 = vld [vmem:[%s2 + $0x3c8] sm:$0xf]
  %v222 = vld [vmem:[%s2 + $0x3cc] sm:$0xff]
  %v223 = vld [vmem:[%s2 + $0x3d4] sm:$0xff]
  %v224 = vld [vmem:[%s2 + $0x3dc] sm:$0xff]
  %v225 = vld [vmem:[%s2 + $0x3e4] sm:$0xff]
  %v226 = vld [vmem:[%s2 + $0x3ec] sm:$0xf]
  %v227 = vld [vmem:[%s2 + $0x3f0] sm:$0xff]
  %v228 = vld [vmem:[%s2 + $0x3f8] sm:$0xff]
  %v229 = vld [vmem:[%s2 + $0x400] sm:$0xff]
  %v230 = vld [vmem:[%s2 + $0x408] sm:$0xff]
  %v231 = vld [vmem:[%s2 + $0x410] sm:$0xf]
  %v232 = vld [vmem:[%s2 + $0x414] sm:$0xff]
  %v233 = vld [vmem:[%s2 + $0x41c] sm:$0xff]
  %v234 = vld [vmem:[%s2 + $0x424] sm:$0xff]
  %v235 = vld [vmem:[%s2 + $0x42c] sm:$0xff]
  %v236 = vld [vmem:[%s2 + $0x434] sm:$0xf]
  %v237 = vld [vmem:[%s2 + $0x438] sm:$0xff]
  %v238 = vld [vmem:[%s2 + $0x440] sm:$0xff]
  %v239 = vld [vmem:[%s2 + $0x448] sm:$0xff]
  %v240 = vld [vmem:[%s2 + $0x450] sm:$0xff]
  %v241 = vld [vmem:[%s2 + $0x458] sm:$0xf]
  %v242 = vld [vmem:[%s2 + $0x45c] sm:$0xff]
  %v243 = vld [vmem:[%s2 + $0x464] sm:$0xff]
  %v244 = vld [vmem:[%s2 + $0x46c] sm:$0xff]
  %v245 = vld [vmem:[%s2 + $0x474] sm:$0xff]
  %v246 = vld [vmem:[%s2 + $0x47c] sm:$0xf]
  %v247 = vld [vmem:[%s2 + $0x480] sm:$0xff]
  %v248 = vld [vmem:[%s2 + $0x488] sm:$0xff]
  %v249 = vld [vmem:[%s2 + $0x490] sm:$0xff]
  %v250 = vld [vmem:[%s2 + $0x498] sm:$0xff]
  %v251 = vld [vmem:[%s2 + $0x4a0] sm:$0xf]
  %v252 = vld [vmem:[%s2 + $0x4a4] sm:$0xff]
  %v253 = vld [vmem:[%s2 + $0x4ac] sm:$0xff]
  %v254 = vld [vmem:[%s2 + $0x4b4] sm:$0xff]
  %v255 = vld [vmem:[%s2 + $0x4bc] sm:$0xff]
  %v256 = vld [vmem:[%s2 + $0x4c4] sm:$0xf]
  %v257 = vld [vmem:[%s2 + $0x4c8] sm:$0xff]
  %v258 = vld [vmem:[%s2 + $0x4d0] sm:$0xff]
  %v259 = vld [vmem:[%s2 + $0x4d8] sm:$0xff]
  %v260 = vld [vmem:[%s2 + $0x4e0] sm:$0xff]
  %v261 = vld [vmem:[%s2 + $0x4e8] sm:$0xf]
  %v262 = vld [vmem:[%s2 + $0x4ec] sm:$0xff]
  %v263 = vld [vmem:[%s2 + $0x4f4] sm:$0xff]
  %v264 = vld [vmem:[%s2 + $0x4fc] sm:$0xff]
  %v265 = vld [vmem:[%s2 + $0x504] sm:$0xff]
  %v266 = vld [vmem:[%s2 + $0x50c] sm:$0xf]
  %v267 = vld [vmem:[%s2 + $0x510] sm:$0xff]
  %v268 = vld [vmem:[%s2 + $0x518] sm:$0xff]
  %v269 = vld [vmem:[%s2 + $0x520] sm:$0xff]
  %v270 = vld [vmem:[%s2 + $0x528] sm:$0xff]
  %v271 = vld [vmem:[%s2 + $0x530] sm:$0xf]
  %v272 = vld [vmem:[%s2 + $0x534] sm:$0xff]
  %v273 = vld [vmem:[%s2 + $0x53c] sm:$0xff]
  %v274 = vld [vmem:[%s2 + $0x544] sm:$0xff]
  %v275 = vld [vmem:[%s2 + $0x54c] sm:$0xff]
  %v276 = vld [vmem:[%s2 + $0x554] sm:$0xf]
  %v277 = vld [vmem:[%s2 + $0x558] sm:$0xff]
  %v278 = vld [vmem:[%s2 + $0x560] sm:$0xff]
  %v279 = vld [vmem:[%s2 + $0x568] sm:$0xff]
  %v280 = vld [vmem:[%s2 + $0x570] sm:$0xff]
  %v281 = vld [vmem:[%s2 + $0x578] sm:$0xf]
  %v282 = vld [vmem:[%s2 + $0x57c] sm:$0xff]
  %v283 = vld [vmem:[%s2 + $0x584] sm:$0xff]
  %v284 = vld [vmem:[%s2 + $0x58c] sm:$0xff]
  %v285 = vld [vmem:[%s2 + $0x594] sm:$0xff]
  %v286 = vld [vmem:[%s2 + $0x59c] sm:$0xf]
  %v287 = vld [vmem:[%s2 + $0x5a0] sm:$0xff]
  %v288 = vld [vmem:[%s2 + $0x5a8] sm:$0xff]
  %v289 = vld [vmem:[%s2 + $0x5b0] sm:$0xff]
  %v290 = vld [vmem:[%s2 + $0x5b8] sm:$0xff]
  %v291 = vld [vmem:[%s2 + $0x5c0] sm:$0xf]
  %v292 = vld [vmem:[%s2 + $0x5c4] sm:$0x11]
  %v293 = vld [vmem:[%s2 + $0x5cc] sm:$0x11]
  %v294 = vld [vmem:[%s2 + $0x5d4] sm:$0x11]
  %v295 = vld [vmem:[%s2 + $0x5dc] sm:$0x11]
  %v296 = vld [vmem:[%s2 + $0x5e4] sm:$0x1]
  %v297 = vld [vmem:[%s3] sm:$0xff]
  %v298 = vld [vmem:[%s3 + $0x8] sm:$0x1]
  %v301 = vlaneseq
  %v302 = vshrl.u32 %v301, 7
  %v303 = vsub.s32 0, %v302
  %v304 = vrot.slane %v297, %v303
  %v305 = vlaneseq
  %v306 = vshrl.u32 %v305, 7
  %v307 = vsub.s32 1, %v306
  %v308 = vrot.slane %v297, %v307
  %v309 = vlaneseq
  %v310 = vshrl.u32 %v309, 7
  %v311 = vsub.s32 2, %v310
  %v312 = vrot.slane %v297, %v311
  %v313 = vlaneseq
  %v314 = vshrl.u32 %v313, 7
  %v315 = vsub.s32 3, %v314
  %v316 = vrot.slane %v297, %v315
  %v317 = vlaneseq
  %v318 = vshrl.u32 %v317, 7
  %v319 = vsub.s32 4, %v318
  %v320 = vrot.slane %v297, %v319
  %v321 = vlaneseq
  %v322 = vshrl.u32 %v321, 7
  %v323 = vsub.s32 5, %v322
  %v324 = vrot.slane %v297, %v323
  %v325 = vlaneseq
  %v326 = vshrl.u32 %v325, 7
  %v327 = vsub.s32 6, %v326
  %v328 = vrot.slane %v297, %v327
  %v329 = vlaneseq
  %v330 = vshrl.u32 %v329, 7
  %v331 = vsub.s32 7, %v330
  %v332 = vrot.slane %v297, %v331
  %v333 = vlaneseq
  %v334 = vshrl.u32 %v333, 7
  %v335 = vsub.s32 0, %v334
  %v336 = vrot.slane %v298, %v335
  %v348 = vunpack.c.l.s4 1966171168
  %v349 = vunpack.c.0.s8 %v348
  %v350 = vlaneseq
  %v351 = vshrl.u32 %v350, 7
  %v352 = vsub.s32 %v349, %v351
  %v353 = vrot.slane %v57, %v352
  %v354 = vcombine.high %v353, %v353
  %v356 = vunpack.c.l.s4 1966171168
  %v357 = vunpack.c.0.s8 %v356
  %v358 = vlaneseq
  %v359 = vshrl.u32 %v358, 7
  %v360 = vsub.s32 %v357, %v359
  %v361 = vrot.slane %v353, %v360
  %v363 = vunpack.c.l.s4 1966171168
  %v364 = vunpack.c.0.s8 %v363
  %v365 = vlaneseq
  %v366 = vshrl.u32 %v365, 7
  %v367 = vsub.s32 %v364, %v366
  %v368 = vrot.slane %v354, %v367
  %v369 = vcombine.high %v361, %v361
  %v582 = vunpack.c.l.b16 %v87
  %v583 = vunpack.c.h.b16 %v87
  %v584 = vunpack.c.l.b16 %v88
  %v585 = vunpack.c.h.b16 %v88
  %v586 = vunpack.c.l.b16 %v89
  %v587 = vunpack.c.h.b16 %v89
  %v588 = vunpack.c.l.b16 %v90
  %v589 = vunpack.c.h.b16 %v90
  %v590 = vunpack.c.l.b16 %v91
  %v591 = vunpack.c.l.b16 %v92
  %v592 = vunpack.c.h.b16 %v92
  %v593 = vunpack.c.l.b16 %v93
  %v594 = vunpack.c.h.b16 %v93
  %v595 = vunpack.c.l.b16 %v94
  %v596 = vunpack.c.h.b16 %v94
  %v597 = vunpack.c.l.b16 %v95
  %v598 = vunpack.c.h.b16 %v95
  %v599 = vunpack.c.l.b16 %v96
  %v600 = vunpack.c.l.b16 %v97
  %v601 = vunpack.c.h.b16 %v97
  %v602 = vunpack.c.l.b16 %v98
  %v603 = vunpack.c.h.b16 %v98
  %v604 = vunpack.c.l.b16 %v99
  %v605 = vunpack.c.h.b16 %v99
  %v606 = vunpack.c.l.b16 %v100
  %v607 = vunpack.c.h.b16 %v100
  %v608 = vunpack.c.l.b16 %v101
  %v609 = vunpack.c.l.b16 %v102
  %v610 = vunpack.c.h.b16 %v102
  %v611 = vunpack.c.l.b16 %v103
  %v612 = vunpack.c.h.b16 %v103
  %v613 = vunpack.c.l.b16 %v104
  %v614 = vunpack.c.h.b16 %v104
  %v615 = vunpack.c.l.b16 %v105
  %v616 = vunpack.c.h.b16 %v105
  %v617 = vunpack.c.l.b16 %v106
  %v618 = vunpack.c.l.b16 %v107
  %v619 = vunpack.c.h.b16 %v107
  %v620 = vunpack.c.l.b16 %v108
  %v621 = vunpack.c.h.b16 %v108
  %v622 = vunpack.c.l.b16 %v109
  %v623 = vunpack.c.h.b16 %v109
  %v624 = vunpack.c.l.b16 %v110
  %v625 = vunpack.c.h.b16 %v110
  %v626 = vunpack.c.l.b16 %v111
  %v627 = vunpack.c.l.b16 %v112
  %v628 = vunpack.c.h.b16 %v112
  %v629 = vunpack.c.l.b16 %v113
  %v630 = vunpack.c.h.b16 %v113
  %v631 = vunpack.c.l.b16 %v114
  %v632 = vunpack.c.h.b16 %v114
  %v633 = vunpack.c.l.b16 %v115
  %v634 = vunpack.c.h.b16 %v115
  %v635 = vunpack.c.l.b16 %v116
  %v636 = vunpack.c.l.b16 %v117
  %v637 = vunpack.c.h.b16 %v117
  %v638 = vunpack.c.l.b16 %v118
  %v639 = vunpack.c.h.b16 %v118
  %v640 = vunpack.c.l.b16 %v119
  %v641 = vunpack.c.h.b16 %v119
  %v642 = vunpack.c.l.b16 %v120
  %v643 = vunpack.c.h.b16 %v120
  %v644 = vunpack.c.l.b16 %v121
  %v645 = vunpack.c.l.b16 %v122
  %v646 = vunpack.c.h.b16 %v122
  %v647 = vunpack.c.l.b16 %v123
  %v648 = vunpack.c.h.b16 %v123
  %v649 = vunpack.c.l.b16 %v124
  %v650 = vunpack.c.h.b16 %v124
  %v651 = vunpack.c.l.b16 %v125
  %v652 = vunpack.c.h.b16 %v125
  %v653 = vunpack.c.l.b16 %v126
  %v654 = vunpack.c.l.b16 %v127
  %v655 = vunpack.c.h.b16 %v127
  %v656 = vunpack.c.l.b16 %v128
  %v657 = vunpack.c.h.b16 %v128
  %v658 = vunpack.c.l.b16 %v129
  %v659 = vunpack.c.h.b16 %v129
  %v660 = vunpack.c.l.b16 %v130
  %v661 = vunpack.c.h.b16 %v130
  %v662 = vunpack.c.l.b16 %v131
  %v663 = vunpack.c.l.b16 %v132
  %v664 = vunpack.c.h.b16 %v132
  %v665 = vunpack.c.l.b16 %v133
  %v666 = vunpack.c.h.b16 %v133
  %v667 = vunpack.c.l.b16 %v134
  %v668 = vunpack.c.h.b16 %v134
  %v669 = vunpack.c.l.b16 %v135
  %v670 = vunpack.c.h.b16 %v135
  %v671 = vunpack.c.l.b16 %v136
  %v672 = vunpack.c.l.b16 %v137
  %v673 = vunpack.c.h.b16 %v137
  %v674 = vunpack.c.l.b16 %v138
  %v675 = vunpack.c.h.b16 %v138
  %v676 = vunpack.c.l.b16 %v139
  %v677 = vunpack.c.h.b16 %v139
  %v678 = vunpack.c.l.b16 %v140
  %v679 = vunpack.c.h.b16 %v140
  %v680 = vunpack.c.l.b16 %v141
  %v681 = vunpack.c.l.b16 %v142
  %v682 = vunpack.c.h.b16 %v142
  %v683 = vunpack.c.l.b16 %v143
  %v684 = vunpack.c.h.b16 %v143
  %v685 = vunpack.c.l.b16 %v144
  %v686 = vunpack.c.h.b16 %v144
  %v687 = vunpack.c.l.b16 %v145
  %v688 = vunpack.c.h.b16 %v145
  %v689 = vunpack.c.l.b16 %v146
  %v690 = vunpack.c.l.b16 %v147
  %v691 = vunpack.c.h.b16 %v147
  %v692 = vunpack.c.l.b16 %v148
  %v693 = vunpack.c.h.b16 %v148
  %v694 = vunpack.c.l.b16 %v149
  %v695 = vunpack.c.h.b16 %v149
  %v696 = vunpack.c.l.b16 %v150
  %v697 = vunpack.c.h.b16 %v150
  %v698 = vunpack.c.l.b16 %v151
  %v699 = vunpack.c.l.b16 %v152
  %v700 = vunpack.c.h.b16 %v152
  %v701 = vunpack.c.l.b16 %v153
  %v702 = vunpack.c.h.b16 %v153
  %v703 = vunpack.c.l.b16 %v154
  %v704 = vunpack.c.h.b16 %v154
  %v705 = vunpack.c.l.b16 %v155
  %v706 = vunpack.c.h.b16 %v155
  %v707 = vunpack.c.l.b16 %v156
  %v708 = vunpack.c.l.b16 %v157
  %v709 = vunpack.c.h.b16 %v157
  %v710 = vunpack.c.l.b16 %v158
  %v711 = vunpack.c.h.b16 %v158
  %v712 = vunpack.c.l.b16 %v159
  %v713 = vunpack.c.h.b16 %v159
  %v714 = vunpack.c.l.b16 %v160
  %v715 = vunpack.c.h.b16 %v160
  %v716 = vunpack.c.l.b16 %v161
  %v717 = vunpack.c.l.b16 %v162
  %v718 = vunpack.c.h.b16 %v162
  %v719 = vunpack.c.l.b16 %v163
  %v720 = vunpack.c.h.b16 %v163
  %v721 = vunpack.c.l.b16 %v164
  %v722 = vunpack.c.h.b16 %v164
  %v723 = vunpack.c.l.b16 %v165
  %v724 = vunpack.c.h.b16 %v165
  %v725 = vunpack.c.l.b16 %v166
  %v726 = vunpack.c.l.b16 %v167
  %v727 = vunpack.c.h.b16 %v167
  %v728 = vunpack.c.l.b16 %v168
  %v729 = vunpack.c.h.b16 %v168
  %v730 = vunpack.c.l.b16 %v169
  %v731 = vunpack.c.h.b16 %v169
  %v732 = vunpack.c.l.b16 %v170
  %v733 = vunpack.c.h.b16 %v170
  %v734 = vunpack.c.l.b16 %v171
  %v735 = vunpack.c.l.b16 %v172
  %v736 = vunpack.c.h.b16 %v172
  %v737 = vunpack.c.l.b16 %v173
  %v738 = vunpack.c.h.b16 %v173
  %v739 = vunpack.c.l.b16 %v174
  %v740 = vunpack.c.h.b16 %v174
  %v741 = vunpack.c.l.b16 %v175
  %v742 = vunpack.c.h.b16 %v175
  %v743 = vunpack.c.l.b16 %v176
  %v744 = vunpack.c.l.b16 %v177
  %v745 = vunpack.c.h.b16 %v177
  %v746 = vunpack.c.l.b16 %v178
  %v747 = vunpack.c.h.b16 %v178
  %v748 = vunpack.c.l.b16 %v179
  %v749 = vunpack.c.h.b16 %v179
  %v750 = vunpack.c.l.b16 %v180
  %v751 = vunpack.c.h.b16 %v180
  %v752 = vunpack.c.l.b16 %v181
  %v753 = vunpack.c.l.b16 %v182
  %v754 = vunpack.c.h.b16 %v182
  %v755 = vunpack.c.l.b16 %v183
  %v756 = vunpack.c.h.b16 %v183
  %v757 = vunpack.c.l.b16 %v184
  %v758 = vunpack.c.h.b16 %v184
  %v759 = vunpack.c.l.b16 %v185
  %v760 = vunpack.c.h.b16 %v185
  %v761 = vunpack.c.l.b16 %v186
  %v762 = vunpack.c.l.b16 %v187
  %v763 = vunpack.c.h.b16 %v187
  %v764 = vunpack.c.l.b16 %v188
  %v765 = vunpack.c.h.b16 %v188
  %v766 = vunpack.c.l.b16 %v189
  %v767 = vunpack.c.h.b16 %v189
  %v768 = vunpack.c.l.b16 %v190
  %v769 = vunpack.c.h.b16 %v190
  %v770 = vunpack.c.l.b16 %v191
  %v771 = vunpack.c.l.b16 %v192
  %v772 = vunpack.c.h.b16 %v192
  %v773 = vunpack.c.l.b16 %v193
  %v774 = vunpack.c.h.b16 %v193
  %v775 = vunpack.c.l.b16 %v194
  %v776 = vunpack.c.h.b16 %v194
  %v777 = vunpack.c.l.b16 %v195
  %v778 = vunpack.c.h.b16 %v195
  %v779 = vunpack.c.l.b16 %v196
  %v780 = vunpack.c.l.b16 %v197
  %v781 = vunpack.c.h.b16 %v197
  %v782 = vunpack.c.l.b16 %v198
  %v783 = vunpack.c.h.b16 %v198
  %v784 = vunpack.c.l.b16 %v199
  %v785 = vunpack.c.h.b16 %v199
  %v786 = vunpack.c.l.b16 %v200
  %v787 = vunpack.c.h.b16 %v200
  %v788 = vunpack.c.l.b16 %v201
  %v789 = vunpack.c.l.b16 %v202
  %v790 = vunpack.c.h.b16 %v202
  %v791 = vunpack.c.l.b16 %v203
  %v792 = vunpack.c.h.b16 %v203
  %v793 = vunpack.c.l.b16 %v204
  %v794 = vunpack.c.h.b16 %v204
  %v795 = vunpack.c.l.b16 %v205
  %v796 = vunpack.c.h.b16 %v205
  %v797 = vunpack.c.l.b16 %v206
  %v798 = vunpack.c.l.b16 %v207
  %v799 = vunpack.c.h.b16 %v207
  %v800 = vunpack.c.l.b16 %v208
  %v801 = vunpack.c.h.b16 %v208
  %v802 = vunpack.c.l.b16 %v209
  %v803 = vunpack.c.h.b16 %v209
  %v804 = vunpack.c.l.b16 %v210
  %v805 = vunpack.c.h.b16 %v210
  %v806 = vunpack.c.l.b16 %v211
  %v807 = vunpack.c.l.b16 %v212
  %v808 = vunpack.c.h.b16 %v212
  %v809 = vunpack.c.l.b16 %v213
  %v810 = vunpack.c.h.b16 %v213
  %v811 = vunpack.c.l.b16 %v214
  %v812 = vunpack.c.h.b16 %v214
  %v813 = vunpack.c.l.b16 %v215
  %v814 = vunpack.c.h.b16 %v215
  %v815 = vunpack.c.l.b16 %v216
  %v816 = vunpack.c.l.b16 %v217
  %v817 = vunpack.c.h.b16 %v217
  %v818 = vunpack.c.l.b16 %v218
  %v819 = vunpack.c.h.b16 %v218
  %v820 = vunpack.c.l.b16 %v219
  %v821 = vunpack.c.h.b16 %v219
  %v822 = vunpack.c.l.b16 %v220
  %v823 = vunpack.c.h.b16 %v220
  %v824 = vunpack.c.l.b16 %v221
  %v825 = vunpack.c.l.b16 %v222
  %v826 = vunpack.c.h.b16 %v222
  %v827 = vunpack.c.l.b16 %v223
  %v828 = vunpack.c.h.b16 %v223
  %v829 = vunpack.c.l.b16 %v224
  %v830 = vunpack.c.h.b16 %v224
  %v831 = vunpack.c.l.b16 %v225
  %v832 = vunpack.c.h.b16 %v225
  %v833 = vunpack.c.l.b16 %v226
  %v834 = vunpack.c.l.b16 %v227
  %v835 = vunpack.c.h.b16 %v227
  %v836 = vunpack.c.l.b16 %v228
  %v837 = vunpack.c.h.b16 %v228
  %v838 = vunpack.c.l.b16 %v229
  %v839 = vunpack.c.h.b16 %v229
  %v840 = vunpack.c.l.b16 %v230
  %v841 = vunpack.c.h.b16 %v230
  %v842 = vunpack.c.l.b16 %v231
  %v843 = vunpack.c.l.b16 %v232
  %v844 = vunpack.c.h.b16 %v232
  %v845 = vunpack.c.l.b16 %v233
  %v846 = vunpack.c.h.b16 %v233
  %v847 = vunpack.c.l.b16 %v234
  %v848 = vunpack.c.h.b16 %v234
  %v849 = vunpack.c.l.b16 %v235
  %v850 = vunpack.c.h.b16 %v235
  %v851 = vunpack.c.l.b16 %v236
  %v852 = vunpack.c.l.b16 %v237
  %v853 = vunpack.c.h.b16 %v237
  %v854 = vunpack.c.l.b16 %v238
  %v855 = vunpack.c.h.b16 %v238
  %v856 = vunpack.c.l.b16 %v239
  %v857 = vunpack.c.h.b16 %v239
  %v858 = vunpack.c.l.b16 %v240
  %v859 = vunpack.c.h.b16 %v240
  %v860 = vunpack.c.l.b16 %v241
  %v861 = vunpack.c.l.b16 %v242
  %v862 = vunpack.c.h.b16 %v242
  %v863 = vunpack.c.l.b16 %v243
  %v864 = vunpack.c.h.b16 %v243
  %v865 = vunpack.c.l.b16 %v244
  %v866 = vunpack.c.h.b16 %v244
  %v867 = vunpack.c.l.b16 %v245
  %v868 = vunpack.c.h.b16 %v245
  %v869 = vunpack.c.l.b16 %v246
  %v870 = vunpack.c.l.b16 %v247
  %v871 = vunpack.c.h.b16 %v247
  %v872 = vunpack.c.l.b16 %v248
  %v873 = vunpack.c.h.b16 %v248
  %v874 = vunpack.c.l.b16 %v249
  %v875 = vunpack.c.h.b16 %v249
  %v876 = vunpack.c.l.b16 %v250
  %v877 = vunpack.c.h.b16 %v250
  %v878 = vunpack.c.l.b16 %v251
  %v879 = vunpack.c.l.b16 %v252
  %v880 = vunpack.c.h.b16 %v252
  %v881 = vunpack.c.l.b16 %v253
  %v882 = vunpack.c.h.b16 %v253
  %v883 = vunpack.c.l.b16 %v254
  %v884 = vunpack.c.h.b16 %v254
  %v885 = vunpack.c.l.b16 %v255
  %v886 = vunpack.c.h.b16 %v255
  %v887 = vunpack.c.l.b16 %v256
  %v888 = vunpack.c.l.b16 %v257
  %v889 = vunpack.c.h.b16 %v257
  %v890 = vunpack.c.l.b16 %v258
  %v891 = vunpack.c.h.b16 %v258
  %v892 = vunpack.c.l.b16 %v259
  %v893 = vunpack.c.h.b16 %v259
  %v894 = vunpack.c.l.b16 %v260
  %v895 = vunpack.c.h.b16 %v260
  %v896 = vunpack.c.l.b16 %v261
  %v897 = vunpack.c.l.b16 %v262
  %v898 = vunpack.c.h.b16 %v262
  %v899 = vunpack.c.l.b16 %v263
  %v900 = vunpack.c.h.b16 %v263
  %v901 = vunpack.c.l.b16 %v264
  %v902 = vunpack.c.h.b16 %v264
  %v903 = vunpack.c.l.b16 %v265
  %v904 = vunpack.c.h.b16 %v265
  %v905 = vunpack.c.l.b16 %v266
  %v906 = vunpack.c.l.b16 %v267
  %v907 = vunpack.c.h.b16 %v267
  %v908 = vunpack.c.l.b16 %v268
  %v909 = vunpack.c.h.b16 %v268
  %v910 = vunpack.c.l.b16 %v269
  %v911 = vunpack.c.h.b16 %v269
  %v912 = vunpack.c.l.b16 %v270
  %v913 = vunpack.c.h.b16 %v270
  %v914 = vunpack.c.l.b16 %v271
  %v915 = vunpack.c.l.b16 %v272
  %v916 = vunpack.c.h.b16 %v272
  %v917 = vunpack.c.l.b16 %v273
  %v918 = vunpack.c.h.b16 %v273
  %v919 = vunpack.c.l.b16 %v274
  %v920 = vunpack.c.h.b16 %v274
  %v921 = vunpack.c.l.b16 %v275
  %v922 = vunpack.c.h.b16 %v275
  %v923 = vunpack.c.l.b16 %v276
  %v924 = vunpack.c.l.b16 %v277
  %v925 = vunpack.c.h.b16 %v277
  %v926 = vunpack.c.l.b16 %v278
  %v927 = vunpack.c.h.b16 %v278
  %v928 = vunpack.c.l.b16 %v279
  %v929 = vunpack.c.h.b16 %v279
  %v930 = vunpack.c.l.b16 %v280
  %v931 = vunpack.c.h.b16 %v280
  %v932 = vunpack.c.l.b16 %v281
  %v933 = vunpack.c.l.b16 %v282
  %v934 = vunpack.c.h.b16 %v282
  %v935 = vunpack.c.l.b16 %v283
  %v936 = vunpack.c.h.b16 %v283
  %v937 = vunpack.c.l.b16 %v284
  %v938 = vunpack.c.h.b16 %v284
  %v939 = vunpack.c.l.b16 %v285
  %v940 = vunpack.c.h.b16 %v285
  %v941 = vunpack.c.l.b16 %v286
  %v942 = vunpack.c.l.b16 %v287
  %v943 = vunpack.c.h.b16 %v287
  %v944 = vunpack.c.l.b16 %v288
  %v945 = vunpack.c.h.b16 %v288
  %v946 = vunpack.c.l.b16 %v289
  %v947 = vunpack.c.h.b16 %v289
  %v948 = vunpack.c.l.b16 %v290
  %v949 = vunpack.c.h.b16 %v290
  %v950 = vunpack.c.l.b16 %v291
  %v951 = vunpack.c.l.b16 %v292
  %v952 = vunpack.c.h.b16 %v292
  %v953 = vunpack.c.l.b16 %v293
  %v954 = vunpack.c.h.b16 %v293
  %v955 = vunpack.c.l.b16 %v294
  %v956 = vunpack.c.h.b16 %v294
  %v957 = vunpack.c.l.b16 %v295
  %v958 = vunpack.c.h.b16 %v295
  %v959 = vunpack.c.l.b16 %v296
  %v960 = vpack.c.b16 %v591, %v582
  %v961 = vpack.c.b16 %v592, %v583
  %v962 = vpack.c.b16 %v593, %v584
  %v963 = vpack.c.b16 %v594, %v585
  %v964 = vpack.c.b16 %v595, %v586
  %v965 = vpack.c.b16 %v596, %v587
  %v966 = vpack.c.b16 %v597, %v588
  %v967 = vpack.c.b16 %v598, %v589
  %v968 = vpack.c.b16 %v599, %v590
  %v969 = vpack.c.b16 %v609, %v600
  %v970 = vpack.c.b16 %v610, %v601
  %v971 = vpack.c.b16 %v611, %v602
  %v972 = vpack.c.b16 %v612, %v603
  %v973 = vpack.c.b16 %v613, %v604
  %v974 = vpack.c.b16 %v614, %v605
  %v975 = vpack.c.b16 %v615, %v606
  %v976 = vpack.c.b16 %v616, %v607
  %v977 = vpack.c.b16 %v617, %v608
  %v978 = vpack.c.b16 %v627, %v618
  %v979 = vpack.c.b16 %v628, %v619
  %v980 = vpack.c.b16 %v629, %v620
  %v981 = vpack.c.b16 %v630, %v621
  %v982 = vpack.c.b16 %v631, %v622
  %v983 = vpack.c.b16 %v632, %v623
  %v984 = vpack.c.b16 %v633, %v624
  %v985 = vpack.c.b16 %v634, %v625
  %v986 = vpack.c.b16 %v635, %v626
  %v987 = vpack.c.b16 %v645, %v636
  %v988 = vpack.c.b16 %v646, %v637
  %v989 = vpack.c.b16 %v647, %v638
  %v990 = vpack.c.b16 %v648, %v639
  %v991 = vpack.c.b16 %v649, %v640
  %v992 = vpack.c.b16 %v650, %v641
  %v993 = vpack.c.b16 %v651, %v642
  %v994 = vpack.c.b16 %v652, %v643
  %v995 = vpack.c.b16 %v653, %v644
  %v996 = vpack.c.b16 %v663, %v654
  %v997 = vpack.c.b16 %v664, %v655
  %v998 = vpack.c.b16 %v665, %v656
  %v999 = vpack.c.b16 %v666, %v657
  %v1000 = vpack.c.b16 %v667, %v658
  %v1001 = vpack.c.b16 %v668, %v659
  %v1002 = vpack.c.b16 %v669, %v660
  %v1003 = vpack.c.b16 %v670, %v661
  %v1004 = vpack.c.b16 %v671, %v662
  %v1005 = vpack.c.b16 %v681, %v672
  %v1006 = vpack.c.b16 %v682, %v673
  %v1007 = vpack.c.b16 %v683, %v674
  %v1008 = vpack.c.b16 %v684, %v675
  %v1009 = vpack.c.b16 %v685, %v676
  %v1010 = vpack.c.b16 %v686, %v677
  %v1011 = vpack.c.b16 %v687, %v678
  %v1012 = vpack.c.b16 %v688, %v679
  %v1013 = vpack.c.b16 %v689, %v680
  %v1014 = vpack.c.b16 %v699, %v690
  %v1015 = vpack.c.b16 %v700, %v691
  %v1016 = vpack.c.b16 %v701, %v692
  %v1017 = vpack.c.b16 %v702, %v693
  %v1018 = vpack.c.b16 %v703, %v694
  %v1019 = vpack.c.b16 %v704, %v695
  %v1020 = vpack.c.b16 %v705, %v696
  %v1021 = vpack.c.b16 %v706, %v697
  %v1022 = vpack.c.b16 %v707, %v698
  %v1023 = vpack.c.b16 %v717, %v708
  %v1024 = vpack.c.b16 %v718, %v709
  %v1025 = vpack.c.b16 %v719, %v710
  %v1026 = vpack.c.b16 %v720, %v711
  %v1027 = vpack.c.b16 %v721, %v712
  %v1028 = vpack.c.b16 %v722, %v713
  %v1029 = vpack.c.b16 %v723, %v714
  %v1030 = vpack.c.b16 %v724, %v715
  %v1031 = vpack.c.b16 %v725, %v716
  %v1032 = vpack.c.b16 %v735, %v726
  %v1033 = vpack.c.b16 %v736, %v727
  %v1034 = vpack.c.b16 %v737, %v728
  %v1035 = vpack.c.b16 %v738, %v729
  %v1036 = vpack.c.b16 %v739, %v730
  %v1037 = vpack.c.b16 %v740, %v731
  %v1038 = vpack.c.b16 %v741, %v732
  %v1039 = vpack.c.b16 %v742, %v733
  %v1040 = vpack.c.b16 %v743, %v734
  %v1041 = vpack.c.b16 %v753, %v744
  %v1042 = vpack.c.b16 %v754, %v745
  %v1043 = vpack.c.b16 %v755, %v746
  %v1044 = vpack.c.b16 %v756, %v747
  %v1045 = vpack.c.b16 %v757, %v748
  %v1046 = vpack.c.b16 %v758, %v749
  %v1047 = vpack.c.b16 %v759, %v750
  %v1048 = vpack.c.b16 %v760, %v751
  %v1049 = vpack.c.b16 %v761, %v752
  %v1050 = vpack.c.b16 %v771, %v762
  %v1051 = vpack.c.b16 %v772, %v763
  %v1052 = vpack.c.b16 %v773, %v764
  %v1053 = vpack.c.b16 %v774, %v765
  %v1054 = vpack.c.b16 %v775, %v766
  %v1055 = vpack.c.b16 %v776, %v767
  %v1056 = vpack.c.b16 %v777, %v768
  %v1057 = vpack.c.b16 %v778, %v769
  %v1058 = vpack.c.b16 %v779, %v770
  %v1059 = vpack.c.b16 %v789, %v780
  %v1060 = vpack.c.b16 %v790, %v781
  %v1061 = vpack.c.b16 %v791, %v782
  %v1062 = vpack.c.b16 %v792, %v783
  %v1063 = vpack.c.b16 %v793, %v784
  %v1064 = vpack.c.b16 %v794, %v785
  %v1065 = vpack.c.b16 %v795, %v786
  %v1066 = vpack.c.b16 %v796, %v787
  %v1067 = vpack.c.b16 %v797, %v788
  %v1068 = vpack.c.b16 %v807, %v798
  %v1069 = vpack.c.b16 %v808, %v799
  %v1070 = vpack.c.b16 %v809, %v800
  %v1071 = vpack.c.b16 %v810, %v801
  %v1072 = vpack.c.b16 %v811, %v802
  %v1073 = vpack.c.b16 %v812, %v803
  %v1074 = vpack.c.b16 %v813, %v804
  %v1075 = vpack.c.b16 %v814, %v805
  %v1076 = vpack.c.b16 %v815, %v806
  %v1077 = vpack.c.b16 %v825, %v816
  %v1078 = vpack.c.b16 %v826, %v817
  %v1079 = vpack.c.b16 %v827, %v818
  %v1080 = vpack.c.b16 %v828, %v819
  %v1081 = vpack.c.b16 %v829, %v820
  %v1082 = vpack.c.b16 %v830, %v821
  %v1083 = vpack.c.b16 %v831, %v822
  %v1084 = vpack.c.b16 %v832, %v823
  %v1085 = vpack.c.b16 %v833, %v824
  %v1086 = vpack.c.b16 %v843, %v834
  %v1087 = vpack.c.b16 %v844, %v835
  %v1088 = vpack.c.b16 %v845, %v836
  %v1089 = vpack.c.b16 %v846, %v837
  %v1090 = vpack.c.b16 %v847, %v838
  %v1091 = vpack.c.b16 %v848, %v839
  %v1092 = vpack.c.b16 %v849, %v840
  %v1093 = vpack.c.b16 %v850, %v841
  %v1094 = vpack.c.b16 %v851, %v842
  %v1095 = vpack.c.b16 %v861, %v852
  %v1096 = vpack.c.b16 %v862, %v853
  %v1097 = vpack.c.b16 %v863, %v854
  %v1098 = vpack.c.b16 %v864, %v855
  %v1099 = vpack.c.b16 %v865, %v856
  %v1100 = vpack.c.b16 %v866, %v857
  %v1101 = vpack.c.b16 %v867, %v858
  %v1102 = vpack.c.b16 %v868, %v859
  %v1103 = vpack.c.b16 %v869, %v860
  %v1104 = vpack.c.b16 %v879, %v870
  %v1105 = vpack.c.b16 %v880, %v871
  %v1106 = vpack.c.b16 %v881, %v872
  %v1107 = vpack.c.b16 %v882, %v873
  %v1108 = vpack.c.b16 %v883, %v874
  %v1109 = vpack.c.b16 %v884, %v875
  %v1110 = vpack.c.b16 %v885, %v876
  %v1111 = vpack.c.b16 %v886, %v877
  %v1112 = vpack.c.b16 %v887, %v878
  %v1113 = vpack.c.b16 %v897, %v888
  %v1114 = vpack.c.b16 %v898, %v889
  %v1115 = vpack.c.b16 %v899, %v890
  %v1116 = vpack.c.b16 %v900, %v891
  %v1117 = vpack.c.b16 %v901, %v892
  %v1118 = vpack.c.b16 %v902, %v893
  %v1119 = vpack.c.b16 %v903, %v894
  %v1120 = vpack.c.b16 %v904, %v895
  %v1121 = vpack.c.b16 %v905, %v896
  %v1122 = vpack.c.b16 %v915, %v906
  %v1123 = vpack.c.b16 %v916, %v907
  %v1124 = vpack.c.b16 %v917, %v908
  %v1125 = vpack.c.b16 %v918, %v909
  %v1126 = vpack.c.b16 %v919, %v910
  %v1127 = vpack.c.b16 %v920, %v911
  %v1128 = vpack.c.b16 %v921, %v912
  %v1129 = vpack.c.b16 %v922, %v913
  %v1130 = vpack.c.b16 %v923, %v914
  %v1131 = vpack.c.b16 %v933, %v924
  %v1132 = vpack.c.b16 %v934, %v925
  %v1133 = vpack.c.b16 %v935, %v926
  %v1134 = vpack.c.b16 %v936, %v927
  %v1135 = vpack.c.b16 %v937, %v928
  %v1136 = vpack.c.b16 %v938, %v929
  %v1137 = vpack.c.b16 %v939, %v930
  %v1138 = vpack.c.b16 %v940, %v931
  %v1139 = vpack.c.b16 %v941, %v932
  %v1140 = vpack.c.b16 %v951, %v942
  %v1141 = vpack.c.b16 %v952, %v943
  %v1142 = vpack.c.b16 %v953, %v944
  %v1143 = vpack.c.b16 %v954, %v945
  %v1144 = vpack.c.b16 %v955, %v946
  %v1145 = vpack.c.b16 %v956, %v947
  %v1146 = vpack.c.b16 %v957, %v948
  %v1147 = vpack.c.b16 %v958, %v949
  %v1148 = vpack.c.b16 %v959, %v950
  %vm1329 = vcmask 596992
  %v1331 = vsel %vm1329, %v369, 0
  %vm1333 = vcmask 1043456
  %vm1334 = vcmask 1044480
  %v1335 = vsel %vm1333, 4294967295, 65535
  %v1336 = vsel %vm1334, %v1335, 0
  %v1338 = vand.u32 %v1140, %v1336
  %v1341 = vand.u32 %v1141, %v1336
  %v1344 = vand.u32 %v1142, %v1336
  %v1347 = vand.u32 %v1143, %v1336
  %v1350 = vand.u32 %v1144, %v1336
  %v1353 = vand.u32 %v1145, %v1336
  %v1356 = vand.u32 %v1146, %v1336
  %v1359 = vand.u32 %v1147, %v1336
  %v1362 = vand.u32 %v1148, %v1336
  %1364 = vmatprep.subr.bf16.mxu0 %v961
  %1365 = vmatpush1.bf16.msra.mxu0 %v960
  %1366 = vmatprep.subr.bf16.mxu0 %v970
  %1367 = vmatpush1.bf16.msra.mxu0 %v969
  %1368 = vmatprep.subr.bf16.mxu0 %v979
  %1369 = vmatpush1.bf16.msra.mxu0 %v978
  %1370 = vmatprep.subr.bf16.mxu0 %v988
  %1371 = vmatpush1.bf16.msra.mxu0 %v987
  %1372 = vmatprep.subr.bf16.mxu0 %v997
  %1373 = vmatpush1.bf16.msra.mxu0 %v996
  %1374 = vmatprep.subr.bf16.mxu0 %v1006
  %1375 = vmatpush1.bf16.msra.mxu0 %v1005
  %1376 = vmatprep.subr.bf16.mxu0 %v1015
  %1377 = vmatpush1.bf16.msra.mxu0 %v1014
  %1378 = vmatprep.subr.bf16.mxu0 %v1024
  %1379 = vmatpush1.bf16.msra.mxu0 %v1023
  %1380 = vmatprep.subr.bf16.mxu0 %v1033
  %1381 = vmatpush1.bf16.msra.mxu0 %v1032
  %1382 = vmatprep.subr.bf16.mxu0 %v1042
  %1383 = vmatpush1.bf16.msra.mxu0 %v1041
  %1384 = vmatprep.subr.bf16.mxu0 %v1051
  %1385 = vmatpush1.bf16.msra.mxu0 %v1050
  %1386 = vmatprep.subr.bf16.mxu0 %v1060
  %1387 = vmatpush1.bf16.msra.mxu0 %v1059
  %1388 = vmatprep.subr.bf16.mxu0 %v1069
  %1389 = vmatpush1.bf16.msra.mxu0 %v1068
  %1390 = vmatprep.subr.bf16.mxu0 %v1078
  %1391 = vmatpush1.bf16.msra.mxu0 %v1077
  %1392 = vmatprep.subr.bf16.mxu0 %v1087
  %1393 = vmatpush1.bf16.msra.mxu0 %v1086
  %1394 = vmatprep.subr.bf16.mxu0 %v1096
  %1395 = vmatpush1.bf16.msra.mxu0 %v1095
  %1396 = vmatprep.mubr.bf16.mxu0 %v368
  %1397 = vmatmul.mubr.bf16.gmra.mrb[0].mxu0 %v361
  %v1398 = vpop.f32.mrb[0].mxu0
  %v1399 = vadd.f32 %v304, %v1398
  %v1400 = vpop.f32.mrb[0].mxu0
  %v1401 = vadd.f32 %v308, %v1400
  %v1402 = vpop.f32.mrb[0].mxu0
  %v1403 = vpop.f32.mrb[0].mxu0
  %1404 = vdwg.mxu0
  %1405 = vmatprep.subr.bf16.mxu0 %v1105
  %1406 = vmatpush1.bf16.msra.mxu0 %v1104
  %1407 = vmatprep.subr.bf16.mxu0 %v1114
  %1408 = vmatpush1.bf16.msra.mxu0 %v1113
  %1409 = vmatprep.subr.bf16.mxu0 %v1123
  %1410 = vmatpush1.bf16.msra.mxu0 %v1122
  %1411 = vmatprep.subr.bf16.mxu0 %v1132
  %1412 = vmatpush1.bf16.msra.mxu0 %v1131
  %1413 = vmatprep.subr.bf16.mxu0 %v1341
  %1414 = vmatpush1.bf16.msra.mxu0 %v1338
  %1415 = vmatprep.subr.bf16.mxu0 0
  %1416 = vmatpush1.bf16.msra.mxu0 0
  %1417 = vmatprep.subr.bf16.mxu0 0
  %1418 = vmatpush1.bf16.msra.mxu0 0
  %1419 = vmatprep.subr.bf16.mxu0 0
  %1420 = vmatpush1.bf16.msra.mxu0 0
  %1421 = vmatprep.subr.bf16.mxu0 0
  %1422 = vmatpush1.bf16.msra.mxu0 0
  %1423 = vmatprep.subr.bf16.mxu0 0
  %1424 = vmatpush1.bf16.msra.mxu0 0
  %1425 = vmatprep.subr.bf16.mxu0 0
  %1426 = vmatpush1.bf16.msra.mxu0 0
  %1427 = vmatprep.subr.bf16.mxu0 0
  %1428 = vmatpush1.bf16.msra.mxu0 0
  %1429 = vmatprep.subr.bf16.mxu0 0
  %1430 = vmatpush1.bf16.msra.mxu0 0
  %1431 = vmatprep.subr.bf16.mxu0 0
  %1432 = vmatpush1.bf16.msra.mxu0 0
  %1433 = vmatprep.subr.bf16.mxu0 0
  %1434 = vmatpush1.bf16.msra.mxu0 0
  %1435 = vmatprep.subr.bf16.mxu0 0
  %1436 = vmatpush1.bf16.msra.mxu0 0
  %1437 = vmatprep.mubr.bf16.mxu0 0
  %1438 = vmatmul.mubr.bf16.gmra.mrb[0].mxu0 %v1331
  %v1439 = vpop.f32.mrb[0].mxu0
  %v1440 = vadd.f32 %v1399, %v1439
  %v1441 = vpop.f32.mrb[0].mxu0
  %v1442 = vadd.f32 %v1401, %v1441
  %v1443 = vpop.f32.mrb[0].mxu0
  %v1444 = vpop.f32.mrb[0].mxu0
  %1445 = vdwg.mxu0
  %1446 = vmatprep.subr.bf16.mxu0 %v963
  %1447 = vmatpush1.bf16.msra.mxu0 %v962
  %1448 = vmatprep.subr.bf16.mxu0 %v972
  %1449 = vmatpush1.bf16.msra.mxu0 %v971
  %1450 = vmatprep.subr.bf16.mxu0 %v981
  %1451 = vmatpush1.bf16.msra.mxu0 %v980
  %1452 = vmatprep.subr.bf16.mxu0 %v990
  %1453 = vmatpush1.bf16.msra.mxu0 %v989
  %1454 = vmatprep.subr.bf16.mxu0 %v999
  %1455 = vmatpush1.bf16.msra.mxu0 %v998
  %1456 = vmatprep.subr.bf16.mxu0 %v1008
  %1457 = vmatpush1.bf16.msra.mxu0 %v1007
  %1458 = vmatprep.subr.bf16.mxu0 %v1017
  %1459 = vmatpush1.bf16.msra.mxu0 %v1016
  %1460 = vmatprep.subr.bf16.mxu0 %v1026
  %1461 = vmatpush1.bf16.msra.mxu0 %v1025
  %1462 = vmatprep.subr.bf16.mxu0 %v1035
  %1463 = vmatpush1.bf16.msra.mxu0 %v1034
  %1464 = vmatprep.subr.bf16.mxu0 %v1044
  %1465 = vmatpush1.bf16.msra.mxu0 %v1043
  %1466 = vmatprep.subr.bf16.mxu0 %v1053
  %1467 = vmatpush1.bf16.msra.mxu0 %v1052
  %1468 = vmatprep.subr.bf16.mxu0 %v1062
  %1469 = vmatpush1.bf16.msra.mxu0 %v1061
  %1470 = vmatprep.subr.bf16.mxu0 %v1071
  %1471 = vmatpush1.bf16.msra.mxu0 %v1070
  %1472 = vmatprep.subr.bf16.mxu0 %v1080
  %1473 = vmatpush1.bf16.msra.mxu0 %v1079
  %1474 = vmatprep.subr.bf16.mxu0 %v1089
  %1475 = vmatpush1.bf16.msra.mxu0 %v1088
  %1476 = vmatprep.subr.bf16.mxu0 %v1098
  %1477 = vmatpush1.bf16.msra.mxu0 %v1097
  %1478 = vmatprep.mubr.bf16.mxu0 %v368
  %1479 = vmatmul.mubr.bf16.gmra.mrb[0].mxu0 %v361
  %v1480 = vpop.f32.mrb[0].mxu0
  %v1481 = vadd.f32 %v312, %v1480
  %v1482 = vpop.f32.mrb[0].mxu0
  %v1483 = vadd.f32 %v316, %v1482
  %v1484 = vpop.f32.mrb[0].mxu0
  %v1485 = vpop.f32.mrb[0].mxu0
  %1486 = vdwg.mxu0
  %1487 = vmatprep.subr.bf16.mxu0 %v1107
  %1488 = vmatpush1.bf16.msra.mxu0 %v1106
  %1489 = vmatprep.subr.bf16.mxu0 %v1116
  %1490 = vmatpush1.bf16.msra.mxu0 %v1115
  %1491 = vmatprep.subr.bf16.mxu0 %v1125
  %1492 = vmatpush1.bf16.msra.mxu0 %v1124
  %1493 = vmatprep.subr.bf16.mxu0 %v1134
  %1494 = vmatpush1.bf16.msra.mxu0 %v1133
  %1495 = vmatprep.subr.bf16.mxu0 %v1347
  %1496 = vmatpush1.bf16.msra.mxu0 %v1344
  %1497 = vmatprep.subr.bf16.mxu0 0
  %1498 = vmatpush1.bf16.msra.mxu0 0
  %1499 = vmatprep.subr.bf16.mxu0 0
  %1500 = vmatpush1.bf16.msra.mxu0 0
  %1501 = vmatprep.subr.bf16.mxu0 0
  %1502 = vmatpush1.bf16.msra.mxu0 0
  %1503 = vmatprep.subr.bf16.mxu0 0
  %1504 = vmatpush1.bf16.msra.mxu0 0
  %1505 = vmatprep.subr.bf16.mxu0 0
  %1506 = vmatpush1.bf16.msra.mxu0 0
  %1507 = vmatprep.subr.bf16.mxu0 0
  %1508 = vmatpush1.bf16.msra.mxu0 0
  %1509 = vmatprep.subr.bf16.mxu0 0
  %1510 = vmatpush1.bf16.msra.mxu0 0
  %1511 = vmatprep.subr.bf16.mxu0 0
  %1512 = vmatpush1.bf16.msra.mxu0 0
  %1513 = vmatprep.subr.bf16.mxu0 0
  %1514 = vmatpush1.bf16.msra.mxu0 0
  %1515 = vmatprep.subr.bf16.mxu0 0
  %1516 = vmatpush1.bf16.msra.mxu0 0
  %1517 = vmatprep.subr.bf16.mxu0 0
  %1518 = vmatpush1.bf16.msra.mxu0 0
  %1519 = vmatprep.mubr.bf16.mxu0 0
  %1520 = vmatmul.mubr.bf16.gmra.mrb[0].mxu0 %v1331
  %v1521 = vpop.f32.mrb[0].mxu0
  %v1522 = vadd.f32 %v1481, %v1521
  %v1523 = vpop.f32.mrb[0].mxu0
  %v1524 = vadd.f32 %v1483, %v1523
  %v1525 = vpop.f32.mrb[0].mxu0
  %v1526 = vpop.f32.mrb[0].mxu0
  %1527 = vdwg.mxu0
  %1528 = vmatprep.subr.bf16.mxu0 %v965
  %1529 = vmatpush1.bf16.msra.mxu0 %v964
  %1530 = vmatprep.subr.bf16.mxu0 %v974
  %1531 = vmatpush1.bf16.msra.mxu0 %v973
  %1532 = vmatprep.subr.bf16.mxu0 %v983
  %1533 = vmatpush1.bf16.msra.mxu0 %v982
  %1534 = vmatprep.subr.bf16.mxu0 %v992
  %1535 = vmatpush1.bf16.msra.mxu0 %v991
  %1536 = vmatprep.subr.bf16.mxu0 %v1001
  %1537 = vmatpush1.bf16.msra.mxu0 %v1000
  %1538 = vmatprep.subr.bf16.mxu0 %v1010
  %1539 = vmatpush1.bf16.msra.mxu0 %v1009
  %1540 = vmatprep.subr.bf16.mxu0 %v1019
  %1541 = vmatpush1.bf16.msra.mxu0 %v1018
  %1542 = vmatprep.subr.bf16.mxu0 %v1028
  %1543 = vmatpush1.bf16.msra.mxu0 %v1027
  %1544 = vmatprep.subr.bf16.mxu0 %v1037
  %1545 = vmatpush1.bf16.msra.mxu0 %v1036
  %1546 = vmatprep.subr.bf16.mxu0 %v1046
  %1547 = vmatpush1.bf16.msra.mxu0 %v1045
  %1548 = vmatprep.subr.bf16.mxu0 %v1055
  %1549 = vmatpush1.bf16.msra.mxu0 %v1054
  %1550 = vmatprep.subr.bf16.mxu0 %v1064
  %1551 = vmatpush1.bf16.msra.mxu0 %v1063
  %1552 = vmatprep.subr.bf16.mxu0 %v1073
  %1553 = vmatpush1.bf16.msra.mxu0 %v1072
  %1554 = vmatprep.subr.bf16.mxu0 %v1082
  %1555 = vmatpush1.bf16.msra.mxu0 %v1081
  %1556 = vmatprep.subr.bf16.mxu0 %v1091
  %1557 = vmatpush1.bf16.msra.mxu0 %v1090
  %1558 = vmatprep.subr.bf16.mxu0 %v1100
  %1559 = vmatpush1.bf16.msra.mxu0 %v1099
  %1560 = vmatprep.mubr.bf16.mxu0 %v368
  %1561 = vmatmul.mubr.bf16.gmra.mrb[0].mxu0 %v361
  %v1562 = vpop.f32.mrb[0].mxu0
  %v1563 = vadd.f32 %v320, %v1562
  %v1564 = vpop.f32.mrb[0].mxu0
  %v1565 = vadd.f32 %v324, %v1564
  %v1566 = vpop.f32.mrb[0].mxu0
  %v1567 = vpop.f32.mrb[0].mxu0
  %1568 = vdwg.mxu0
  %1569 = vmatprep.subr.bf16.mxu0 %v1109
  %1570 = vmatpush1.bf16.msra.mxu0 %v1108
  %1571 = vmatprep.subr.bf16.mxu0 %v1118
  %1572 = vmatpush1.bf16.msra.mxu0 %v1117
  %1573 = vmatprep.subr.bf16.mxu0 %v1127
  %1574 = vmatpush1.bf16.msra.mxu0 %v1126
  %1575 = vmatprep.subr.bf16.mxu0 %v1136
  %1576 = vmatpush1.bf16.msra.mxu0 %v1135
  %1577 = vmatprep.subr.bf16.mxu0 %v1353
  %1578 = vmatpush1.bf16.msra.mxu0 %v1350
  %1579 = vmatprep.subr.bf16.mxu0 0
  %1580 = vmatpush1.bf16.msra.mxu0 0
  %1581 = vmatprep.subr.bf16.mxu0 0
  %1582 = vmatpush1.bf16.msra.mxu0 0
  %1583 = vmatprep.subr.bf16.mxu0 0
  %1584 = vmatpush1.bf16.msra.mxu0 0
  %1585 = vmatprep.subr.bf16.mxu0 0
  %1586 = vmatpush1.bf16.msra.mxu0 0
  %1587 = vmatprep.subr.bf16.mxu0 0
  %1588 = vmatpush1.bf16.msra.mxu0 0
  %1589 = vmatprep.subr.bf16.mxu0 0
  %1590 = vmatpush1.bf16.msra.mxu0 0
  %1591 = vmatprep.subr.bf16.mxu0 0
  %1592 = vmatpush1.bf16.msra.mxu0 0
  %1593 = vmatprep.subr.bf16.mxu0 0
  %1594 = vmatpush1.bf16.msra.mxu0 0
  %1595 = vmatprep.subr.bf16.mxu0 0
  %1596 = vmatpush1.bf16.msra.mxu0 0
  %1597 = vmatprep.subr.bf16.mxu0 0
  %1598 = vmatpush1.bf16.msra.mxu0 0
  %1599 = vmatprep.subr.bf16.mxu0 0
  %1600 = vmatpush1.bf16.msra.mxu0 0
  %1601 = vmatprep.mubr.bf16.mxu0 0
  %1602 = vmatmul.mubr.bf16.gmra.mrb[0].mxu0 %v1331
  %v1603 = vpop.f32.mrb[0].mxu0
  %v1604 = vadd.f32 %v1563, %v1603
  %v1605 = vpop.f32.mrb[0].mxu0
  %v1606 = vadd.f32 %v1565, %v1605
  %v1607 = vpop.f32.mrb[0].mxu0
  %v1608 = vpop.f32.mrb[0].mxu0
  %1609 = vdwg.mxu0
  %1610 = vmatprep.subr.bf16.mxu0 %v967
  %1611 = vmatpush1.bf16.msra.mxu0 %v966
  %1612 = vmatprep.subr.bf16.mxu0 %v976
  %1613 = vmatpush1.bf16.msra.mxu0 %v975
  %1614 = vmatprep.subr.bf16.mxu0 %v985
  %1615 = vmatpush1.bf16.msra.mxu0 %v984
  %1616 = vmatprep.subr.bf16.mxu0 %v994
  %1617 = vmatpush1.bf16.msra.mxu0 %v993
  %1618 = vmatprep.subr.bf16.mxu0 %v1003
  %1619 = vmatpush1.bf16.msra.mxu0 %v1002
  %1620 = vmatprep.subr.bf16.mxu0 %v1012
  %1621 = vmatpush1.bf16.msra.mxu0 %v1011
  %1622 = vmatprep.subr.bf16.mxu0 %v1021
  %1623 = vmatpush1.bf16.msra.mxu0 %v1020
  %1624 = vmatprep.subr.bf16.mxu0 %v1030
  %1625 = vmatpush1.bf16.msra.mxu0 %v1029
  %1626 = vmatprep.subr.bf16.mxu0 %v1039
  %1627 = vmatpush1.bf16.msra.mxu0 %v1038
  %1628 = vmatprep.subr.bf16.mxu0 %v1048
  %1629 = vmatpush1.bf16.msra.mxu0 %v1047
  %1630 = vmatprep.subr.bf16.mxu0 %v1057
  %1631 = vmatpush1.bf16.msra.mxu0 %v1056
  %1632 = vmatprep.subr.bf16.mxu0 %v1066
  %1633 = vmatpush1.bf16.msra.mxu0 %v1065
  %1634 = vmatprep.subr.bf16.mxu0 %v1075
  %1635 = vmatpush1.bf16.msra.mxu0 %v1074
  %1636 = vmatprep.subr.bf16.mxu0 %v1084
  %1637 = vmatpush1.bf16.msra.mxu0 %v1083
  %1638 = vmatprep.subr.bf16.mxu0 %v1093
  %1639 = vmatpush1.bf16.msra.mxu0 %v1092
  %1640 = vmatprep.subr.bf16.mxu0 %v1102
  %1641 = vmatpush1.bf16.msra.mxu0 %v1101
  %1642 = vmatprep.mubr.bf16.mxu0 %v368
  %1643 = vmatmul.mubr.bf16.gmra.mrb[0].mxu0 %v361
  %v1644 = vpop.f32.mrb[0].mxu0
  %v1645 = vadd.f32 %v328, %v1644
  %v1646 = vpop.f32.mrb[0].mxu0
  %v1647 = vadd.f32 %v332, %v1646
  %v1648 = vpop.f32.mrb[0].mxu0
  %v1649 = vpop.f32.mrb[0].mxu0
  %1650 = vdwg.mxu0
  %1651 = vmatprep.subr.bf16.mxu0 %v1111
  %1652 = vmatpush1.bf16.msra.mxu0 %v1110
  %1653 = vmatprep.subr.bf16.mxu0 %v1120
  %1654 = vmatpush1.bf16.msra.mxu0 %v1119
  %1655 = vmatprep.subr.bf16.mxu0 %v1129
  %1656 = vmatpush1.bf16.msra.mxu0 %v1128
  %1657 = vmatprep.subr.bf16.mxu0 %v1138
  %1658 = vmatpush1.bf16.msra.mxu0 %v1137
  %1659 = vmatprep.subr.bf16.mxu0 %v1359
  %1660 = vmatpush1.bf16.msra.mxu0 %v1356
  %1661 = vmatprep.subr.bf16.mxu0 0
  %1662 = vmatpush1.bf16.msra.mxu0 0
  %1663 = vmatprep.subr.bf16.mxu0 0
  %1664 = vmatpush1.bf16.msra.mxu0 0
  %1665 = vmatprep.subr.bf16.mxu0 0
  %1666 = vmatpush1.bf16.msra.mxu0 0
  %1667 = vmatprep.subr.bf16.mxu0 0
  %1668 = vmatpush1.bf16.msra.mxu0 0
  %1669 = vmatprep.subr.bf16.mxu0 0
  %1670 = vmatpush1.bf16.msra.mxu0 0
  %1671 = vmatprep.subr.bf16.mxu0 0
  %1672 = vmatpush1.bf16.msra.mxu0 0
  %1673 = vmatprep.subr.bf16.mxu0 0
  %1674 = vmatpush1.bf16.msra.mxu0 0
  %1675 = vmatprep.subr.bf16.mxu0 0
  %1676 = vmatpush1.bf16.msra.mxu0 0
  %1677 = vmatprep.subr.bf16.mxu0 0
  %1678 = vmatpush1.bf16.msra.mxu0 0
  %1679 = vmatprep.subr.bf16.mxu0 0
  %1680 = vmatpush1.bf16.msra.mxu0 0
  %1681 = vmatprep.subr.bf16.mxu0 0
  %1682 = vmatpush1.bf16.msra.mxu0 0
  %1683 = vmatprep.mubr.bf16.mxu0 0
  %1684 = vmatmul.mubr.bf16.gmra.mrb[0].mxu0 %v1331
  %v1685 = vpop.f32.mrb[0].mxu0
  %v1686 = vadd.f32 %v1645, %v1685
  %v1687 = vpop.f32.mrb[0].mxu0
  %v1688 = vadd.f32 %v1647, %v1687
  %v1689 = vpop.f32.mrb[0].mxu0
  %v1690 = vpop.f32.mrb[0].mxu0
  %1691 = vdwg.mxu0
  %1692 = vmatprep.subr.bf16.mxu0 0
  %1693 = vmatpush1.bf16.msra.mxu0 %v968
  %1694 = vmatprep.subr.bf16.mxu0 0
  %1695 = vmatpush1.bf16.msra.mxu0 %v977
  %1696 = vmatprep.subr.bf16.mxu0 0
  %1697 = vmatpush1.bf16.msra.mxu0 %v986
  %1698 = vmatprep.subr.bf16.mxu0 0
  %1699 = vmatpush1.bf16.msra.mxu0 %v995
  %1700 = vmatprep.subr.bf16.mxu0 0
  %1701 = vmatpush1.bf16.msra.mxu0 %v1004
  %1702 = vmatprep.subr.bf16.mxu0 0
  %1703 = vmatpush1.bf16.msra.mxu0 %v1013
  %1704 = vmatprep.subr.bf16.mxu0 0
  %1705 = vmatpush1.bf16.msra.mxu0 %v1022
  %1706 = vmatprep.subr.bf16.mxu0 0
  %1707 = vmatpush1.bf16.msra.mxu0 %v1031
  %1708 = vmatprep.subr.bf16.mxu0 0
  %1709 = vmatpush1.bf16.msra.mxu0 %v1040
  %1710 = vmatprep.subr.bf16.mxu0 0
  %1711 = vmatpush1.bf16.msra.mxu0 %v1049
  %1712 = vmatprep.subr.bf16.mxu0 0
  %1713 = vmatpush1.bf16.msra.mxu0 %v1058
  %1714 = vmatprep.subr.bf16.mxu0 0
  %1715 = vmatpush1.bf16.msra.mxu0 %v1067
  %1716 = vmatprep.subr.bf16.mxu0 0
  %1717 = vmatpush1.bf16.msra.mxu0 %v1076
  %1718 = vmatprep.subr.bf16.mxu0 0
  %1719 = vmatpush1.bf16.msra.mxu0 %v1085
  %1720 = vmatprep.subr.bf16.mxu0 0
  %1721 = vmatpush1.bf16.msra.mxu0 %v1094
  %1722 = vmatprep.subr.bf16.mxu0 0
  %1723 = vmatpush1.bf16.msra.mxu0 %v1103
  %1724 = vmatprep.mubr.bf16.mxu0 %v368
  %1725 = vmatmul.mubr.bf16.gmra.mrb[0].mxu0 %v361
  %v1726 = vpop.f32.mrb[0].mxu0
  %v1727 = vadd.f32 %v336, %v1726
  %v1728 = vpop.f32.mrb[0].mxu0
  %v1729 = vpop.f32.mrb[0].mxu0
  %v1730 = vpop.f32.mrb[0].mxu0
  %1731 = vdwg.mxu0
  %1732 = vmatprep.subr.bf16.mxu0 0
  %1733 = vmatpush1.bf16.msra.mxu0 %v1112
  %1734 = vmatprep.subr.bf16.mxu0 0
  %1735 = vmatpush1.bf16.msra.mxu0 %v1121
  %1736 = vmatprep.subr.bf16.mxu0 0
  %1737 = vmatpush1.bf16.msra.mxu0 %v1130
  %1738 = vmatprep.subr.bf16.mxu0 0
  %1739 = vmatpush1.bf16.msra.mxu0 %v1139
  %1740 = vmatprep.subr.bf16.mxu0 0
  %1741 = vmatpush1.bf16.msra.mxu0 %v1362
  %1742 = vmatprep.subr.bf16.mxu0 0
  %1743 = vmatpush1.bf16.msra.mxu0 0
  %1744 = vmatprep.subr.bf16.mxu0 0
  %1745 = vmatpush1.bf16.msra.mxu0 0
  %1746 = vmatprep.subr.bf16.mxu0 0
  %1747 = vmatpush1.bf16.msra.mxu0 0
  %1748 = vmatprep.subr.bf16.mxu0 0
  %1749 = vmatpush1.bf16.msra.mxu0 0
  %1750 = vmatprep.subr.bf16.mxu0 0
  %1751 = vmatpush1.bf16.msra.mxu0 0
  %1752 = vmatprep.subr.bf16.mxu0 0
  %1753 = vmatpush1.bf16.msra.mxu0 0
  %1754 = vmatprep.subr.bf16.mxu0 0
  %1755 = vmatpush1.bf16.msra.mxu0 0
  %1756 = vmatprep.subr.bf16.mxu0 0
  %1757 = vmatpush1.bf16.msra.mxu0 0
  %1758 = vmatprep.subr.bf16.mxu0 0
  %1759 = vmatpush1.bf16.msra.mxu0 0
  %1760 = vmatprep.subr.bf16.mxu0 0
  %1761 = vmatpush1.bf16.msra.mxu0 0
  %1762 = vmatprep.subr.bf16.mxu0 0
  %1763 = vmatpush1.bf16.msra.mxu0 0
  %1764 = vmatprep.mubr.bf16.mxu0 0
  %1765 = vmatmul.mubr.bf16.gmra.mrb[0].mxu0 %v1331
  %v1766 = vpop.f32.mrb[0].mxu0
  %v1767 = vadd.f32 %v1727, %v1766
  %v1768 = vpop.f32.mrb[0].mxu0
  %v1769 = vpop.f32.mrb[0].mxu0
  %v1770 = vpop.f32.mrb[0].mxu0
  %1771 = vdwg.mxu0
  %v1772 = vmul.f32 %v1440, %v1440
  %v1773 = vmul.f32 %v1442, %v1442
  %v1774 = vpack.c.bf16 %v1772, %v1772
  %v1775 = vpack.c.bf16 %v1773, %v1773
  %v1805 = vunpack.c.l.b16 %v58
  %v1806 = vunpack.c.h.b16 %v58
  %v1807 = vunpack.c.l.b16 %v59
  %v1808 = vunpack.c.h.b16 %v59
  %v1809 = vunpack.c.l.b16 %v60
  %v1810 = vunpack.c.h.b16 %v60
  %v1811 = vunpack.c.l.b16 %v61
  %v1812 = vunpack.c.h.b16 %v61
  %v1813 = vunpack.c.l.b16 %v62
  %v1814 = vunpack.c.h.b16 %v62
  %v1815 = vunpack.c.l.b16 %v63
  %v1816 = vunpack.c.h.b16 %v63
  %v1817 = vunpack.c.l.b16 %v64
  %v1818 = vunpack.c.h.b16 %v64
  %v1819 = vunpack.c.l.b16 %v65
  %v1820 = vunpack.c.h.b16 %v65
  %v1821 = vunpack.c.l.b16 %v66
  %v1822 = vunpack.c.h.b16 %v66
  %v1823 = vunpack.c.l.b16 %v67
  %v1824 = vunpack.c.h.b16 %v67
  %v1825 = vunpack.c.l.b16 %v68
  %v1826 = vunpack.c.h.b16 %v68
  %v1827 = vunpack.c.l.b16 %v69
  %v1828 = vunpack.c.h.b16 %v69
  %v1829 = vunpack.c.l.b16 %v70
  %v1830 = vunpack.c.h.b16 %v70
  %v1831 = vunpack.c.l.b16 %v71
  %v1832 = vunpack.c.h.b16 %v71
  %v1833 = vunpack.c.l.b16 %v72
  %v1834 = vunpack.c.h.b16 %v72
  %v1835 = vunpack.c.l.b16 %v73
  %v1836 = vunpack.c.h.b16 %v73
  %v1837 = vunpack.c.l.b16 %v74
  %v1838 = vunpack.c.h.b16 %v74
  %v1839 = vunpack.c.l.b16 %v75
  %v1840 = vunpack.c.h.b16 %v75
  %v1841 = vunpack.c.l.b16 %v76
  %v1842 = vunpack.c.h.b16 %v76
  %v1843 = vunpack.c.l.b16 %v77
  %v1844 = vunpack.c.h.b16 %v77
  %v1845 = vunpack.c.l.b16 %v78
  %v1846 = vunpack.c.h.b16 %v78
  %v1847 = vunpack.c.l.b16 %v79
  %v1848 = vunpack.c.h.b16 %v79
  %v1849 = vunpack.c.l.b16 %v80
  %v1850 = vunpack.c.h.b16 %v80
  %v1851 = vunpack.c.l.b16 %v81
  %v1852 = vunpack.c.h.b16 %v81
  %v1853 = vunpack.c.l.b16 %v82
  %v1854 = vunpack.c.h.b16 %v82
  %v1855 = vunpack.c.l.b16 %v83
  %v1856 = vunpack.c.h.b16 %v83
  %v1857 = vunpack.c.l.b16 %v84
  %v1858 = vunpack.c.h.b16 %v84
  %v1859 = vunpack.c.l.b16 %v85
  %v1860 = vunpack.c.h.b16 %v85
  %v1861 = vunpack.c.l.b16 %v86
  %v1862 = vunpack.c.h.b16 %v86
  %v1863 = vpack.c.b16 %v1807, %v1805
  %v1864 = vpack.c.b16 %v1808, %v1806
  %v1865 = vpack.c.b16 %v1811, %v1809
  %v1866 = vpack.c.b16 %v1812, %v1810
  %v1867 = vpack.c.b16 %v1815, %v1813
  %v1868 = vpack.c.b16 %v1816, %v1814
  %v1869 = vpack.c.b16 %v1819, %v1817
  %v1870 = vpack.c.b16 %v1820, %v1818
  %v1871 = vpack.c.b16 %v1823, %v1821
  %v1872 = vpack.c.b16 %v1824, %v1822
  %v1873 = vpack.c.b16 %v1827, %v1825
  %v1874 = vpack.c.b16 %v1828, %v1826
  %v1875 = vpack.c.b16 %v1831, %v1829
  %v1876 = vpack.c.b16 %v1832, %v1830
  %v1877 = vpack.c.b16 %v1835, %v1833
  %v1878 = vpack.c.b16 %v1836, %v1834
  %v1879 = vpack.c.b16 %v1839, %v1837
  %v1880 = vpack.c.b16 %v1840, %v1838
  %v1881 = vpack.c.b16 %v1843, %v1841
  %v1882 = vpack.c.b16 %v1844, %v1842
  %v1883 = vpack.c.b16 %v1847, %v1845
  %v1884 = vpack.c.b16 %v1848, %v1846
  %v1885 = vpack.c.b16 %v1851, %v1849
  %v1886 = vpack.c.b16 %v1852, %v1850
  %v1887 = vpack.c.b16 %v1855, %v1853
  %v1888 = vpack.c.b16 %v1856, %v1854
  %v1889 = vpack.c.b16 %v1859, %v1857
  %v1890 = vpack.c.b16 %v1860, %v1858
  %v1891 = vpack.c.b16 %v1861, %v1861
  %v1892 = vpack.c.b16 %v1862, %v1862
  %vm1921 = vcmask 793600
  %v1923 = vsel %vm1921, %v1775, 0
  %vm1925 = vcmask 1040384
  %v1926 = vsel 0, 4294967295, 65535
  %v1927 = vsel %vm1925, %v1926, 0
  %v1929 = vand.u32 %v1891, %v1927
  %v1932 = vand.u32 %v1892, %v1927
  %1934 = vmatprep.subr.bf16.mxu0 %v1864
  %1935 = vmatpush1.bf16.msra.mxu0 %v1863
  %1936 = vmatprep.subr.bf16.mxu0 %v1866
  %1937 = vmatpush1.bf16.msra.mxu0 %v1865
  %1938 = vmatprep.subr.bf16.mxu0 %v1868
  %1939 = vmatpush1.bf16.msra.mxu0 %v1867
  %1940 = vmatprep.subr.bf16.mxu0 %v1870
  %1941 = vmatpush1.bf16.msra.mxu0 %v1869
  %1942 = vmatprep.subr.bf16.mxu0 %v1872
  %1943 = vmatpush1.bf16.msra.mxu0 %v1871
  %1944 = vmatprep.subr.bf16.mxu0 %v1874
  %1945 = vmatpush1.bf16.msra.mxu0 %v1873
  %1946 = vmatprep.subr.bf16.mxu0 %v1876
  %1947 = vmatpush1.bf16.msra.mxu0 %v1875
  %1948 = vmatprep.subr.bf16.mxu0 %v1878
  %1949 = vmatpush1.bf16.msra.mxu0 %v1877
  %1950 = vmatprep.subr.bf16.mxu0 %v1880
  %1951 = vmatpush1.bf16.msra.mxu0 %v1879
  %1952 = vmatprep.subr.bf16.mxu0 %v1882
  %1953 = vmatpush1.bf16.msra.mxu0 %v1881
  %1954 = vmatprep.subr.bf16.mxu0 %v1884
  %1955 = vmatpush1.bf16.msra.mxu0 %v1883
  %1956 = vmatprep.subr.bf16.mxu0 %v1886
  %1957 = vmatpush1.bf16.msra.mxu0 %v1885
  %1958 = vmatprep.subr.bf16.mxu0 %v1888
  %1959 = vmatpush1.bf16.msra.mxu0 %v1887
  %1960 = vmatprep.subr.bf16.mxu0 %v1890
  %1961 = vmatpush1.bf16.msra.mxu0 %v1889
  %1962 = vmatprep.subr.bf16.mxu0 %v1932
  %1963 = vmatpush1.bf16.msra.mxu0 %v1929
  %1964 = vmatprep.subr.bf16.mxu0 0
  %1965 = vmatpush1.bf16.msra.mxu0 0
  %1966 = vmatprep.mubr.bf16.mxu0 %v1923
  %1967 = vmatmul.mubr.bf16.gmra.mrb[0].mxu0 %v1774
  %v1968 = vpop.f32.mrb[0].mxu0
  %v1969 = vadd.f32 0.0, %v1968
  %v1970 = vpop.f32.mrb[0].mxu0
  %v1971 = vadd.f32 0.0, %v1970
  %v1972 = vpop.f32.mrb[0].mxu0
  %v1973 = vpop.f32.mrb[0].mxu0
  %1974 = vdwg.mxu0
  %1977 = vrot.lane.b32.xlu0 %v1440, 119
  %v1978 = vpop.permute.xlu0 %1977
  %1979 = vrot.lane.b32.xlu0 %v1442, 119
  %v1980 = vpop.permute.xlu0 %1979
  %vm1981 = vcmask 973824
  %v1982 = vsel %vm1981, %v1978, %v1980
  %v1985 = vmul.f32 %v1440, %v1982
  %v1986 = vmul.f32 %v1442, %v1980
  %v1987 = vpack.c.bf16 %v1985, %v1985
  %v1988 = vpack.c.bf16 %v1986, %v1986
  %v1990 = vsel %vm1921, %v1988, 0
  %1992 = vmatprep.subr.bf16.mxu0 %v1864
  %1993 = vmatpush1.bf16.msra.mxu0 %v1863
  %1994 = vmatprep.subr.bf16.mxu0 %v1866
  %1995 = vmatpush1.bf16.msra.mxu0 %v1865
  %1996 = vmatprep.subr.bf16.mxu0 %v1868
  %1997 = vmatpush1.bf16.msra.mxu0 %v1867
  %1998 = vmatprep.subr.bf16.mxu0 %v1870
  %1999 = vmatpush1.bf16.msra.mxu0 %v1869
  %2000 = vmatprep.subr.bf16.mxu0 %v1872
  %2001 = vmatpush1.bf16.msra.mxu0 %v1871
  %2002 = vmatprep.subr.bf16.mxu0 %v1874
  %2003 = vmatpush1.bf16.msra.mxu0 %v1873
  %2004 = vmatprep.subr.bf16.mxu0 %v1876
  %2005 = vmatpush1.bf16.msra.mxu0 %v1875
  %2006 = vmatprep.subr.bf16.mxu0 %v1878
  %2007 = vmatpush1.bf16.msra.mxu0 %v1877
  %2008 = vmatprep.subr.bf16.mxu0 %v1880
  %2009 = vmatpush1.bf16.msra.mxu0 %v1879
  %2010 = vmatprep.subr.bf16.mxu0 %v1882
  %2011 = vmatpush1.bf16.msra.mxu0 %v1881
  %2012 = vmatprep.subr.bf16.mxu0 %v1884
  %2013 = vmatpush1.bf16.msra.mxu0 %v1883
  %2014 = vmatprep.subr.bf16.mxu0 %v1886
  %2015 = vmatpush1.bf16.msra.mxu0 %v1885
  %2016 = vmatprep.subr.bf16.mxu0 %v1888
  %2017 = vmatpush1.bf16.msra.mxu0 %v1887
  %2018 = vmatprep.subr.bf16.mxu0 %v1890
  %2019 = vmatpush1.bf16.msra.mxu0 %v1889
  %2020 = vmatprep.subr.bf16.mxu0 %v1932
  %2021 = vmatpush1.bf16.msra.mxu0 %v1929
  %2022 = vmatprep.subr.bf16.mxu0 0
  %2023 = vmatpush1.bf16.msra.mxu0 0
  %2024 = vmatprep.mubr.bf16.mxu0 %v1990
  %2025 = vmatmul.mubr.bf16.gmra.mrb[0].mxu0 %v1987
  %v2026 = vpop.f32.mrb[0].mxu0
  %v2027 = vadd.f32 0.0, %v2026
  %v2028 = vpop.f32.mrb[0].mxu0
  %v2029 = vadd.f32 0.0, %v2028
  %v2030 = vpop.f32.mrb[0].mxu0
  %v2031 = vpop.f32.mrb[0].mxu0
  %2032 = vdwg.mxu0
  %v2033 = vmax.f32 %v1969, %v2027
  %v2034 = vmax.f32 %v1971, %v2029
  %v2035 = vsub.f32 %v1969, %v2033
  %v2036 = vsub.f32 %v1971, %v2034
  %v2037 = vmul.f32 %v2035, 1.442695
  %v2038 = vpow.pop %v2037
  %v2039 = vmul.f32 %v2036, 1.442695
  %v2040 = vpow.pop %v2039
  %v2041 = vsub.f32 %v2027, %v2033
  %v2042 = vsub.f32 %v2029, %v2034
  %v2043 = vmul.f32 %v2041, 1.442695
  %v2044 = vpow.pop %v2043
  %v2045 = vmul.f32 %v2042, 1.442695
  %v2046 = vpow.pop %v2045
  %v2047 = vadd.f32 %v2038, %v2044
  %v2048 = vadd.f32 %v2040, %v2046
  %2052 = vrot.lane.b32.xlu0 %v1524, 62
  %v2053 = vpop.permute.xlu0 %2052
  %2054 = vrot.lane.b32.xlu0 %v1604, 62
  %v2055 = vpop.permute.xlu0 %2054
  %2056 = vrot.lane.b32.xlu0 %v1606, 62
  %v2057 = vpop.permute.xlu0 %2056
  %vm2058 = vcmask 506880
  %v2059 = vsel %vm2058, %v2053, %v2055
  %v2060 = vsel %vm2058, %v2055, %v2057
  %v2063 = vmul.f32 %v2038, %v2059
  %v2064 = vmul.f32 %v2040, %v2060
  %2065 = vrot.lane.b32.xlu0 %v1524, 53
  %v2066 = vpop.permute.xlu0 %2065
  %2067 = vrot.lane.b32.xlu0 %v1604, 53
  %v2068 = vpop.permute.xlu0 %2067
  %2069 = vrot.lane.b32.xlu0 %v1606, 53
  %v2070 = vpop.permute.xlu0 %2069
  %vm2071 = vcmask 433152
  %v2072 = vsel %vm2071, %v2066, %v2068
  %v2073 = vsel %vm2071, %v2068, %v2070
  %v2076 = vmul.f32 %v2044, %v2072
  %v2077 = vmul.f32 %v2046, %v2073
  %v2078 = vadd.f32 %v2063, %v2076
  %v2079 = vadd.f32 %v2064, %v2077
  %2080 = vrot.lane.b32.xlu0 %v1440, 110
  %v2081 = vpop.permute.xlu0 %2080
  %2082 = vrot.lane.b32.xlu0 %v1442, 110
  %v2083 = vpop.permute.xlu0 %2082
  %vm2084 = vcmask 900096
  %v2085 = vsel %vm2084, %v2081, %v2083
  %v2088 = vmul.f32 %v1440, %v2085
  %v2089 = vmul.f32 %v1442, %v2083
  %v2090 = vpack.c.bf16 %v2088, %v2088
  %v2091 = vpack.c.bf16 %v2089, %v2089
  %v2093 = vsel %vm1921, %v2091, 0
  %2095 = vmatprep.subr.bf16.mxu0 %v1864
  %2096 = vmatpush1.bf16.msra.mxu0 %v1863
  %2097 = vmatprep.subr.bf16.mxu0 %v1866
  %2098 = vmatpush1.bf16.msra.mxu0 %v1865
  %2099 = vmatprep.subr.bf16.mxu0 %v1868
  %2100 = vmatpush1.bf16.msra.mxu0 %v1867
  %2101 = vmatprep.subr.bf16.mxu0 %v1870
  %2102 = vmatpush1.bf16.msra.mxu0 %v1869
  %2103 = vmatprep.subr.bf16.mxu0 %v1872
  %2104 = vmatpush1.bf16.msra.mxu0 %v1871
  %2105 = vmatprep.subr.bf16.mxu0 %v1874
  %2106 = vmatpush1.bf16.msra.mxu0 %v1873
  %2107 = vmatprep.subr.bf16.mxu0 %v1876
  %2108 = vmatpush1.bf16.msra.mxu0 %v1875
  %2109 = vmatprep.subr.bf16.mxu0 %v1878
  %2110 = vmatpush1.bf16.msra.mxu0 %v1877
  %2111 = vmatprep.subr.bf16.mxu0 %v1880
  %2112 = vmatpush1.bf16.msra.mxu0 %v1879
  %2113 = vmatprep.subr.bf16.mxu0 %v1882
  %2114 = vmatpush1.bf16.msra.mxu0 %v1881
  %2115 = vmatprep.subr.bf16.mxu0 %v1884
  %2116 = vmatpush1.bf16.msra.mxu0 %v1883
  %2117 = vmatprep.subr.bf16.mxu0 %v1886
  %2118 = vmatpush1.bf16.msra.mxu0 %v1885
  %2119 = vmatprep.subr.bf16.mxu0 %v1888
  %2120 = vmatpush1.bf16.msra.mxu0 %v1887
  %2121 = vmatprep.subr.bf16.mxu0 %v1890
  %2122 = vmatpush1.bf16.msra.mxu0 %v1889
  %2123 = vmatprep.subr.bf16.mxu0 %v1932
  %2124 = vmatpush1.bf16.msra.mxu0 %v1929
  %2125 = vmatprep.subr.bf16.mxu0 0
  %2126 = vmatpush1.bf16.msra.mxu0 0
  %2127 = vmatprep.mubr.bf16.mxu0 %v2093
  %2128 = vmatmul.mubr.bf16.gmra.mrb[0].mxu0 %v2090
  %v2129 = vpop.f32.mrb[0].mxu0
  %v2130 = vadd.f32 0.0, %v2129
  %v2131 = vpop.f32.mrb[0].mxu0
  %v2132 = vadd.f32 0.0, %v2131
  %v2133 = vpop.f32.mrb[0].mxu0
  %v2134 = vpop.f32.mrb[0].mxu0
  %2135 = vdwg.mxu0
  %v2136 = vmax.f32 %v2033, %v2130
  %v2137 = vmax.f32 %v2034, %v2132
  %v2138 = vsub.f32 %v2033, %v2136
  %v2139 = vsub.f32 %v2034, %v2137
  %v2140 = vmul.f32 %v2138, 1.442695
  %v2141 = vpow.pop %v2140
  %v2142 = vmul.f32 %v2139, 1.442695
  %v2143 = vpow.pop %v2142
  %v2144 = vsub.f32 %v2130, %v2136
  %v2145 = vsub.f32 %v2132, %v2137
  %v2146 = vmul.f32 %v2144, 1.442695
  %v2147 = vpow.pop %v2146
  %v2148 = vmul.f32 %v2145, 1.442695
  %v2149 = vpow.pop %v2148
  %v2150 = vmul.f32 %v2141, %v2047
  %v2151 = vmul.f32 %v2143, %v2048
  %v2152 = vadd.f32 %v2150, %v2147
  %v2153 = vadd.f32 %v2151, %v2149
  %v2154 = vmul.f32 %v2141, %v2078
  %v2155 = vmul.f32 %v2143, %v2079
  %2156 = vrot.lane.b32.xlu0 %v1524, 44
  %v2157 = vpop.permute.xlu0 %2156
  %2158 = vrot.lane.b32.xlu0 %v1604, 44
  %v2159 = vpop.permute.xlu0 %2158
  %2160 = vrot.lane.b32.xlu0 %v1606, 44
  %v2161 = vpop.permute.xlu0 %2160
  %vm2162 = vcmask 359424
  %v2163 = vsel %vm2162, %v2157, %v2159
  %v2164 = vsel %vm2162, %v2159, %v2161
  %v2167 = vmul.f32 %v2147, %v2163
  %v2168 = vmul.f32 %v2149, %v2164
  %v2169 = vadd.f32 %v2154, %v2167
  %v2170 = vadd.f32 %v2155, %v2168
  %2171 = vrot.lane.b32.xlu0 %v1440, 101
  %v2172 = vpop.permute.xlu0 %2171
  %2173 = vrot.lane.b32.xlu0 %v1442, 101
  %v2174 = vpop.permute.xlu0 %2173
  %vm2175 = vcmask 826368
  %v2176 = vsel %vm2175, %v2172, %v2174
  %v2179 = vmul.f32 %v1440, %v2176
  %v2180 = vmul.f32 %v1442, %v2174
  %v2181 = vpack.c.bf16 %v2179, %v2179
  %v2182 = vpack.c.bf16 %v2180, %v2180
  %v2184 = vsel %vm1921, %v2182, 0
  %2186 = vmatprep.subr.bf16.mxu0 %v1864
  %2187 = vmatpush1.bf16.msra.mxu0 %v1863
  %2188 = vmatprep.subr.bf16.mxu0 %v1866
  %2189 = vmatpush1.bf16.msra.mxu0 %v1865
  %2190 = vmatprep.subr.bf16.mxu0 %v1868
  %2191 = vmatpush1.bf16.msra.mxu0 %v1867
  %2192 = vmatprep.subr.bf16.mxu0 %v1870
  %2193 = vmatpush1.bf16.msra.mxu0 %v1869
  %2194 = vmatprep.subr.bf16.mxu0 %v1872
  %2195 = vmatpush1.bf16.msra.mxu0 %v1871
  %2196 = vmatprep.subr.bf16.mxu0 %v1874
  %2197 = vmatpush1.bf16.msra.mxu0 %v1873
  %2198 = vmatprep.subr.bf16.mxu0 %v1876
  %2199 = vmatpush1.bf16.msra.mxu0 %v1875
  %2200 = vmatprep.subr.bf16.mxu0 %v1878
  %2201 = vmatpush1.bf16.msra.mxu0 %v1877
  %2202 = vmatprep.subr.bf16.mxu0 %v1880
  %2203 = vmatpush1.bf16.msra.mxu0 %v1879
  %2204 = vmatprep.subr.bf16.mxu0 %v1882
  %2205 = vmatpush1.bf16.msra.mxu0 %v1881
  %2206 = vmatprep.subr.bf16.mxu0 %v1884
  %2207 = vmatpush1.bf16.msra.mxu0 %v1883
  %2208 = vmatprep.subr.bf16.mxu0 %v1886
  %2209 = vmatpush1.bf16.msra.mxu0 %v1885
  %2210 = vmatprep.subr.bf16.mxu0 %v1888
  %2211 = vmatpush1.bf16.msra.mxu0 %v1887
  %2212 = vmatprep.subr.bf16.mxu0 %v1890
  %2213 = vmatpush1.bf16.msra.mxu0 %v1889
  %2214 = vmatprep.subr.bf16.mxu0 %v1932
  %2215 = vmatpush1.bf16.msra.mxu0 %v1929
  %2216 = vmatprep.subr.bf16.mxu0 0
  %2217 = vmatpush1.bf16.msra.mxu0 0
  %2218 = vmatprep.mubr.bf16.mxu0 %v2184
  %2219 = vmatmul.mubr.bf16.gmra.mrb[0].mxu0 %v2181
  %v2220 = vpop.f32.mrb[0].mxu0
  %v2221 = vadd.f32 0.0, %v2220
  %v2222 = vpop.f32.mrb[0].mxu0
  %v2223 = vadd.f32 0.0, %v2222
  %v2224 = vpop.f32.mrb[0].mxu0
  %v2225 = vpop.f32.mrb[0].mxu0
  %2226 = vdwg.mxu0
  %v2227 = vmax.f32 %v2136, %v2221
  %v2228 = vmax.f32 %v2137, %v2223
  %v2229 = vsub.f32 %v2136, %v2227
  %v2230 = vsub.f32 %v2137, %v2228
  %v2231 = vmul.f32 %v2229, 1.442695
  %v2232 = vpow.pop %v2231
  %v2233 = vmul.f32 %v2230, 1.442695
  %v2234 = vpow.pop %v2233
  %v2235 = vsub.f32 %v2221, %v2227
  %v2236 = vsub.f32 %v2223, %v2228
  %v2237 = vmul.f32 %v2235, 1.442695
  %v2238 = vpow.pop %v2237
  %v2239 = vmul.f32 %v2236, 1.442695
  %v2240 = vpow.pop %v2239
  %v2241 = vmul.f32 %v2232, %v2152
  %v2242 = vmul.f32 %v2234, %v2153
  %v2243 = vadd.f32 %v2241, %v2238
  %v2244 = vadd.f32 %v2242, %v2240
  %v2245 = vmul.f32 %v2232, %v2169
  %v2246 = vmul.f32 %v2234, %v2170
  %2247 = vrot.lane.b32.xlu0 %v1524, 35
  %v2248 = vpop.permute.xlu0 %2247
  %2249 = vrot.lane.b32.xlu0 %v1604, 35
  %v2250 = vpop.permute.xlu0 %2249
  %2251 = vrot.lane.b32.xlu0 %v1606, 35
  %v2252 = vpop.permute.xlu0 %2251
  %vm2253 = vcmask 285696
  %v2254 = vsel %vm2253, %v2248, %v2250
  %v2255 = vsel %vm2253, %v2250, %v2252
  %v2258 = vmul.f32 %v2238, %v2254
  %v2259 = vmul.f32 %v2240, %v2255
  %v2260 = vadd.f32 %v2245, %v2258
  %v2261 = vadd.f32 %v2246, %v2259
  %2263 = vrot.lane.b32.xlu0 %v1440, 92
  %v2264 = vpop.permute.xlu0 %2263
  %2265 = vrot.lane.b32.xlu0 %v1442, 92
  %v2266 = vpop.permute.xlu0 %2265
  %2267 = vrot.lane.b32.xlu0 %v1522, 92
  %v2268 = vpop.permute.xlu0 %2267
  %vm2269 = vcmask 752640
  %v2270 = vsel %vm2269, %v2264, %v2266
  %v2271 = vsel %vm2269, %v2266, %v2268
  %v2274 = vmul.f32 %v1440, %v2270
  %v2275 = vmul.f32 %v1442, %v2271
  %v2276 = vpack.c.bf16 %v2274, %v2274
  %v2277 = vpack.c.bf16 %v2275, %v2275
  %v2279 = vsel %vm1921, %v2277, 0
  %2281 = vmatprep.subr.bf16.mxu0 %v1864
  %2282 = vmatpush1.bf16.msra.mxu0 %v1863
  %2283 = vmatprep.subr.bf16.mxu0 %v1866
  %2284 = vmatpush1.bf16.msra.mxu0 %v1865
  %2285 = vmatprep.subr.bf16.mxu0 %v1868
  %2286 = vmatpush1.bf16.msra.mxu0 %v1867
  %2287 = vmatprep.subr.bf16.mxu0 %v1870
  %2288 = vmatpush1.bf16.msra.mxu0 %v1869
  %2289 = vmatprep.subr.bf16.mxu0 %v1872
  %2290 = vmatpush1.bf16.msra.mxu0 %v1871
  %2291 = vmatprep.subr.bf16.mxu0 %v1874
  %2292 = vmatpush1.bf16.msra.mxu0 %v1873
  %2293 = vmatprep.subr.bf16.mxu0 %v1876
  %2294 = vmatpush1.bf16.msra.mxu0 %v1875
  %2295 = vmatprep.subr.bf16.mxu0 %v1878
  %2296 = vmatpush1.bf16.msra.mxu0 %v1877
  %2297 = vmatprep.subr.bf16.mxu0 %v1880
  %2298 = vmatpush1.bf16.msra.mxu0 %v1879
  %2299 = vmatprep.subr.bf16.mxu0 %v1882
  %2300 = vmatpush1.bf16.msra.mxu0 %v1881
  %2301 = vmatprep.subr.bf16.mxu0 %v1884
  %2302 = vmatpush1.bf16.msra.mxu0 %v1883
  %2303 = vmatprep.subr.bf16.mxu0 %v1886
  %2304 = vmatpush1.bf16.msra.mxu0 %v1885
  %2305 = vmatprep.subr.bf16.mxu0 %v1888
  %2306 = vmatpush1.bf16.msra.mxu0 %v1887
  %2307 = vmatprep.subr.bf16.mxu0 %v1890
  %2308 = vmatpush1.bf16.msra.mxu0 %v1889
  %2309 = vmatprep.subr.bf16.mxu0 %v1932
  %2310 = vmatpush1.bf16.msra.mxu0 %v1929
  %2311 = vmatprep.subr.bf16.mxu0 0
  %2312 = vmatpush1.bf16.msra.mxu0 0
  %2313 = vmatprep.mubr.bf16.mxu0 %v2279
  %2314 = vmatmul.mubr.bf16.gmra.mrb[0].mxu0 %v2276
  %v2315 = vpop.f32.mrb[0].mxu0
  %v2316 = vadd.f32 0.0, %v2315
  %v2317 = vpop.f32.mrb[0].mxu0
  %v2318 = vadd.f32 0.0, %v2317
  %v2319 = vpop.f32.mrb[0].mxu0
  %v2320 = vpop.f32.mrb[0].mxu0
  %2321 = vdwg.mxu0
  %v2322 = vmax.f32 %v2227, %v2316
  %v2323 = vmax.f32 %v2228, %v2318
  %v2324 = vsub.f32 %v2227, %v2322
  %v2325 = vsub.f32 %v2228, %v2323
  %v2326 = vmul.f32 %v2324, 1.442695
  %v2327 = vpow.pop %v2326
  %v2328 = vmul.f32 %v2325, 1.442695
  %v2329 = vpow.pop %v2328
  %v2330 = vsub.f32 %v2316, %v2322
  %v2331 = vsub.f32 %v2318, %v2323
  %v2332 = vmul.f32 %v2330, 1.442695
  %v2333 = vpow.pop %v2332
  %v2334 = vmul.f32 %v2331, 1.442695
  %v2335 = vpow.pop %v2334
  %v2336 = vmul.f32 %v2327, %v2243
  %v2337 = vmul.f32 %v2329, %v2244
  %v2338 = vadd.f32 %v2336, %v2333
  %v2339 = vadd.f32 %v2337, %v2335
  %v2340 = vmul.f32 %v2327, %v2260
  %v2341 = vmul.f32 %v2329, %v2261
  %2342 = vrot.lane.b32.xlu0 %v1524, 26
  %v2343 = vpop.permute.xlu0 %2342
  %2344 = vrot.lane.b32.xlu0 %v1604, 26
  %v2345 = vpop.permute.xlu0 %2344
  %2346 = vrot.lane.b32.xlu0 %v1606, 26
  %v2347 = vpop.permute.xlu0 %2346
  %vm2348 = vcmask 211968
  %v2349 = vsel %vm2348, %v2343, %v2345
  %v2350 = vsel %vm2348, %v2345, %v2347
  %v2353 = vmul.f32 %v2333, %v2349
  %v2354 = vmul.f32 %v2335, %v2350
  %v2355 = vadd.f32 %v2340, %v2353
  %v2356 = vadd.f32 %v2341, %v2354
  %2357 = vrot.lane.b32.xlu0 %v1440, 83
  %v2358 = vpop.permute.xlu0 %2357
  %2359 = vrot.lane.b32.xlu0 %v1442, 83
  %v2360 = vpop.permute.xlu0 %2359
  %2361 = vrot.lane.b32.xlu0 %v1522, 83
  %v2362 = vpop.permute.xlu0 %2361
  %vm2363 = vcmask 678912
  %v2364 = vsel %vm2363, %v2358, %v2360
  %v2365 = vsel %vm2363, %v2360, %v2362
  %v2368 = vmul.f32 %v1440, %v2364
  %v2369 = vmul.f32 %v1442, %v2365
  %v2370 = vpack.c.bf16 %v2368, %v2368
  %v2371 = vpack.c.bf16 %v2369, %v2369
  %v2373 = vsel %vm1921, %v2371, 0
  %2375 = vmatprep.subr.bf16.mxu0 %v1864
  %2376 = vmatpush1.bf16.msra.mxu0 %v1863
  %2377 = vmatprep.subr.bf16.mxu0 %v1866
  %2378 = vmatpush1.bf16.msra.mxu0 %v1865
  %2379 = vmatprep.subr.bf16.mxu0 %v1868
  %2380 = vmatpush1.bf16.msra.mxu0 %v1867
  %2381 = vmatprep.subr.bf16.mxu0 %v1870
  %2382 = vmatpush1.bf16.msra.mxu0 %v1869
  %2383 = vmatprep.subr.bf16.mxu0 %v1872
  %2384 = vmatpush1.bf16.msra.mxu0 %v1871
  %2385 = vmatprep.subr.bf16.mxu0 %v1874
  %2386 = vmatpush1.bf16.msra.mxu0 %v1873
  %2387 = vmatprep.subr.bf16.mxu0 %v1876
  %2388 = vmatpush1.bf16.msra.mxu0 %v1875
  %2389 = vmatprep.subr.bf16.mxu0 %v1878
  %2390 = vmatpush1.bf16.msra.mxu0 %v1877
  %2391 = vmatprep.subr.bf16.mxu0 %v1880
  %2392 = vmatpush1.bf16.msra.mxu0 %v1879
  %2393 = vmatprep.subr.bf16.mxu0 %v1882
  %2394 = vmatpush1.bf16.msra.mxu0 %v1881
  %2395 = vmatprep.subr.bf16.mxu0 %v1884
  %2396 = vmatpush1.bf16.msra.mxu0 %v1883
  %2397 = vmatprep.subr.bf16.mxu0 %v1886
  %2398 = vmatpush1.bf16.msra.mxu0 %v1885
  %2399 = vmatprep.subr.bf16.mxu0 %v1888
  %2400 = vmatpush1.bf16.msra.mxu0 %v1887
  %2401 = vmatprep.subr.bf16.mxu0 %v1890
  %2402 = vmatpush1.bf16.msra.mxu0 %v1889
  %2403 = vmatprep.subr.bf16.mxu0 %v1932
  %2404 = vmatpush1.bf16.msra.mxu0 %v1929
  %2405 = vmatprep.subr.bf16.mxu0 0
  %2406 = vmatpush1.bf16.msra.mxu0 0
  %2407 = vmatprep.mubr.bf16.mxu0 %v2373
  %2408 = vmatmul.mubr.bf16.gmra.mrb[0].mxu0 %v2370
  %v2409 = vpop.f32.mrb[0].mxu0
  %v2410 = vadd.f32 0.0, %v2409
  %v2411 = vpop.f32.mrb[0].mxu0
  %v2412 = vadd.f32 0.0, %v2411
  %v2413 = vpop.f32.mrb[0].mxu0
  %v2414 = vpop.f32.mrb[0].mxu0
  %2415 = vdwg.mxu0
  %v2416 = vmax.f32 %v2322, %v2410
  %v2417 = vmax.f32 %v2323, %v2412
  %v2418 = vsub.f32 %v2322, %v2416
  %v2419 = vsub.f32 %v2323, %v2417
  %v2420 = vmul.f32 %v2418, 1.442695
  %v2421 = vpow.pop %v2420
  %v2422 = vmul.f32 %v2419, 1.442695
  %v2423 = vpow.pop %v2422
  %v2424 = vsub.f32 %v2410, %v2416
  %v2425 = vsub.f32 %v2412, %v2417
  %v2426 = vmul.f32 %v2424, 1.442695
  %v2427 = vpow.pop %v2426
  %v2428 = vmul.f32 %v2425, 1.442695
  %v2429 = vpow.pop %v2428
  %v2430 = vmul.f32 %v2421, %v2338
  %v2431 = vmul.f32 %v2423, %v2339
  %v2432 = vadd.f32 %v2430, %v2427
  %v2433 = vadd.f32 %v2431, %v2429
  %v2434 = vmul.f32 %v2421, %v2355
  %v2435 = vmul.f32 %v2423, %v2356
  %2436 = vrot.lane.b32.xlu0 %v1524, 17
  %v2437 = vpop.permute.xlu0 %2436
  %2438 = vrot.lane.b32.xlu0 %v1604, 17
  %v2439 = vpop.permute.xlu0 %2438
  %2440 = vrot.lane.b32.xlu0 %v1606, 17
  %v2441 = vpop.permute.xlu0 %2440
  %vm2442 = vcmask 138240
  %v2443 = vsel %vm2442, %v2437, %v2439
  %v2444 = vsel %vm2442, %v2439, %v2441
  %v2447 = vmul.f32 %v2427, %v2443
  %v2448 = vmul.f32 %v2429, %v2444
  %v2449 = vadd.f32 %v2434, %v2447
  %v2450 = vadd.f32 %v2435, %v2448
  %2451 = vrot.lane.b32.xlu0 %v1440, 74
  %v2452 = vpop.permute.xlu0 %2451
  %2453 = vrot.lane.b32.xlu0 %v1442, 74
  %v2454 = vpop.permute.xlu0 %2453
  %2455 = vrot.lane.b32.xlu0 %v1522, 74
  %v2456 = vpop.permute.xlu0 %2455
  %vm2457 = vcmask 605184
  %v2458 = vsel %vm2457, %v2452, %v2454
  %v2459 = vsel %vm2457, %v2454, %v2456
  %v2462 = vmul.f32 %v1440, %v2458
  %v2463 = vmul.f32 %v1442, %v2459
  %v2464 = vpack.c.bf16 %v2462, %v2462
  %v2465 = vpack.c.bf16 %v2463, %v2463
  %v2467 = vsel %vm1921, %v2465, 0
  %2469 = vmatprep.subr.bf16.mxu0 %v1864
  %2470 = vmatpush1.bf16.msra.mxu0 %v1863
  %2471 = vmatprep.subr.bf16.mxu0 %v1866
  %2472 = vmatpush1.bf16.msra.mxu0 %v1865
  %2473 = vmatprep.subr.bf16.mxu0 %v1868
  %2474 = vmatpush1.bf16.msra.mxu0 %v1867
  %2475 = vmatprep.subr.bf16.mxu0 %v1870
  %2476 = vmatpush1.bf16.msra.mxu0 %v1869
  %2477 = vmatprep.subr.bf16.mxu0 %v1872
  %2478 = vmatpush1.bf16.msra.mxu0 %v1871
  %2479 = vmatprep.subr.bf16.mxu0 %v1874
  %2480 = vmatpush1.bf16.msra.mxu0 %v1873
  %2481 = vmatprep.subr.bf16.mxu0 %v1876
  %2482 = vmatpush1.bf16.msra.mxu0 %v1875
  %2483 = vmatprep.subr.bf16.mxu0 %v1878
  %2484 = vmatpush1.bf16.msra.mxu0 %v1877
  %2485 = vmatprep.subr.bf16.mxu0 %v1880
  %2486 = vmatpush1.bf16.msra.mxu0 %v1879
  %2487 = vmatprep.subr.bf16.mxu0 %v1882
  %2488 = vmatpush1.bf16.msra.mxu0 %v1881
  %2489 = vmatprep.subr.bf16.mxu0 %v1884
  %2490 = vmatpush1.bf16.msra.mxu0 %v1883
  %2491 = vmatprep.subr.bf16.mxu0 %v1886
  %2492 = vmatpush1.bf16.msra.mxu0 %v1885
  %2493 = vmatprep.subr.bf16.mxu0 %v1888
  %2494 = vmatpush1.bf16.msra.mxu0 %v1887
  %2495 = vmatprep.subr.bf16.mxu0 %v1890
  %2496 = vmatpush1.bf16.msra.mxu0 %v1889
  %2497 = vmatprep.subr.bf16.mxu0 %v1932
  %2498 = vmatpush1.bf16.msra.mxu0 %v1929
  %2499 = vmatprep.subr.bf16.mxu0 0
  %2500 = vmatpush1.bf16.msra.mxu0 0
  %2501 = vmatprep.mubr.bf16.mxu0 %v2467
  %2502 = vmatmul.mubr.bf16.gmra.mrb[0].mxu0 %v2464
  %v2503 = vpop.f32.mrb[0].mxu0
  %v2504 = vadd.f32 0.0, %v2503
  %v2505 = vpop.f32.mrb[0].mxu0
  %v2506 = vadd.f32 0.0, %v2505
  %v2507 = vpop.f32.mrb[0].mxu0
  %v2508 = vpop.f32.mrb[0].mxu0
  %2509 = vdwg.mxu0
  %v2510 = vmax.f32 %v2416, %v2504
  %v2511 = vmax.f32 %v2417, %v2506
  %v2512 = vsub.f32 %v2416, %v2510
  %v2513 = vsub.f32 %v2417, %v2511
  %v2514 = vmul.f32 %v2512, 1.442695
  %v2515 = vpow.pop %v2514
  %v2516 = vmul.f32 %v2513, 1.442695
  %v2517 = vpow.pop %v2516
  %v2518 = vsub.f32 %v2504, %v2510
  %v2519 = vsub.f32 %v2506, %v2511
  %v2520 = vmul.f32 %v2518, 1.442695
  %v2521 = vpow.pop %v2520
  %v2522 = vmul.f32 %v2519, 1.442695
  %v2523 = vpow.pop %v2522
  %v2524 = vmul.f32 %v2515, %v2432
  %v2525 = vmul.f32 %v2517, %v2433
  %v2526 = vadd.f32 %v2524, %v2521
  %v2527 = vadd.f32 %v2525, %v2523
  %v2528 = vmul.f32 %v2515, %v2449
  %v2529 = vmul.f32 %v2517, %v2450
  %2530 = vrot.lane.b32.xlu0 %v1524, 8
  %v2531 = vpop.permute.xlu0 %2530
  %2532 = vrot.lane.b32.xlu0 %v1604, 8
  %v2533 = vpop.permute.xlu0 %2532
  %2534 = vrot.lane.b32.xlu0 %v1606, 8
  %v2535 = vpop.permute.xlu0 %2534
  %vm2536 = vcmask 64512
  %v2537 = vsel %vm2536, %v2531, %v2533
  %v2538 = vsel %vm2536, %v2533, %v2535
  %v2541 = vmul.f32 %v2521, %v2537
  %v2542 = vmul.f32 %v2523, %v2538
  %v2543 = vadd.f32 %v2528, %v2541
  %v2544 = vadd.f32 %v2529, %v2542
  %2545 = vrot.lane.b32.xlu0 %v1440, 65
  %v2546 = vpop.permute.xlu0 %2545
  %2547 = vrot.lane.b32.xlu0 %v1442, 65
  %v2548 = vpop.permute.xlu0 %2547
  %2549 = vrot.lane.b32.xlu0 %v1522, 65
  %v2550 = vpop.permute.xlu0 %2549
  %vm2551 = vcmask 531456
  %v2552 = vsel %vm2551, %v2546, %v2548
  %v2553 = vsel %vm2551, %v2548, %v2550
  %v2556 = vmul.f32 %v1440, %v2552
  %v2557 = vmul.f32 %v1442, %v2553
  %v2558 = vpack.c.bf16 %v2556, %v2556
  %v2559 = vpack.c.bf16 %v2557, %v2557
  %v2561 = vsel %vm1921, %v2559, 0
  %2563 = vmatprep.subr.bf16.mxu0 %v1864
  %2564 = vmatpush1.bf16.msra.mxu0 %v1863
  %2565 = vmatprep.subr.bf16.mxu0 %v1866
  %2566 = vmatpush1.bf16.msra.mxu0 %v1865
  %2567 = vmatprep.subr.bf16.mxu0 %v1868
  %2568 = vmatpush1.bf16.msra.mxu0 %v1867
  %2569 = vmatprep.subr.bf16.mxu0 %v1870
  %2570 = vmatpush1.bf16.msra.mxu0 %v1869
  %2571 = vmatprep.subr.bf16.mxu0 %v1872
  %2572 = vmatpush1.bf16.msra.mxu0 %v1871
  %2573 = vmatprep.subr.bf16.mxu0 %v1874
  %2574 = vmatpush1.bf16.msra.mxu0 %v1873
  %2575 = vmatprep.subr.bf16.mxu0 %v1876
  %2576 = vmatpush1.bf16.msra.mxu0 %v1875
  %2577 = vmatprep.subr.bf16.mxu0 %v1878
  %2578 = vmatpush1.bf16.msra.mxu0 %v1877
  %2579 = vmatprep.subr.bf16.mxu0 %v1880
  %2580 = vmatpush1.bf16.msra.mxu0 %v1879
  %2581 = vmatprep.subr.bf16.mxu0 %v1882
  %2582 = vmatpush1.bf16.msra.mxu0 %v1881
  %2583 = vmatprep.subr.bf16.mxu0 %v1884
  %2584 = vmatpush1.bf16.msra.mxu0 %v1883
  %2585 = vmatprep.subr.bf16.mxu0 %v1886
  %2586 = vmatpush1.bf16.msra.mxu0 %v1885
  %2587 = vmatprep.subr.bf16.mxu0 %v1888
  %2588 = vmatpush1.bf16.msra.mxu0 %v1887
  %2589 = vmatprep.subr.bf16.mxu0 %v1890
  %2590 = vmatpush1.bf16.msra.mxu0 %v1889
  %2591 = vmatprep.subr.bf16.mxu0 %v1932
  %2592 = vmatpush1.bf16.msra.mxu0 %v1929
  %2593 = vmatprep.subr.bf16.mxu0 0
  %2594 = vmatpush1.bf16.msra.mxu0 0
  %2595 = vmatprep.mubr.bf16.mxu0 %v2561
  %2596 = vmatmul.mubr.bf16.gmra.mrb[0].mxu0 %v2558
  %v2597 = vpop.f32.mrb[0].mxu0
  %v2598 = vadd.f32 0.0, %v2597
  %v2599 = vpop.f32.mrb[0].mxu0
  %v2600 = vadd.f32 0.0, %v2599
  %v2601 = vpop.f32.mrb[0].mxu0
  %v2602 = vpop.f32.mrb[0].mxu0
  %2603 = vdwg.mxu0
  %v2604 = vmax.f32 %v2510, %v2598
  %v2605 = vmax.f32 %v2511, %v2600
  %v2606 = vsub.f32 %v2510, %v2604
  %v2607 = vsub.f32 %v2511, %v2605
  %v2608 = vmul.f32 %v2606, 1.442695
  %v2609 = vpow.pop %v2608
  %v2610 = vmul.f32 %v2607, 1.442695
  %v2611 = vpow.pop %v2610
  %v2612 = vsub.f32 %v2598, %v2604
  %v2613 = vsub.f32 %v2600, %v2605
  %v2614 = vmul.f32 %v2612, 1.442695
  %v2615 = vpow.pop %v2614
  %v2616 = vmul.f32 %v2613, 1.442695
  %v2617 = vpow.pop %v2616
  %v2618 = vmul.f32 %v2609, %v2526
  %v2619 = vmul.f32 %v2611, %v2527
  %v2620 = vadd.f32 %v2618, %v2615
  %v2621 = vadd.f32 %v2619, %v2617
  %v2622 = vmul.f32 %v2609, %v2543
  %v2623 = vmul.f32 %v2611, %v2544
  %2624 = vrot.lane.b32.xlu0 %v1604, 127
  %v2625 = vpop.permute.xlu0 %2624
  %2626 = vrot.lane.b32.xlu0 %v1606, 127
  %v2627 = vpop.permute.xlu0 %2626
  %vm2628 = vcmask 1039360
  %v2629 = vsel %vm2628, %v2625, %v2627
  %v2632 = vmul.f32 %v2615, %v2629
  %v2633 = vmul.f32 %v2617, %v2627
  %v2634 = vadd.f32 %v2622, %v2632
  %v2635 = vadd.f32 %v2623, %v2633
  %2636 = vrot.lane.b32.xlu0 %v1440, 56
  %v2637 = vpop.permute.xlu0 %2636
  %2638 = vrot.lane.b32.xlu0 %v1442, 56
  %v2639 = vpop.permute.xlu0 %2638
  %2640 = vrot.lane.b32.xlu0 %v1522, 56
  %v2641 = vpop.permute.xlu0 %2640
  %vm2642 = vcmask 457728
  %v2643 = vsel %vm2642, %v2637, %v2639
  %v2644 = vsel %vm2642, %v2639, %v2641
  %v2647 = vmul.f32 %v1440, %v2643
  %v2648 = vmul.f32 %v1442, %v2644
  %v2649 = vpack.c.bf16 %v2647, %v2647
  %v2650 = vpack.c.bf16 %v2648, %v2648
  %v2652 = vsel %vm1921, %v2650, 0
  %2654 = vmatprep.subr.bf16.mxu0 %v1864
  %2655 = vmatpush1.bf16.msra.mxu0 %v1863
  %2656 = vmatprep.subr.bf16.mxu0 %v1866
  %2657 = vmatpush1.bf16.msra.mxu0 %v1865
  %2658 = vmatprep.subr.bf16.mxu0 %v1868
  %2659 = vmatpush1.bf16.msra.mxu0 %v1867
  %2660 = vmatprep.subr.bf16.mxu0 %v1870
  %2661 = vmatpush1.bf16.msra.mxu0 %v1869
  %2662 = vmatprep.subr.bf16.mxu0 %v1872
  %2663 = vmatpush1.bf16.msra.mxu0 %v1871
  %2664 = vmatprep.subr.bf16.mxu0 %v1874
  %2665 = vmatpush1.bf16.msra.mxu0 %v1873
  %2666 = vmatprep.subr.bf16.mxu0 %v1876
  %2667 = vmatpush1.bf16.msra.mxu0 %v1875
  %2668 = vmatprep.subr.bf16.mxu0 %v1878
  %2669 = vmatpush1.bf16.msra.mxu0 %v1877
  %2670 = vmatprep.subr.bf16.mxu0 %v1880
  %2671 = vmatpush1.bf16.msra.mxu0 %v1879
  %2672 = vmatprep.subr.bf16.mxu0 %v1882
  %2673 = vmatpush1.bf16.msra.mxu0 %v1881
  %2674 = vmatprep.subr.bf16.mxu0 %v1884
  %2675 = vmatpush1.bf16.msra.mxu0 %v1883
  %2676 = vmatprep.subr.bf16.mxu0 %v1886
  %2677 = vmatpush1.bf16.msra.mxu0 %v1885
  %2678 = vmatprep.subr.bf16.mxu0 %v1888
  %2679 = vmatpush1.bf16.msra.mxu0 %v1887
  %2680 = vmatprep.subr.bf16.mxu0 %v1890
  %2681 = vmatpush1.bf16.msra.mxu0 %v1889
  %2682 = vmatprep.subr.bf16.mxu0 %v1932
  %2683 = vmatpush1.bf16.msra.mxu0 %v1929
  %2684 = vmatprep.subr.bf16.mxu0 0
  %2685 = vmatpush1.bf16.msra.mxu0 0
  %2686 = vmatprep.mubr.bf16.mxu0 %v2652
  %2687 = vmatmul.mubr.bf16.gmra.mrb[0].mxu0 %v2649
  %v2688 = vpop.f32.mrb[0].mxu0
  %v2689 = vadd.f32 0.0, %v2688
  %v2690 = vpop.f32.mrb[0].mxu0
  %v2691 = vadd.f32 0.0, %v2690
  %v2692 = vpop.f32.mrb[0].mxu0
  %v2693 = vpop.f32.mrb[0].mxu0
  %2694 = vdwg.mxu0
  %v2695 = vmax.f32 %v2604, %v2689
  %v2696 = vmax.f32 %v2605, %v2691
  %v2697 = vsub.f32 %v2604, %v2695
  %v2698 = vsub.f32 %v2605, %v2696
  %v2699 = vmul.f32 %v2697, 1.442695
  %v2700 = vpow.pop %v2699
  %v2701 = vmul.f32 %v2698, 1.442695
  %v2702 = vpow.pop %v2701
  %v2703 = vsub.f32 %v2689, %v2695
  %v2704 = vsub.f32 %v2691, %v2696
  %v2705 = vmul.f32 %v2703, 1.442695
  %v2706 = vpow.pop %v2705
  %v2707 = vmul.f32 %v2704, 1.442695
  %v2708 = vpow.pop %v2707
  %v2709 = vmul.f32 %v2700, %v2620
  %v2710 = vmul.f32 %v2702, %v2621
  %v2711 = vadd.f32 %v2709, %v2706
  %v2712 = vadd.f32 %v2710, %v2708
  %v2713 = vmul.f32 %v2700, %v2634
  %v2714 = vmul.f32 %v2702, %v2635
  %2715 = vrot.lane.b32.xlu0 %v1604, 118
  %v2716 = vpop.permute.xlu0 %2715
  %2717 = vrot.lane.b32.xlu0 %v1606, 118
  %v2718 = vpop.permute.xlu0 %2717
  %vm2719 = vcmask 965632
  %v2720 = vsel %vm2719, %v2716, %v2718
  %v2723 = vmul.f32 %v2706, %v2720
  %v2724 = vmul.f32 %v2708, %v2718
  %v2725 = vadd.f32 %v2713, %v2723
  %v2726 = vadd.f32 %v2714, %v2724
  %2727 = vrot.lane.b32.xlu0 %v1440, 47
  %v2728 = vpop.permute.xlu0 %2727
  %2729 = vrot.lane.b32.xlu0 %v1442, 47
  %v2730 = vpop.permute.xlu0 %2729
  %2731 = vrot.lane.b32.xlu0 %v1522, 47
  %v2732 = vpop.permute.xlu0 %2731
  %vm2733 = vcmask 384000
  %v2734 = vsel %vm2733, %v2728, %v2730
  %v2735 = vsel %vm2733, %v2730, %v2732
  %v2738 = vmul.f32 %v1440, %v2734
  %v2739 = vmul.f32 %v1442, %v2735
  %v2740 = vpack.c.bf16 %v2738, %v2738
  %v2741 = vpack.c.bf16 %v2739, %v2739
  %v2743 = vsel %vm1921, %v2741, 0
  %2745 = vmatprep.subr.bf16.mxu0 %v1864
  %2746 = vmatpush1.bf16.msra.mxu0 %v1863
  %2747 = vmatprep.subr.bf16.mxu0 %v1866
  %2748 = vmatpush1.bf16.msra.mxu0 %v1865
  %2749 = vmatprep.subr.bf16.mxu0 %v1868
  %2750 = vmatpush1.bf16.msra.mxu0 %v1867
  %2751 = vmatprep.subr.bf16.mxu0 %v1870
  %2752 = vmatpush1.bf16.msra.mxu0 %v1869
  %2753 = vmatprep.subr.bf16.mxu0 %v1872
  %2754 = vmatpush1.bf16.msra.mxu0 %v1871
  %2755 = vmatprep.subr.bf16.mxu0 %v1874
  %2756 = vmatpush1.bf16.msra.mxu0 %v1873
  %2757 = vmatprep.subr.bf16.mxu0 %v1876
  %2758 = vmatpush1.bf16.msra.mxu0 %v1875
  %2759 = vmatprep.subr.bf16.mxu0 %v1878
  %2760 = vmatpush1.bf16.msra.mxu0 %v1877
  %2761 = vmatprep.subr.bf16.mxu0 %v1880
  %2762 = vmatpush1.bf16.msra.mxu0 %v1879
  %2763 = vmatprep.subr.bf16.mxu0 %v1882
  %2764 = vmatpush1.bf16.msra.mxu0 %v1881
  %2765 = vmatprep.subr.bf16.mxu0 %v1884
  %2766 = vmatpush1.bf16.msra.mxu0 %v1883
  %2767 = vmatprep.subr.bf16.mxu0 %v1886
  %2768 = vmatpush1.bf16.msra.mxu0 %v1885
  %2769 = vmatprep.subr.bf16.mxu0 %v1888
  %2770 = vmatpush1.bf16.msra.mxu0 %v1887
  %2771 = vmatprep.subr.bf16.mxu0 %v1890
  %2772 = vmatpush1.bf16.msra.mxu0 %v1889
  %2773 = vmatprep.subr.bf16.mxu0 %v1932
  %2774 = vmatpush1.bf16.msra.mxu0 %v1929
  %2775 = vmatprep.subr.bf16.mxu0 0
  %2776 = vmatpush1.bf16.msra.mxu0 0
  %2777 = vmatprep.mubr.bf16.mxu0 %v2743
  %2778 = vmatmul.mubr.bf16.gmra.mrb[0].mxu0 %v2740
  %v2779 = vpop.f32.mrb[0].mxu0
  %v2780 = vadd.f32 0.0, %v2779
  %v2781 = vpop.f32.mrb[0].mxu0
  %v2782 = vadd.f32 0.0, %v2781
  %v2783 = vpop.f32.mrb[0].mxu0
  %v2784 = vpop.f32.mrb[0].mxu0
  %2785 = vdwg.mxu0
  %v2786 = vmax.f32 %v2695, %v2780
  %v2787 = vmax.f32 %v2696, %v2782
  %v2788 = vsub.f32 %v2695, %v2786
  %v2789 = vsub.f32 %v2696, %v2787
  %v2790 = vmul.f32 %v2788, 1.442695
  %v2791 = vpow.pop %v2790
  %v2792 = vmul.f32 %v2789, 1.442695
  %v2793 = vpow.pop %v2792
  %v2794 = vsub.f32 %v2780, %v2786
  %v2795 = vsub.f32 %v2782, %v2787
  %v2796 = vmul.f32 %v2794, 1.442695
  %v2797 = vpow.pop %v2796
  %v2798 = vmul.f32 %v2795, 1.442695
  %v2799 = vpow.pop %v2798
  %v2800 = vmul.f32 %v2791, %v2711
  %v2801 = vmul.f32 %v2793, %v2712
  %v2802 = vadd.f32 %v2800, %v2797
  %v2803 = vadd.f32 %v2801, %v2799
  %v2804 = vmul.f32 %v2791, %v2725
  %v2805 = vmul.f32 %v2793, %v2726
  %2806 = vrot.lane.b32.xlu0 %v1604, 109
  %v2807 = vpop.permute.xlu0 %2806
  %2808 = vrot.lane.b32.xlu0 %v1606, 109
  %v2809 = vpop.permute.xlu0 %2808
  %vm2810 = vcmask 891904
  %v2811 = vsel %vm2810, %v2807, %v2809
  %v2814 = vmul.f32 %v2797, %v2811
  %v2815 = vmul.f32 %v2799, %v2809
  %v2816 = vadd.f32 %v2804, %v2814
  %v2817 = vadd.f32 %v2805, %v2815
  %2818 = vrot.lane.b32.xlu0 %v1440, 38
  %v2819 = vpop.permute.xlu0 %2818
  %2820 = vrot.lane.b32.xlu0 %v1442, 38
  %v2821 = vpop.permute.xlu0 %2820
  %2822 = vrot.lane.b32.xlu0 %v1522, 38
  %v2823 = vpop.permute.xlu0 %2822
  %vm2824 = vcmask 310272
  %v2825 = vsel %vm2824, %v2819, %v2821
  %v2826 = vsel %vm2824, %v2821, %v2823
  %v2829 = vmul.f32 %v1440, %v2825
  %v2830 = vmul.f32 %v1442, %v2826
  %v2831 = vpack.c.bf16 %v2829, %v2829
  %v2832 = vpack.c.bf16 %v2830, %v2830
  %v2834 = vsel %vm1921, %v2832, 0
  %2836 = vmatprep.subr.bf16.mxu0 %v1864
  %2837 = vmatpush1.bf16.msra.mxu0 %v1863
  %2838 = vmatprep.subr.bf16.mxu0 %v1866
  %2839 = vmatpush1.bf16.msra.mxu0 %v1865
  %2840 = vmatprep.subr.bf16.mxu0 %v1868
  %2841 = vmatpush1.bf16.msra.mxu0 %v1867
  %2842 = vmatprep.subr.bf16.mxu0 %v1870
  %2843 = vmatpush1.bf16.msra.mxu0 %v1869
  %2844 = vmatprep.subr.bf16.mxu0 %v1872
  %2845 = vmatpush1.bf16.msra.mxu0 %v1871
  %2846 = vmatprep.subr.bf16.mxu0 %v1874
  %2847 = vmatpush1.bf16.msra.mxu0 %v1873
  %2848 = vmatprep.subr.bf16.mxu0 %v1876
  %2849 = vmatpush1.bf16.msra.mxu0 %v1875
  %2850 = vmatprep.subr.bf16.mxu0 %v1878
  %2851 = vmatpush1.bf16.msra.mxu0 %v1877
  %2852 = vmatprep.subr.bf16.mxu0 %v1880
  %2853 = vmatpush1.bf16.msra.mxu0 %v1879
  %2854 = vmatprep.subr.bf16.mxu0 %v1882
  %2855 = vmatpush1.bf16.msra.mxu0 %v1881
  %2856 = vmatprep.subr.bf16.mxu0 %v1884
  %2857 = vmatpush1.bf16.msra.mxu0 %v1883
  %2858 = vmatprep.subr.bf16.mxu0 %v1886
  %2859 = vmatpush1.bf16.msra.mxu0 %v1885
  %2860 = vmatprep.subr.bf16.mxu0 %v1888
  %2861 = vmatpush1.bf16.msra.mxu0 %v1887
  %2862 = vmatprep.subr.bf16.mxu0 %v1890
  %2863 = vmatpush1.bf16.msra.mxu0 %v1889
  %2864 = vmatprep.subr.bf16.mxu0 %v1932
  %2865 = vmatpush1.bf16.msra.mxu0 %v1929
  %2866 = vmatprep.subr.bf16.mxu0 0
  %2867 = vmatpush1.bf16.msra.mxu0 0
  %2868 = vmatprep.mubr.bf16.mxu0 %v2834
  %2869 = vmatmul.mubr.bf16.gmra.mrb[0].mxu0 %v2831
  %v2870 = vpop.f32.mrb[0].mxu0
  %v2871 = vadd.f32 0.0, %v2870
  %v2872 = vpop.f32.mrb[0].mxu0
  %v2873 = vadd.f32 0.0, %v2872
  %v2874 = vpop.f32.mrb[0].mxu0
  %v2875 = vpop.f32.mrb[0].mxu0
  %2876 = vdwg.mxu0
  %v2877 = vmax.f32 %v2786, %v2871
  %v2878 = vmax.f32 %v2787, %v2873
  %v2879 = vsub.f32 %v2786, %v2877
  %v2880 = vsub.f32 %v2787, %v2878
  %v2881 = vmul.f32 %v2879, 1.442695
  %v2882 = vpow.pop %v2881
  %v2883 = vmul.f32 %v2880, 1.442695
  %v2884 = vpow.pop %v2883
  %v2885 = vsub.f32 %v2871, %v2877
  %v2886 = vsub.f32 %v2873, %v2878
  %v2887 = vmul.f32 %v2885, 1.442695
  %v2888 = vpow.pop %v2887
  %v2889 = vmul.f32 %v2886, 1.442695
  %v2890 = vpow.pop %v2889
  %v2891 = vmul.f32 %v2882, %v2802
  %v2892 = vmul.f32 %v2884, %v2803
  %v2893 = vadd.f32 %v2891, %v2888
  %v2894 = vadd.f32 %v2892, %v2890
  %v2895 = vmul.f32 %v2882, %v2816
  %v2896 = vmul.f32 %v2884, %v2817
  %2897 = vrot.lane.b32.xlu0 %v1604, 100
  %v2898 = vpop.permute.xlu0 %2897
  %2899 = vrot.lane.b32.xlu0 %v1606, 100
  %v2900 = vpop.permute.xlu0 %2899
  %vm2901 = vcmask 818176
  %v2902 = vsel %vm2901, %v2898, %v2900
  %v2905 = vmul.f32 %v2888, %v2902
  %v2906 = vmul.f32 %v2890, %v2900
  %v2907 = vadd.f32 %v2895, %v2905
  %v2908 = vadd.f32 %v2896, %v2906
  %2909 = vrot.lane.b32.xlu0 %v1440, 29
  %v2910 = vpop.permute.xlu0 %2909
  %2911 = vrot.lane.b32.xlu0 %v1442, 29
  %v2912 = vpop.permute.xlu0 %2911
  %2913 = vrot.lane.b32.xlu0 %v1522, 29
  %v2914 = vpop.permute.xlu0 %2913
  %vm2915 = vcmask 236544
  %v2916 = vsel %vm2915, %v2910, %v2912
  %v2917 = vsel %vm2915, %v2912, %v2914
  %v2920 = vmul.f32 %v1440, %v2916
  %v2921 = vmul.f32 %v1442, %v2917
  %v2922 = vpack.c.bf16 %v2920, %v2920
  %v2923 = vpack.c.bf16 %v2921, %v2921
  %v2925 = vsel %vm1921, %v2923, 0
  %2927 = vmatprep.subr.bf16.mxu0 %v1864
  %2928 = vmatpush1.bf16.msra.mxu0 %v1863
  %2929 = vmatprep.subr.bf16.mxu0 %v1866
  %2930 = vmatpush1.bf16.msra.mxu0 %v1865
  %2931 = vmatprep.subr.bf16.mxu0 %v1868
  %2932 = vmatpush1.bf16.msra.mxu0 %v1867
  %2933 = vmatprep.subr.bf16.mxu0 %v1870
  %2934 = vmatpush1.bf16.msra.mxu0 %v1869
  %2935 = vmatprep.subr.bf16.mxu0 %v1872
  %2936 = vmatpush1.bf16.msra.mxu0 %v1871
  %2937 = vmatprep.subr.bf16.mxu0 %v1874
  %2938 = vmatpush1.bf16.msra.mxu0 %v1873
  %2939 = vmatprep.subr.bf16.mxu0 %v1876
  %2940 = vmatpush1.bf16.msra.mxu0 %v1875
  %2941 = vmatprep.subr.bf16.mxu0 %v1878
  %2942 = vmatpush1.bf16.msra.mxu0 %v1877
  %2943 = vmatprep.subr.bf16.mxu0 %v1880
  %2944 = vmatpush1.bf16.msra.mxu0 %v1879
  %2945 = vmatprep.subr.bf16.mxu0 %v1882
  %2946 = vmatpush1.bf16.msra.mxu0 %v1881
  %2947 = vmatprep.subr.bf16.mxu0 %v1884
  %2948 = vmatpush1.bf16.msra.mxu0 %v1883
  %2949 = vmatprep.subr.bf16.mxu0 %v1886
  %2950 = vmatpush1.bf16.msra.mxu0 %v1885
  %2951 = vmatprep.subr.bf16.mxu0 %v1888
  %2952 = vmatpush1.bf16.msra.mxu0 %v1887
  %2953 = vmatprep.subr.bf16.mxu0 %v1890
  %2954 = vmatpush1.bf16.msra.mxu0 %v1889
  %2955 = vmatprep.subr.bf16.mxu0 %v1932
  %2956 = vmatpush1.bf16.msra.mxu0 %v1929
  %2957 = vmatprep.subr.bf16.mxu0 0
  %2958 = vmatpush1.bf16.msra.mxu0 0
  %2959 = vmatprep.mubr.bf16.mxu0 %v2925
  %2960 = vmatmul.mubr.bf16.gmra.mrb[0].mxu0 %v2922
  %v2961 = vpop.f32.mrb[0].mxu0
  %v2962 = vadd.f32 0.0, %v2961
  %v2963 = vpop.f32.mrb[0].mxu0
  %v2964 = vadd.f32 0.0, %v2963
  %v2965 = vpop.f32.mrb[0].mxu0
  %v2966 = vpop.f32.mrb[0].mxu0
  %2967 = vdwg.mxu0
  %v2968 = vmax.f32 %v2877, %v2962
  %v2969 = vmax.f32 %v2878, %v2964
  %v2970 = vsub.f32 %v2877, %v2968
  %v2971 = vsub.f32 %v2878, %v2969
  %v2972 = vmul.f32 %v2970, 1.442695
  %v2973 = vpow.pop %v2972
  %v2974 = vmul.f32 %v2971, 1.442695
  %v2975 = vpow.pop %v2974
  %v2976 = vsub.f32 %v2962, %v2968
  %v2977 = vsub.f32 %v2964, %v2969
  %v2978 = vmul.f32 %v2976, 1.442695
  %v2979 = vpow.pop %v2978
  %v2980 = vmul.f32 %v2977, 1.442695
  %v2981 = vpow.pop %v2980
  %v2982 = vmul.f32 %v2973, %v2893
  %v2983 = vmul.f32 %v2975, %v2894
  %v2984 = vadd.f32 %v2982, %v2979
  %v2985 = vadd.f32 %v2983, %v2981
  %v2986 = vmul.f32 %v2973, %v2907
  %v2987 = vmul.f32 %v2975, %v2908
  %2989 = vrot.lane.b32.xlu0 %v1604, 91
  %v2990 = vpop.permute.xlu0 %2989
  %2991 = vrot.lane.b32.xlu0 %v1606, 91
  %v2992 = vpop.permute.xlu0 %2991
  %2993 = vrot.lane.b32.xlu0 %v1686, 91
  %v2994 = vpop.permute.xlu0 %2993
  %vm2995 = vcmask 744448
  %v2996 = vsel %vm2995, %v2990, %v2992
  %v2997 = vsel %vm2995, %v2992, %v2994
  %v3000 = vmul.f32 %v2979, %v2996
  %v3001 = vmul.f32 %v2981, %v2997
  %v3002 = vadd.f32 %v2986, %v3000
  %v3003 = vadd.f32 %v2987, %v3001
  %3004 = vrot.lane.b32.xlu0 %v1440, 20
  %v3005 = vpop.permute.xlu0 %3004
  %3006 = vrot.lane.b32.xlu0 %v1442, 20
  %v3007 = vpop.permute.xlu0 %3006
  %3008 = vrot.lane.b32.xlu0 %v1522, 20
  %v3009 = vpop.permute.xlu0 %3008
  %vm3010 = vcmask 162816
  %v3011 = vsel %vm3010, %v3005, %v3007
  %v3012 = vsel %vm3010, %v3007, %v3009
  %v3015 = vmul.f32 %v1440, %v3011
  %v3016 = vmul.f32 %v1442, %v3012
  %v3017 = vpack.c.bf16 %v3015, %v3015
  %v3018 = vpack.c.bf16 %v3016, %v3016
  %v3020 = vsel %vm1921, %v3018, 0
  %3022 = vmatprep.subr.bf16.mxu0 %v1864
  %3023 = vmatpush1.bf16.msra.mxu0 %v1863
  %3024 = vmatprep.subr.bf16.mxu0 %v1866
  %3025 = vmatpush1.bf16.msra.mxu0 %v1865
  %3026 = vmatprep.subr.bf16.mxu0 %v1868
  %3027 = vmatpush1.bf16.msra.mxu0 %v1867
  %3028 = vmatprep.subr.bf16.mxu0 %v1870
  %3029 = vmatpush1.bf16.msra.mxu0 %v1869
  %3030 = vmatprep.subr.bf16.mxu0 %v1872
  %3031 = vmatpush1.bf16.msra.mxu0 %v1871
  %3032 = vmatprep.subr.bf16.mxu0 %v1874
  %3033 = vmatpush1.bf16.msra.mxu0 %v1873
  %3034 = vmatprep.subr.bf16.mxu0 %v1876
  %3035 = vmatpush1.bf16.msra.mxu0 %v1875
  %3036 = vmatprep.subr.bf16.mxu0 %v1878
  %3037 = vmatpush1.bf16.msra.mxu0 %v1877
  %3038 = vmatprep.subr.bf16.mxu0 %v1880
  %3039 = vmatpush1.bf16.msra.mxu0 %v1879
  %3040 = vmatprep.subr.bf16.mxu0 %v1882
  %3041 = vmatpush1.bf16.msra.mxu0 %v1881
  %3042 = vmatprep.subr.bf16.mxu0 %v1884
  %3043 = vmatpush1.bf16.msra.mxu0 %v1883
  %3044 = vmatprep.subr.bf16.mxu0 %v1886
  %3045 = vmatpush1.bf16.msra.mxu0 %v1885
  %3046 = vmatprep.subr.bf16.mxu0 %v1888
  %3047 = vmatpush1.bf16.msra.mxu0 %v1887
  %3048 = vmatprep.subr.bf16.mxu0 %v1890
  %3049 = vmatpush1.bf16.msra.mxu0 %v1889
  %3050 = vmatprep.subr.bf16.mxu0 %v1932
  %3051 = vmatpush1.bf16.msra.mxu0 %v1929
  %3052 = vmatprep.subr.bf16.mxu0 0
  %3053 = vmatpush1.bf16.msra.mxu0 0
  %3054 = vmatprep.mubr.bf16.mxu0 %v3020
  %3055 = vmatmul.mubr.bf16.gmra.mrb[0].mxu0 %v3017
  %v3056 = vpop.f32.mrb[0].mxu0
  %v3057 = vadd.f32 0.0, %v3056
  %v3058 = vpop.f32.mrb[0].mxu0
  %v3059 = vadd.f32 0.0, %v3058
  %v3060 = vpop.f32.mrb[0].mxu0
  %v3061 = vpop.f32.mrb[0].mxu0
  %3062 = vdwg.mxu0
  %v3063 = vmax.f32 %v2968, %v3057
  %v3064 = vmax.f32 %v2969, %v3059
  %v3065 = vsub.f32 %v2968, %v3063
  %v3066 = vsub.f32 %v2969, %v3064
  %v3067 = vmul.f32 %v3065, 1.442695
  %v3068 = vpow.pop %v3067
  %v3069 = vmul.f32 %v3066, 1.442695
  %v3070 = vpow.pop %v3069
  %v3071 = vsub.f32 %v3057, %v3063
  %v3072 = vsub.f32 %v3059, %v3064
  %v3073 = vmul.f32 %v3071, 1.442695
  %v3074 = vpow.pop %v3073
  %v3075 = vmul.f32 %v3072, 1.442695
  %v3076 = vpow.pop %v3075
  %v3077 = vmul.f32 %v3068, %v2984
  %v3078 = vmul.f32 %v3070, %v2985
  %v3079 = vadd.f32 %v3077, %v3074
  %v3080 = vadd.f32 %v3078, %v3076
  %v3081 = vmul.f32 %v3068, %v3002
  %v3082 = vmul.f32 %v3070, %v3003
  %3083 = vrot.lane.b32.xlu0 %v1604, 82
  %v3084 = vpop.permute.xlu0 %3083
  %3085 = vrot.lane.b32.xlu0 %v1606, 82
  %v3086 = vpop.permute.xlu0 %3085
  %3087 = vrot.lane.b32.xlu0 %v1686, 82
  %v3088 = vpop.permute.xlu0 %3087
  %vm3089 = vcmask 670720
  %v3090 = vsel %vm3089, %v3084, %v3086
  %v3091 = vsel %vm3089, %v3086, %v3088
  %v3094 = vmul.f32 %v3074, %v3090
  %v3095 = vmul.f32 %v3076, %v3091
  %v3096 = vadd.f32 %v3081, %v3094
  %v3097 = vadd.f32 %v3082, %v3095
  %3098 = vrot.lane.b32.xlu0 %v1440, 11
  %v3099 = vpop.permute.xlu0 %3098
  %3100 = vrot.lane.b32.xlu0 %v1442, 11
  %v3101 = vpop.permute.xlu0 %3100
  %3102 = vrot.lane.b32.xlu0 %v1522, 11
  %v3103 = vpop.permute.xlu0 %3102
  %vm3104 = vcmask 89088
  %v3105 = vsel %vm3104, %v3099, %v3101
  %v3106 = vsel %vm3104, %v3101, %v3103
  %v3109 = vmul.f32 %v1440, %v3105
  %v3110 = vmul.f32 %v1442, %v3106
  %v3111 = vpack.c.bf16 %v3109, %v3109
  %v3112 = vpack.c.bf16 %v3110, %v3110
  %v3114 = vsel %vm1921, %v3112, 0
  %3116 = vmatprep.subr.bf16.mxu0 %v1864
  %3117 = vmatpush1.bf16.msra.mxu0 %v1863
  %3118 = vmatprep.subr.bf16.mxu0 %v1866
  %3119 = vmatpush1.bf16.msra.mxu0 %v1865
  %3120 = vmatprep.subr.bf16.mxu0 %v1868
  %3121 = vmatpush1.bf16.msra.mxu0 %v1867
  %3122 = vmatprep.subr.bf16.mxu0 %v1870
  %3123 = vmatpush1.bf16.msra.mxu0 %v1869
  %3124 = vmatprep.subr.bf16.mxu0 %v1872
  %3125 = vmatpush1.bf16.msra.mxu0 %v1871
  %3126 = vmatprep.subr.bf16.mxu0 %v1874
  %3127 = vmatpush1.bf16.msra.mxu0 %v1873
  %3128 = vmatprep.subr.bf16.mxu0 %v1876
  %3129 = vmatpush1.bf16.msra.mxu0 %v1875
  %3130 = vmatprep.subr.bf16.mxu0 %v1878
  %3131 = vmatpush1.bf16.msra.mxu0 %v1877
  %3132 = vmatprep.subr.bf16.mxu0 %v1880
  %3133 = vmatpush1.bf16.msra.mxu0 %v1879
  %3134 = vmatprep.subr.bf16.mxu0 %v1882
  %3135 = vmatpush1.bf16.msra.mxu0 %v1881
  %3136 = vmatprep.subr.bf16.mxu0 %v1884
  %3137 = vmatpush1.bf16.msra.mxu0 %v1883
  %3138 = vmatprep.subr.bf16.mxu0 %v1886
  %3139 = vmatpush1.bf16.msra.mxu0 %v1885
  %3140 = vmatprep.subr.bf16.mxu0 %v1888
  %3141 = vmatpush1.bf16.msra.mxu0 %v1887
  %3142 = vmatprep.subr.bf16.mxu0 %v1890
  %3143 = vmatpush1.bf16.msra.mxu0 %v1889
  %3144 = vmatprep.subr.bf16.mxu0 %v1932
  %3145 = vmatpush1.bf16.msra.mxu0 %v1929
  %3146 = vmatprep.subr.bf16.mxu0 0
  %3147 = vmatpush1.bf16.msra.mxu0 0
  %3148 = vmatprep.mubr.bf16.mxu0 %v3114
  %3149 = vmatmul.mubr.bf16.gmra.mrb[0].mxu0 %v3111
  %v3150 = vpop.f32.mrb[0].mxu0
  %v3151 = vadd.f32 0.0, %v3150
  %v3152 = vpop.f32.mrb[0].mxu0
  %v3153 = vadd.f32 0.0, %v3152
  %v3154 = vpop.f32.mrb[0].mxu0
  %v3155 = vpop.f32.mrb[0].mxu0
  %3156 = vdwg.mxu0
  %v3157 = vmax.f32 %v3063, %v3151
  %v3158 = vmax.f32 %v3064, %v3153
  %v3159 = vsub.f32 %v3063, %v3157
  %v3160 = vsub.f32 %v3064, %v3158
  %v3161 = vmul.f32 %v3159, 1.442695
  %v3162 = vpow.pop %v3161
  %v3163 = vmul.f32 %v3160, 1.442695
  %v3164 = vpow.pop %v3163
  %v3165 = vsub.f32 %v3151, %v3157
  %v3166 = vsub.f32 %v3153, %v3158
  %v3167 = vmul.f32 %v3165, 1.442695
  %v3168 = vpow.pop %v3167
  %v3169 = vmul.f32 %v3166, 1.442695
  %v3170 = vpow.pop %v3169
  %v3171 = vmul.f32 %v3162, %v3079
  %v3172 = vmul.f32 %v3164, %v3080
  %v3173 = vadd.f32 %v3171, %v3168
  %v3174 = vadd.f32 %v3172, %v3170
  %v3175 = vmul.f32 %v3162, %v3096
  %v3176 = vmul.f32 %v3164, %v3097
  %3177 = vrot.lane.b32.xlu0 %v1604, 73
  %v3178 = vpop.permute.xlu0 %3177
  %3179 = vrot.lane.b32.xlu0 %v1606, 73
  %v3180 = vpop.permute.xlu0 %3179
  %3181 = vrot.lane.b32.xlu0 %v1686, 73
  %v3182 = vpop.permute.xlu0 %3181
  %v3183 = vsel %vm1329, %v3178, %v3180
  %v3184 = vsel %vm1329, %v3180, %v3182
  %v3187 = vmul.f32 %v3168, %v3183
  %v3188 = vmul.f32 %v3170, %v3184
  %v3189 = vadd.f32 %v3175, %v3187
  %v3190 = vadd.f32 %v3176, %v3188
  %3191 = vrot.lane.b32.xlu0 %v1440, 2
  %v3192 = vpop.permute.xlu0 %3191
  %3193 = vrot.lane.b32.xlu0 %v1442, 2
  %v3194 = vpop.permute.xlu0 %3193
  %3195 = vrot.lane.b32.xlu0 %v1522, 2
  %v3196 = vpop.permute.xlu0 %3195
  %vm3197 = vcmask 15360
  %v3198 = vsel %vm3197, %v3192, %v3194
  %v3199 = vsel %vm3197, %v3194, %v3196
  %v3202 = vmul.f32 %v1440, %v3198
  %v3203 = vmul.f32 %v1442, %v3199
  %v3204 = vpack.c.bf16 %v3202, %v3202
  %v3205 = vpack.c.bf16 %v3203, %v3203
  %v3207 = vsel %vm1921, %v3205, 0
  %3209 = vmatprep.subr.bf16.mxu0 %v1864
  %3210 = vmatpush1.bf16.msra.mxu0 %v1863
  %3211 = vmatprep.subr.bf16.mxu0 %v1866
  %3212 = vmatpush1.bf16.msra.mxu0 %v1865
  %3213 = vmatprep.subr.bf16.mxu0 %v1868
  %3214 = vmatpush1.bf16.msra.mxu0 %v1867
  %3215 = vmatprep.subr.bf16.mxu0 %v1870
  %3216 = vmatpush1.bf16.msra.mxu0 %v1869
  %3217 = vmatprep.subr.bf16.mxu0 %v1872
  %3218 = vmatpush1.bf16.msra.mxu0 %v1871
  %3219 = vmatprep.subr.bf16.mxu0 %v1874
  %3220 = vmatpush1.bf16.msra.mxu0 %v1873
  %3221 = vmatprep.subr.bf16.mxu0 %v1876
  %3222 = vmatpush1.bf16.msra.mxu0 %v1875
  %3223 = vmatprep.subr.bf16.mxu0 %v1878
  %3224 = vmatpush1.bf16.msra.mxu0 %v1877
  %3225 = vmatprep.subr.bf16.mxu0 %v1880
  %3226 = vmatpush1.bf16.msra.mxu0 %v1879
  %3227 = vmatprep.subr.bf16.mxu0 %v1882
  %3228 = vmatpush1.bf16.msra.mxu0 %v1881
  %3229 = vmatprep.subr.bf16.mxu0 %v1884
  %3230 = vmatpush1.bf16.msra.mxu0 %v1883
  %3231 = vmatprep.subr.bf16.mxu0 %v1886
  %3232 = vmatpush1.bf16.msra.mxu0 %v1885
  %3233 = vmatprep.subr.bf16.mxu0 %v1888
  %3234 = vmatpush1.bf16.msra.mxu0 %v1887
  %3235 = vmatprep.subr.bf16.mxu0 %v1890
  %3236 = vmatpush1.bf16.msra.mxu0 %v1889
  %3237 = vmatprep.subr.bf16.mxu0 %v1932
  %3238 = vmatpush1.bf16.msra.mxu0 %v1929
  %3239 = vmatprep.subr.bf16.mxu0 0
  %3240 = vmatpush1.bf16.msra.mxu0 0
  %3241 = vmatprep.mubr.bf16.mxu0 %v3207
  %3242 = vmatmul.mubr.bf16.gmra.mrb[0].mxu0 %v3204
  %v3243 = vpop.f32.mrb[0].mxu0
  %v3244 = vadd.f32 0.0, %v3243
  %v3245 = vpop.f32.mrb[0].mxu0
  %v3246 = vadd.f32 0.0, %v3245
  %v3247 = vpop.f32.mrb[0].mxu0
  %v3248 = vpop.f32.mrb[0].mxu0
  %3249 = vdwg.mxu0
  %v3250 = vmax.f32 %v3157, %v3244
  %v3251 = vmax.f32 %v3158, %v3246
  %v3252 = vsub.f32 %v3157, %v3250
  %v3253 = vsub.f32 %v3158, %v3251
  %v3254 = vmul.f32 %v3252, 1.442695
  %v3255 = vpow.pop %v3254
  %v3256 = vmul.f32 %v3253, 1.442695
  %v3257 = vpow.pop %v3256
  %v3258 = vsub.f32 %v3244, %v3250
  %v3259 = vsub.f32 %v3246, %v3251
  %v3260 = vmul.f32 %v3258, 1.442695
  %v3261 = vpow.pop %v3260
  %v3262 = vmul.f32 %v3259, 1.442695
  %v3263 = vpow.pop %v3262
  %v3264 = vmul.f32 %v3255, %v3173
  %v3265 = vmul.f32 %v3257, %v3174
  %v3266 = vadd.f32 %v3264, %v3261
  %v3267 = vadd.f32 %v3265, %v3263
  %v3268 = vmul.f32 %v3255, %v3189
  %v3269 = vmul.f32 %v3257, %v3190
  %3270 = vrot.lane.b32.xlu0 %v1604, 64
  %v3271 = vpop.permute.xlu0 %3270
  %3272 = vrot.lane.b32.xlu0 %v1606, 64
  %v3273 = vpop.permute.xlu0 %3272
  %3274 = vrot.lane.b32.xlu0 %v1686, 64
  %v3275 = vpop.permute.xlu0 %3274
  %vm3276 = vcmask 523264
  %v3277 = vsel %vm3276, %v3271, %v3273
  %v3278 = vsel %vm3276, %v3273, %v3275
  %v3281 = vmul.f32 %v3261, %v3277
  %v3282 = vmul.f32 %v3263, %v3278
  %v3283 = vadd.f32 %v3268, %v3281
  %v3284 = vadd.f32 %v3269, %v3282
  %3285 = vrot.lane.b32.xlu0 %v1442, 121
  %v3286 = vpop.permute.xlu0 %3285
  %3287 = vrot.lane.b32.xlu0 %v1522, 121
  %v3288 = vpop.permute.xlu0 %3287
  %vm3289 = vcmask 990208
  %v3290 = vsel %vm3289, %v3286, %v3288
  %v3293 = vmul.f32 %v1440, %v3290
  %v3294 = vmul.f32 %v1442, %v3288
  %v3295 = vpack.c.bf16 %v3293, %v3293
  %v3296 = vpack.c.bf16 %v3294, %v3294
  %v3298 = vsel %vm1921, %v3296, 0
  %3300 = vmatprep.subr.bf16.mxu0 %v1864
  %3301 = vmatpush1.bf16.msra.mxu0 %v1863
  %3302 = vmatprep.subr.bf16.mxu0 %v1866
  %3303 = vmatpush1.bf16.msra.mxu0 %v1865
  %3304 = vmatprep.subr.bf16.mxu0 %v1868
  %3305 = vmatpush1.bf16.msra.mxu0 %v1867
  %3306 = vmatprep.subr.bf16.mxu0 %v1870
  %3307 = vmatpush1.bf16.msra.mxu0 %v1869
  %3308 = vmatprep.subr.bf16.mxu0 %v1872
  %3309 = vmatpush1.bf16.msra.mxu0 %v1871
  %3310 = vmatprep.subr.bf16.mxu0 %v1874
  %3311 = vmatpush1.bf16.msra.mxu0 %v1873
  %3312 = vmatprep.subr.bf16.mxu0 %v1876
  %3313 = vmatpush1.bf16.msra.mxu0 %v1875
  %3314 = vmatprep.subr.bf16.mxu0 %v1878
  %3315 = vmatpush1.bf16.msra.mxu0 %v1877
  %3316 = vmatprep.subr.bf16.mxu0 %v1880
  %3317 = vmatpush1.bf16.msra.mxu0 %v1879
  %3318 = vmatprep.subr.bf16.mxu0 %v1882
  %3319 = vmatpush1.bf16.msra.mxu0 %v1881
  %3320 = vmatprep.subr.bf16.mxu0 %v1884
  %3321 = vmatpush1.bf16.msra.mxu0 %v1883
  %3322 = vmatprep.subr.bf16.mxu0 %v1886
  %3323 = vmatpush1.bf16.msra.mxu0 %v1885
  %3324 = vmatprep.subr.bf16.mxu0 %v1888
  %3325 = vmatpush1.bf16.msra.mxu0 %v1887
  %3326 = vmatprep.subr.bf16.mxu0 %v1890
  %3327 = vmatpush1.bf16.msra.mxu0 %v1889
  %3328 = vmatprep.subr.bf16.mxu0 %v1932
  %3329 = vmatpush1.bf16.msra.mxu0 %v1929
  %3330 = vmatprep.subr.bf16.mxu0 0
  %3331 = vmatpush1.bf16.msra.mxu0 0
  %3332 = vmatprep.mubr.bf16.mxu0 %v3298
  %3333 = vmatmul.mubr.bf16.gmra.mrb[0].mxu0 %v3295
  %v3334 = vpop.f32.mrb[0].mxu0
  %v3335 = vadd.f32 0.0, %v3334
  %v3336 = vpop.f32.mrb[0].mxu0
  %v3337 = vadd.f32 0.0, %v3336
  %v3338 = vpop.f32.mrb[0].mxu0
  %v3339 = vpop.f32.mrb[0].mxu0
  %3340 = vdwg.mxu0
  %v3341 = vmax.f32 %v3250, %v3335
  %v3342 = vmax.f32 %v3251, %v3337
  %v3343 = vsub.f32 %v3250, %v3341
  %v3344 = vsub.f32 %v3251, %v3342
  %v3345 = vmul.f32 %v3343, 1.442695
  %v3346 = vpow.pop %v3345
  %v3347 = vmul.f32 %v3344, 1.442695
  %v3348 = vpow.pop %v3347
  %v3349 = vsub.f32 %v3335, %v3341
  %v3350 = vsub.f32 %v3337, %v3342
  %v3351 = vmul.f32 %v3349, 1.442695
  %v3352 = vpow.pop %v3351
  %v3353 = vmul.f32 %v3350, 1.442695
  %v3354 = vpow.pop %v3353
  %v3355 = vmul.f32 %v3346, %v3266
  %v3356 = vmul.f32 %v3348, %v3267
  %v3357 = vadd.f32 %v3355, %v3352
  %v3358 = vadd.f32 %v3356, %v3354
  %v3359 = vmul.f32 %v3346, %v3283
  %v3360 = vmul.f32 %v3348, %v3284
  %3361 = vrot.lane.b32.xlu0 %v1604, 55
  %v3362 = vpop.permute.xlu0 %3361
  %3363 = vrot.lane.b32.xlu0 %v1606, 55
  %v3364 = vpop.permute.xlu0 %3363
  %3365 = vrot.lane.b32.xlu0 %v1686, 55
  %v3366 = vpop.permute.xlu0 %3365
  %vm3367 = vcmask 449536
  %v3368 = vsel %vm3367, %v3362, %v3364
  %v3369 = vsel %vm3367, %v3364, %v3366
  %v3372 = vmul.f32 %v3352, %v3368
  %v3373 = vmul.f32 %v3354, %v3369
  %v3374 = vadd.f32 %v3359, %v3372
  %v3375 = vadd.f32 %v3360, %v3373
  %3376 = vrot.lane.b32.xlu0 %v1442, 112
  %v3377 = vpop.permute.xlu0 %3376
  %3378 = vrot.lane.b32.xlu0 %v1522, 112
  %v3379 = vpop.permute.xlu0 %3378
  %vm3380 = vcmask 916480
  %v3381 = vsel %vm3380, %v3377, %v3379
  %v3384 = vmul.f32 %v1440, %v3381
  %v3385 = vmul.f32 %v1442, %v3379
  %v3386 = vpack.c.bf16 %v3384, %v3384
  %v3387 = vpack.c.bf16 %v3385, %v3385
  %v3389 = vsel %vm1921, %v3387, 0
  %3391 = vmatprep.subr.bf16.mxu0 %v1864
  %3392 = vmatpush1.bf16.msra.mxu0 %v1863
  %3393 = vmatprep.subr.bf16.mxu0 %v1866
  %3394 = vmatpush1.bf16.msra.mxu0 %v1865
  %3395 = vmatprep.subr.bf16.mxu0 %v1868
  %3396 = vmatpush1.bf16.msra.mxu0 %v1867
  %3397 = vmatprep.subr.bf16.mxu0 %v1870
  %3398 = vmatpush1.bf16.msra.mxu0 %v1869
  %3399 = vmatprep.subr.bf16.mxu0 %v1872
  %3400 = vmatpush1.bf16.msra.mxu0 %v1871
  %3401 = vmatprep.subr.bf16.mxu0 %v1874
  %3402 = vmatpush1.bf16.msra.mxu0 %v1873
  %3403 = vmatprep.subr.bf16.mxu0 %v1876
  %3404 = vmatpush1.bf16.msra.mxu0 %v1875
  %3405 = vmatprep.subr.bf16.mxu0 %v1878
  %3406 = vmatpush1.bf16.msra.mxu0 %v1877
  %3407 = vmatprep.subr.bf16.mxu0 %v1880
  %3408 = vmatpush1.bf16.msra.mxu0 %v1879
  %3409 = vmatprep.subr.bf16.mxu0 %v1882
  %3410 = vmatpush1.bf16.msra.mxu0 %v1881
  %3411 = vmatprep.subr.bf16.mxu0 %v1884
  %3412 = vmatpush1.bf16.msra.mxu0 %v1883
  %3413 = vmatprep.subr.bf16.mxu0 %v1886
  %3414 = vmatpush1.bf16.msra.mxu0 %v1885
  %3415 = vmatprep.subr.bf16.mxu0 %v1888
  %3416 = vmatpush1.bf16.msra.mxu0 %v1887
  %3417 = vmatprep.subr.bf16.mxu0 %v1890
  %3418 = vmatpush1.bf16.msra.mxu0 %v1889
  %3419 = vmatprep.subr.bf16.mxu0 %v1932
  %3420 = vmatpush1.bf16.msra.mxu0 %v1929
  %3421 = vmatprep.subr.bf16.mxu0 0
  %3422 = vmatpush1.bf16.msra.mxu0 0
  %3423 = vmatprep.mubr.bf16.mxu0 %v3389
  %3424 = vmatmul.mubr.bf16.gmra.mrb[0].mxu0 %v3386
  %v3425 = vpop.f32.mrb[0].mxu0
  %v3426 = vadd.f32 0.0, %v3425
  %v3427 = vpop.f32.mrb[0].mxu0
  %v3428 = vadd.f32 0.0, %v3427
  %v3429 = vpop.f32.mrb[0].mxu0
  %v3430 = vpop.f32.mrb[0].mxu0
  %3431 = vdwg.mxu0
  %v3432 = vmax.f32 %v3341, %v3426
  %v3433 = vmax.f32 %v3342, %v3428
  %v3434 = vsub.f32 %v3341, %v3432
  %v3435 = vsub.f32 %v3342, %v3433
  %v3436 = vmul.f32 %v3434, 1.442695
  %v3437 = vpow.pop %v3436
  %v3438 = vmul.f32 %v3435, 1.442695
  %v3439 = vpow.pop %v3438
  %v3440 = vsub.f32 %v3426, %v3432
  %v3441 = vsub.f32 %v3428, %v3433
  %v3442 = vmul.f32 %v3440, 1.442695
  %v3443 = vpow.pop %v3442
  %v3444 = vmul.f32 %v3441, 1.442695
  %v3445 = vpow.pop %v3444
  %v3446 = vmul.f32 %v3437, %v3357
  %v3447 = vmul.f32 %v3439, %v3358
  %v3448 = vadd.f32 %v3446, %v3443
  %v3449 = vadd.f32 %v3447, %v3445
  %v3450 = vmul.f32 %v3437, %v3374
  %v3451 = vmul.f32 %v3439, %v3375
  %3452 = vrot.lane.b32.xlu0 %v1604, 46
  %v3453 = vpop.permute.xlu0 %3452
  %3454 = vrot.lane.b32.xlu0 %v1606, 46
  %v3455 = vpop.permute.xlu0 %3454
  %3456 = vrot.lane.b32.xlu0 %v1686, 46
  %v3457 = vpop.permute.xlu0 %3456
  %vm3458 = vcmask 375808
  %v3459 = vsel %vm3458, %v3453, %v3455
  %v3460 = vsel %vm3458, %v3455, %v3457
  %v3463 = vmul.f32 %v3443, %v3459
  %v3464 = vmul.f32 %v3445, %v3460
  %v3465 = vadd.f32 %v3450, %v3463
  %v3466 = vadd.f32 %v3451, %v3464
  %3467 = vrot.lane.b32.xlu0 %v1442, 103
  %v3468 = vpop.permute.xlu0 %3467
  %3469 = vrot.lane.b32.xlu0 %v1522, 103
  %v3470 = vpop.permute.xlu0 %3469
  %vm3471 = vcmask 842752
  %v3472 = vsel %vm3471, %v3468, %v3470
  %v3475 = vmul.f32 %v1440, %v3472
  %v3476 = vmul.f32 %v1442, %v3470
  %v3477 = vpack.c.bf16 %v3475, %v3475
  %v3478 = vpack.c.bf16 %v3476, %v3476
  %v3480 = vsel %vm1921, %v3478, 0
  %3482 = vmatprep.subr.bf16.mxu0 %v1864
  %3483 = vmatpush1.bf16.msra.mxu0 %v1863
  %3484 = vmatprep.subr.bf16.mxu0 %v1866
  %3485 = vmatpush1.bf16.msra.mxu0 %v1865
  %3486 = vmatprep.subr.bf16.mxu0 %v1868
  %3487 = vmatpush1.bf16.msra.mxu0 %v1867
  %3488 = vmatprep.subr.bf16.mxu0 %v1870
  %3489 = vmatpush1.bf16.msra.mxu0 %v1869
  %3490 = vmatprep.subr.bf16.mxu0 %v1872
  %3491 = vmatpush1.bf16.msra.mxu0 %v1871
  %3492 = vmatprep.subr.bf16.mxu0 %v1874
  %3493 = vmatpush1.bf16.msra.mxu0 %v1873
  %3494 = vmatprep.subr.bf16.mxu0 %v1876
  %3495 = vmatpush1.bf16.msra.mxu0 %v1875
  %3496 = vmatprep.subr.bf16.mxu0 %v1878
  %3497 = vmatpush1.bf16.msra.mxu0 %v1877
  %3498 = vmatprep.subr.bf16.mxu0 %v1880
  %3499 = vmatpush1.bf16.msra.mxu0 %v1879
  %3500 = vmatprep.subr.bf16.mxu0 %v1882
  %3501 = vmatpush1.bf16.msra.mxu0 %v1881
  %3502 = vmatprep.subr.bf16.mxu0 %v1884
  %3503 = vmatpush1.bf16.msra.mxu0 %v1883
  %3504 = vmatprep.subr.bf16.mxu0 %v1886
  %3505 = vmatpush1.bf16.msra.mxu0 %v1885
  %3506 = vmatprep.subr.bf16.mxu0 %v1888
  %3507 = vmatpush1.bf16.msra.mxu0 %v1887
  %3508 = vmatprep.subr.bf16.mxu0 %v1890
  %3509 = vmatpush1.bf16.msra.mxu0 %v1889
  %3510 = vmatprep.subr.bf16.mxu0 %v1932
  %3511 = vmatpush1.bf16.msra.mxu0 %v1929
  %3512 = vmatprep.subr.bf16.mxu0 0
  %3513 = vmatpush1.bf16.msra.mxu0 0
  %3514 = vmatprep.mubr.bf16.mxu0 %v3480
  %3515 = vmatmul.mubr.bf16.gmra.mrb[0].mxu0 %v3477
  %v3516 = vpop.f32.mrb[0].mxu0
  %v3517 = vadd.f32 0.0, %v3516
  %v3518 = vpop.f32.mrb[0].mxu0
  %v3519 = vadd.f32 0.0, %v3518
  %v3520 = vpop.f32.mrb[0].mxu0
  %v3521 = vpop.f32.mrb[0].mxu0
  %3522 = vdwg.mxu0
  %v3523 = vmax.f32 %v3432, %v3517
  %v3524 = vmax.f32 %v3433, %v3519
  %v3525 = vsub.f32 %v3432, %v3523
  %v3526 = vsub.f32 %v3433, %v3524
  %v3527 = vmul.f32 %v3525, 1.442695
  %v3528 = vpow.pop %v3527
  %v3529 = vmul.f32 %v3526, 1.442695
  %v3530 = vpow.pop %v3529
  %v3531 = vsub.f32 %v3517, %v3523
  %v3532 = vsub.f32 %v3519, %v3524
  %v3533 = vmul.f32 %v3531, 1.442695
  %v3534 = vpow.pop %v3533
  %v3535 = vmul.f32 %v3532, 1.442695
  %v3536 = vpow.pop %v3535
  %v3537 = vmul.f32 %v3528, %v3448
  %v3538 = vmul.f32 %v3530, %v3449
  %v3539 = vadd.f32 %v3537, %v3534
  %v3540 = vadd.f32 %v3538, %v3536
  %v3541 = vmul.f32 %v3528, %v3465
  %v3542 = vmul.f32 %v3530, %v3466
  %3543 = vrot.lane.b32.xlu0 %v1604, 37
  %v3544 = vpop.permute.xlu0 %3543
  %3545 = vrot.lane.b32.xlu0 %v1606, 37
  %v3546 = vpop.permute.xlu0 %3545
  %3547 = vrot.lane.b32.xlu0 %v1686, 37
  %v3548 = vpop.permute.xlu0 %3547
  %vm3549 = vcmask 302080
  %v3550 = vsel %vm3549, %v3544, %v3546
  %v3551 = vsel %vm3549, %v3546, %v3548
  %v3554 = vmul.f32 %v3534, %v3550
  %v3555 = vmul.f32 %v3536, %v3551
  %v3556 = vadd.f32 %v3541, %v3554
  %v3557 = vadd.f32 %v3542, %v3555
  %3558 = vrot.lane.b32.xlu0 %v1442, 94
  %v3559 = vpop.permute.xlu0 %3558
  %3560 = vrot.lane.b32.xlu0 %v1522, 94
  %v3561 = vpop.permute.xlu0 %3560
  %3562 = vrot.lane.b32.xlu0 %v1524, 94
  %v3563 = vpop.permute.xlu0 %3562
  %vm3564 = vcmask 769024
  %v3565 = vsel %vm3564, %v3559, %v3561
  %v3566 = vsel %vm3564, %v3561, %v3563
  %v3569 = vmul.f32 %v1440, %v3565
  %v3570 = vmul.f32 %v1442, %v3566
  %v3571 = vpack.c.bf16 %v3569, %v3569
  %v3572 = vpack.c.bf16 %v3570, %v3570
  %v3574 = vsel %vm1921, %v3572, 0
  %3576 = vmatprep.subr.bf16.mxu0 %v1864
  %3577 = vmatpush1.bf16.msra.mxu0 %v1863
  %3578 = vmatprep.subr.bf16.mxu0 %v1866
  %3579 = vmatpush1.bf16.msra.mxu0 %v1865
  %3580 = vmatprep.subr.bf16.mxu0 %v1868
  %3581 = vmatpush1.bf16.msra.mxu0 %v1867
  %3582 = vmatprep.subr.bf16.mxu0 %v1870
  %3583 = vmatpush1.bf16.msra.mxu0 %v1869
  %3584 = vmatprep.subr.bf16.mxu0 %v1872
  %3585 = vmatpush1.bf16.msra.mxu0 %v1871
  %3586 = vmatprep.subr.bf16.mxu0 %v1874
  %3587 = vmatpush1.bf16.msra.mxu0 %v1873
  %3588 = vmatprep.subr.bf16.mxu0 %v1876
  %3589 = vmatpush1.bf16.msra.mxu0 %v1875
  %3590 = vmatprep.subr.bf16.mxu0 %v1878
  %3591 = vmatpush1.bf16.msra.mxu0 %v1877
  %3592 = vmatprep.subr.bf16.mxu0 %v1880
  %3593 = vmatpush1.bf16.msra.mxu0 %v1879
  %3594 = vmatprep.subr.bf16.mxu0 %v1882
  %3595 = vmatpush1.bf16.msra.mxu0 %v1881
  %3596 = vmatprep.subr.bf16.mxu0 %v1884
  %3597 = vmatpush1.bf16.msra.mxu0 %v1883
  %3598 = vmatprep.subr.bf16.mxu0 %v1886
  %3599 = vmatpush1.bf16.msra.mxu0 %v1885
  %3600 = vmatprep.subr.bf16.mxu0 %v1888
  %3601 = vmatpush1.bf16.msra.mxu0 %v1887
  %3602 = vmatprep.subr.bf16.mxu0 %v1890
  %3603 = vmatpush1.bf16.msra.mxu0 %v1889
  %3604 = vmatprep.subr.bf16.mxu0 %v1932
  %3605 = vmatpush1.bf16.msra.mxu0 %v1929
  %3606 = vmatprep.subr.bf16.mxu0 0
  %3607 = vmatpush1.bf16.msra.mxu0 0
  %3608 = vmatprep.mubr.bf16.mxu0 %v3574
  %3609 = vmatmul.mubr.bf16.gmra.mrb[0].mxu0 %v3571
  %v3610 = vpop.f32.mrb[0].mxu0
  %v3611 = vadd.f32 0.0, %v3610
  %v3612 = vpop.f32.mrb[0].mxu0
  %v3613 = vadd.f32 0.0, %v3612
  %v3614 = vpop.f32.mrb[0].mxu0
  %v3615 = vpop.f32.mrb[0].mxu0
  %3616 = vdwg.mxu0
  %v3617 = vmax.f32 %v3523, %v3611
  %v3618 = vmax.f32 %v3524, %v3613
  %v3619 = vsub.f32 %v3523, %v3617
  %v3620 = vsub.f32 %v3524, %v3618
  %v3621 = vmul.f32 %v3619, 1.442695
  %v3622 = vpow.pop %v3621
  %v3623 = vmul.f32 %v3620, 1.442695
  %v3624 = vpow.pop %v3623
  %v3625 = vsub.f32 %v3611, %v3617
  %v3626 = vsub.f32 %v3613, %v3618
  %v3627 = vmul.f32 %v3625, 1.442695
  %v3628 = vpow.pop %v3627
  %v3629 = vmul.f32 %v3626, 1.442695
  %v3630 = vpow.pop %v3629
  %v3631 = vmul.f32 %v3622, %v3539
  %v3632 = vmul.f32 %v3624, %v3540
  %v3633 = vadd.f32 %v3631, %v3628
  %v3634 = vadd.f32 %v3632, %v3630
  %v3635 = vmul.f32 %v3622, %v3556
  %v3636 = vmul.f32 %v3624, %v3557
  %3637 = vrot.lane.b32.xlu0 %v1604, 28
  %v3638 = vpop.permute.xlu0 %3637
  %3639 = vrot.lane.b32.xlu0 %v1606, 28
  %v3640 = vpop.permute.xlu0 %3639
  %3641 = vrot.lane.b32.xlu0 %v1686, 28
  %v3642 = vpop.permute.xlu0 %3641
  %vm3643 = vcmask 228352
  %v3644 = vsel %vm3643, %v3638, %v3640
  %v3645 = vsel %vm3643, %v3640, %v3642
  %v3648 = vmul.f32 %v3628, %v3644
  %v3649 = vmul.f32 %v3630, %v3645
  %v3650 = vadd.f32 %v3635, %v3648
  %v3651 = vadd.f32 %v3636, %v3649
  %3652 = vrot.lane.b32.xlu0 %v1442, 85
  %v3653 = vpop.permute.xlu0 %3652
  %3654 = vrot.lane.b32.xlu0 %v1522, 85
  %v3655 = vpop.permute.xlu0 %3654
  %3656 = vrot.lane.b32.xlu0 %v1524, 85
  %v3657 = vpop.permute.xlu0 %3656
  %vm3658 = vcmask 695296
  %v3659 = vsel %vm3658, %v3653, %v3655
  %v3660 = vsel %vm3658, %v3655, %v3657
  %v3663 = vmul.f32 %v1440, %v3659
  %v3664 = vmul.f32 %v1442, %v3660
  %v3665 = vpack.c.bf16 %v3663, %v3663
  %v3666 = vpack.c.bf16 %v3664, %v3664
  %v3668 = vsel %vm1921, %v3666, 0
  %3670 = vmatprep.subr.bf16.mxu0 %v1864
  %3671 = vmatpush1.bf16.msra.mxu0 %v1863
  %3672 = vmatprep.subr.bf16.mxu0 %v1866
  %3673 = vmatpush1.bf16.msra.mxu0 %v1865
  %3674 = vmatprep.subr.bf16.mxu0 %v1868
  %3675 = vmatpush1.bf16.msra.mxu0 %v1867
  %3676 = vmatprep.subr.bf16.mxu0 %v1870
  %3677 = vmatpush1.bf16.msra.mxu0 %v1869
  %3678 = vmatprep.subr.bf16.mxu0 %v1872
  %3679 = vmatpush1.bf16.msra.mxu0 %v1871
  %3680 = vmatprep.subr.bf16.mxu0 %v1874
  %3681 = vmatpush1.bf16.msra.mxu0 %v1873
  %3682 = vmatprep.subr.bf16.mxu0 %v1876
  %3683 = vmatpush1.bf16.msra.mxu0 %v1875
  %3684 = vmatprep.subr.bf16.mxu0 %v1878
  %3685 = vmatpush1.bf16.msra.mxu0 %v1877
  %3686 = vmatprep.subr.bf16.mxu0 %v1880
  %3687 = vmatpush1.bf16.msra.mxu0 %v1879
  %3688 = vmatprep.subr.bf16.mxu0 %v1882
  %3689 = vmatpush1.bf16.msra.mxu0 %v1881
  %3690 = vmatprep.subr.bf16.mxu0 %v1884
  %3691 = vmatpush1.bf16.msra.mxu0 %v1883
  %3692 = vmatprep.subr.bf16.mxu0 %v1886
  %3693 = vmatpush1.bf16.msra.mxu0 %v1885
  %3694 = vmatprep.subr.bf16.mxu0 %v1888
  %3695 = vmatpush1.bf16.msra.mxu0 %v1887
  %3696 = vmatprep.subr.bf16.mxu0 %v1890
  %3697 = vmatpush1.bf16.msra.mxu0 %v1889
  %3698 = vmatprep.subr.bf16.mxu0 %v1932
  %3699 = vmatpush1.bf16.msra.mxu0 %v1929
  %3700 = vmatprep.subr.bf16.mxu0 0
  %3701 = vmatpush1.bf16.msra.mxu0 0
  %3702 = vmatprep.mubr.bf16.mxu0 %v3668
  %3703 = vmatmul.mubr.bf16.gmra.mrb[0].mxu0 %v3665
  %v3704 = vpop.f32.mrb[0].mxu0
  %v3705 = vadd.f32 0.0, %v3704
  %v3706 = vpop.f32.mrb[0].mxu0
  %v3707 = vadd.f32 0.0, %v3706
  %v3708 = vpop.f32.mrb[0].mxu0
  %v3709 = vpop.f32.mrb[0].mxu0
  %3710 = vdwg.mxu0
  %v3711 = vmax.f32 %v3617, %v3705
  %v3712 = vmax.f32 %v3618, %v3707
  %v3713 = vsub.f32 %v3617, %v3711
  %v3714 = vsub.f32 %v3618, %v3712
  %v3715 = vmul.f32 %v3713, 1.442695
  %v3716 = vpow.pop %v3715
  %v3717 = vmul.f32 %v3714, 1.442695
  %v3718 = vpow.pop %v3717
  %v3719 = vsub.f32 %v3705, %v3711
  %v3720 = vsub.f32 %v3707, %v3712
  %v3721 = vmul.f32 %v3719, 1.442695
  %v3722 = vpow.pop %v3721
  %v3723 = vmul.f32 %v3720, 1.442695
  %v3724 = vpow.pop %v3723
  %v3725 = vmul.f32 %v3716, %v3633
  %v3726 = vmul.f32 %v3718, %v3634
  %v3727 = vadd.f32 %v3725, %v3722
  %v3728 = vadd.f32 %v3726, %v3724
  %v3729 = vmul.f32 %v3716, %v3650
  %v3730 = vmul.f32 %v3718, %v3651
  %3731 = vrot.lane.b32.xlu0 %v1604, 19
  %v3732 = vpop.permute.xlu0 %3731
  %3733 = vrot.lane.b32.xlu0 %v1606, 19
  %v3734 = vpop.permute.xlu0 %3733
  %3735 = vrot.lane.b32.xlu0 %v1686, 19
  %v3736 = vpop.permute.xlu0 %3735
  %vm3737 = vcmask 154624
  %v3738 = vsel %vm3737, %v3732, %v3734
  %v3739 = vsel %vm3737, %v3734, %v3736
  %v3742 = vmul.f32 %v3722, %v3738
  %v3743 = vmul.f32 %v3724, %v3739
  %v3744 = vadd.f32 %v3729, %v3742
  %v3745 = vadd.f32 %v3730, %v3743
  %3746 = vrot.lane.b32.xlu0 %v1442, 76
  %v3747 = vpop.permute.xlu0 %3746
  %3748 = vrot.lane.b32.xlu0 %v1522, 76
  %v3749 = vpop.permute.xlu0 %3748
  %3750 = vrot.lane.b32.xlu0 %v1524, 76
  %v3751 = vpop.permute.xlu0 %3750
  %vm3752 = vcmask 621568
  %v3753 = vsel %vm3752, %v3747, %v3749
  %v3754 = vsel %vm3752, %v3749, %v3751
  %v3757 = vmul.f32 %v1440, %v3753
  %v3758 = vmul.f32 %v1442, %v3754
  %v3759 = vpack.c.bf16 %v3757, %v3757
  %v3760 = vpack.c.bf16 %v3758, %v3758
  %v3762 = vsel %vm1921, %v3760, 0
  %3764 = vmatprep.subr.bf16.mxu0 %v1864
  %3765 = vmatpush1.bf16.msra.mxu0 %v1863
  %3766 = vmatprep.subr.bf16.mxu0 %v1866
  %3767 = vmatpush1.bf16.msra.mxu0 %v1865
  %3768 = vmatprep.subr.bf16.mxu0 %v1868
  %3769 = vmatpush1.bf16.msra.mxu0 %v1867
  %3770 = vmatprep.subr.bf16.mxu0 %v1870
  %3771 = vmatpush1.bf16.msra.mxu0 %v1869
  %3772 = vmatprep.subr.bf16.mxu0 %v1872
  %3773 = vmatpush1.bf16.msra.mxu0 %v1871
  %3774 = vmatprep.subr.bf16.mxu0 %v1874
  %3775 = vmatpush1.bf16.msra.mxu0 %v1873
  %3776 = vmatprep.subr.bf16.mxu0 %v1876
  %3777 = vmatpush1.bf16.msra.mxu0 %v1875
  %3778 = vmatprep.subr.bf16.mxu0 %v1878
  %3779 = vmatpush1.bf16.msra.mxu0 %v1877
  %3780 = vmatprep.subr.bf16.mxu0 %v1880
  %3781 = vmatpush1.bf16.msra.mxu0 %v1879
  %3782 = vmatprep.subr.bf16.mxu0 %v1882
  %3783 = vmatpush1.bf16.msra.mxu0 %v1881
  %3784 = vmatprep.subr.bf16.mxu0 %v1884
  %3785 = vmatpush1.bf16.msra.mxu0 %v1883
  %3786 = vmatprep.subr.bf16.mxu0 %v1886
  %3787 = vmatpush1.bf16.msra.mxu0 %v1885
  %3788 = vmatprep.subr.bf16.mxu0 %v1888
  %3789 = vmatpush1.bf16.msra.mxu0 %v1887
  %3790 = vmatprep.subr.bf16.mxu0 %v1890
  %3791 = vmatpush1.bf16.msra.mxu0 %v1889
  %3792 = vmatprep.subr.bf16.mxu0 %v1932
  %3793 = vmatpush1.bf16.msra.mxu0 %v1929
  %3794 = vmatprep.subr.bf16.mxu0 0
  %3795 = vmatpush1.bf16.msra.mxu0 0
  %3796 = vmatprep.mubr.bf16.mxu0 %v3762
  %3797 = vmatmul.mubr.bf16.gmra.mrb[0].mxu0 %v3759
  %v3798 = vpop.f32.mrb[0].mxu0
  %v3799 = vadd.f32 0.0, %v3798
  %v3800 = vpop.f32.mrb[0].mxu0
  %v3801 = vadd.f32 0.0, %v3800
  %v3802 = vpop.f32.mrb[0].mxu0
  %v3803 = vpop.f32.mrb[0].mxu0
  %3804 = vdwg.mxu0
  %v3805 = vmax.f32 %v3711, %v3799
  %v3806 = vmax.f32 %v3712, %v3801
  %v3807 = vsub.f32 %v3711, %v3805
  %v3808 = vsub.f32 %v3712, %v3806
  %v3809 = vmul.f32 %v3807, 1.442695
  %v3810 = vpow.pop %v3809
  %v3811 = vmul.f32 %v3808, 1.442695
  %v3812 = vpow.pop %v3811
  %v3813 = vsub.f32 %v3799, %v3805
  %v3814 = vsub.f32 %v3801, %v3806
  %v3815 = vmul.f32 %v3813, 1.442695
  %v3816 = vpow.pop %v3815
  %v3817 = vmul.f32 %v3814, 1.442695
  %v3818 = vpow.pop %v3817
  %v3819 = vmul.f32 %v3810, %v3727
  %v3820 = vmul.f32 %v3812, %v3728
  %v3821 = vadd.f32 %v3819, %v3816
  %v3822 = vadd.f32 %v3820, %v3818
  %v3823 = vmul.f32 %v3810, %v3744
  %v3824 = vmul.f32 %v3812, %v3745
  %3825 = vrot.lane.b32.xlu0 %v1604, 10
  %v3826 = vpop.permute.xlu0 %3825
  %3827 = vrot.lane.b32.xlu0 %v1606, 10
  %v3828 = vpop.permute.xlu0 %3827
  %3829 = vrot.lane.b32.xlu0 %v1686, 10
  %v3830 = vpop.permute.xlu0 %3829
  %vm3831 = vcmask 80896
  %v3832 = vsel %vm3831, %v3826, %v3828
  %v3833 = vsel %vm3831, %v3828, %v3830
  %v3836 = vmul.f32 %v3816, %v3832
  %v3837 = vmul.f32 %v3818, %v3833
  %v3838 = vadd.f32 %v3823, %v3836
  %v3839 = vadd.f32 %v3824, %v3837
  %3840 = vrot.lane.b32.xlu0 %v1442, 67
  %v3841 = vpop.permute.xlu0 %3840
  %3842 = vrot.lane.b32.xlu0 %v1522, 67
  %v3843 = vpop.permute.xlu0 %3842
  %3844 = vrot.lane.b32.xlu0 %v1524, 67
  %v3845 = vpop.permute.xlu0 %3844
  %vm3846 = vcmask 547840
  %v3847 = vsel %vm3846, %v3841, %v3843
  %v3848 = vsel %vm3846, %v3843, %v3845
  %v3851 = vmul.f32 %v1440, %v3847
  %v3852 = vmul.f32 %v1442, %v3848
  %v3853 = vpack.c.bf16 %v3851, %v3851
  %v3854 = vpack.c.bf16 %v3852, %v3852
  %v3856 = vsel %vm1921, %v3854, 0
  %3858 = vmatprep.subr.bf16.mxu0 %v1864
  %3859 = vmatpush1.bf16.msra.mxu0 %v1863
  %3860 = vmatprep.subr.bf16.mxu0 %v1866
  %3861 = vmatpush1.bf16.msra.mxu0 %v1865
  %3862 = vmatprep.subr.bf16.mxu0 %v1868
  %3863 = vmatpush1.bf16.msra.mxu0 %v1867
  %3864 = vmatprep.subr.bf16.mxu0 %v1870
  %3865 = vmatpush1.bf16.msra.mxu0 %v1869
  %3866 = vmatprep.subr.bf16.mxu0 %v1872
  %3867 = vmatpush1.bf16.msra.mxu0 %v1871
  %3868 = vmatprep.subr.bf16.mxu0 %v1874
  %3869 = vmatpush1.bf16.msra.mxu0 %v1873
  %3870 = vmatprep.subr.bf16.mxu0 %v1876
  %3871 = vmatpush1.bf16.msra.mxu0 %v1875
  %3872 = vmatprep.subr.bf16.mxu0 %v1878
  %3873 = vmatpush1.bf16.msra.mxu0 %v1877
  %3874 = vmatprep.subr.bf16.mxu0 %v1880
  %3875 = vmatpush1.bf16.msra.mxu0 %v1879
  %3876 = vmatprep.subr.bf16.mxu0 %v1882
  %3877 = vmatpush1.bf16.msra.mxu0 %v1881
  %3878 = vmatprep.subr.bf16.mxu0 %v1884
  %3879 = vmatpush1.bf16.msra.mxu0 %v1883
  %3880 = vmatprep.subr.bf16.mxu0 %v1886
  %3881 = vmatpush1.bf16.msra.mxu0 %v1885
  %3882 = vmatprep.subr.bf16.mxu0 %v1888
  %3883 = vmatpush1.bf16.msra.mxu0 %v1887
  %3884 = vmatprep.subr.bf16.mxu0 %v1890
  %3885 = vmatpush1.bf16.msra.mxu0 %v1889
  %3886 = vmatprep.subr.bf16.mxu0 %v1932
  %3887 = vmatpush1.bf16.msra.mxu0 %v1929
  %3888 = vmatprep.subr.bf16.mxu0 0
  %3889 = vmatpush1.bf16.msra.mxu0 0
  %3890 = vmatprep.mubr.bf16.mxu0 %v3856
  %3891 = vmatmul.mubr.bf16.gmra.mrb[0].mxu0 %v3853
  %v3892 = vpop.f32.mrb[0].mxu0
  %v3893 = vadd.f32 0.0, %v3892
  %v3894 = vpop.f32.mrb[0].mxu0
  %v3895 = vadd.f32 0.0, %v3894
  %v3896 = vpop.f32.mrb[0].mxu0
  %v3897 = vpop.f32.mrb[0].mxu0
  %3898 = vdwg.mxu0
  %v3899 = vmax.f32 %v3805, %v3893
  %v3900 = vmax.f32 %v3806, %v3895
  %v3901 = vsub.f32 %v3805, %v3899
  %v3902 = vsub.f32 %v3806, %v3900
  %v3903 = vmul.f32 %v3901, 1.442695
  %v3904 = vpow.pop %v3903
  %v3905 = vmul.f32 %v3902, 1.442695
  %v3906 = vpow.pop %v3905
  %v3907 = vsub.f32 %v3893, %v3899
  %v3908 = vsub.f32 %v3895, %v3900
  %v3909 = vmul.f32 %v3907, 1.442695
  %v3910 = vpow.pop %v3909
  %v3911 = vmul.f32 %v3908, 1.442695
  %v3912 = vpow.pop %v3911
  %v3913 = vmul.f32 %v3904, %v3821
  %v3914 = vmul.f32 %v3906, %v3822
  %v3915 = vadd.f32 %v3913, %v3910
  %v3916 = vadd.f32 %v3914, %v3912
  %v3917 = vmul.f32 %v3904, %v3838
  %v3918 = vmul.f32 %v3906, %v3839
  %3919 = vrot.lane.b32.xlu0 %v1604, 1
  %v3920 = vpop.permute.xlu0 %3919
  %3921 = vrot.lane.b32.xlu0 %v1606, 1
  %v3922 = vpop.permute.xlu0 %3921
  %3923 = vrot.lane.b32.xlu0 %v1686, 1
  %v3924 = vpop.permute.xlu0 %3923
  %vm3925 = vcmask 7168
  %v3926 = vsel %vm3925, %v3920, %v3922
  %v3927 = vsel %vm3925, %v3922, %v3924
  %v3930 = vmul.f32 %v3910, %v3926
  %v3931 = vmul.f32 %v3912, %v3927
  %v3932 = vadd.f32 %v3917, %v3930
  %v3933 = vadd.f32 %v3918, %v3931
  %3934 = vrot.lane.b32.xlu0 %v1442, 58
  %v3935 = vpop.permute.xlu0 %3934
  %3936 = vrot.lane.b32.xlu0 %v1522, 58
  %v3937 = vpop.permute.xlu0 %3936
  %3938 = vrot.lane.b32.xlu0 %v1524, 58
  %v3939 = vpop.permute.xlu0 %3938
  %vm3940 = vcmask 474112
  %v3941 = vsel %vm3940, %v3935, %v3937
  %v3942 = vsel %vm3940, %v3937, %v3939
  %v3945 = vmul.f32 %v1440, %v3941
  %v3946 = vmul.f32 %v1442, %v3942
  %v3947 = vpack.c.bf16 %v3945, %v3945
  %v3948 = vpack.c.bf16 %v3946, %v3946
  %v3950 = vsel %vm1921, %v3948, 0
  %3952 = vmatprep.subr.bf16.mxu0 %v1864
  %3953 = vmatpush1.bf16.msra.mxu0 %v1863
  %3954 = vmatprep.subr.bf16.mxu0 %v1866
  %3955 = vmatpush1.bf16.msra.mxu0 %v1865
  %3956 = vmatprep.subr.bf16.mxu0 %v1868
  %3957 = vmatpush1.bf16.msra.mxu0 %v1867
  %3958 = vmatprep.subr.bf16.mxu0 %v1870
  %3959 = vmatpush1.bf16.msra.mxu0 %v1869
  %3960 = vmatprep.subr.bf16.mxu0 %v1872
  %3961 = vmatpush1.bf16.msra.mxu0 %v1871
  %3962 = vmatprep.subr.bf16.mxu0 %v1874
  %3963 = vmatpush1.bf16.msra.mxu0 %v1873
  %3964 = vmatprep.subr.bf16.mxu0 %v1876
  %3965 = vmatpush1.bf16.msra.mxu0 %v1875
  %3966 = vmatprep.subr.bf16.mxu0 %v1878
  %3967 = vmatpush1.bf16.msra.mxu0 %v1877
  %3968 = vmatprep.subr.bf16.mxu0 %v1880
  %3969 = vmatpush1.bf16.msra.mxu0 %v1879
  %3970 = vmatprep.subr.bf16.mxu0 %v1882
  %3971 = vmatpush1.bf16.msra.mxu0 %v1881
  %3972 = vmatprep.subr.bf16.mxu0 %v1884
  %3973 = vmatpush1.bf16.msra.mxu0 %v1883
  %3974 = vmatprep.subr.bf16.mxu0 %v1886
  %3975 = vmatpush1.bf16.msra.mxu0 %v1885
  %3976 = vmatprep.subr.bf16.mxu0 %v1888
  %3977 = vmatpush1.bf16.msra.mxu0 %v1887
  %3978 = vmatprep.subr.bf16.mxu0 %v1890
  %3979 = vmatpush1.bf16.msra.mxu0 %v1889
  %3980 = vmatprep.subr.bf16.mxu0 %v1932
  %3981 = vmatpush1.bf16.msra.mxu0 %v1929
  %3982 = vmatprep.subr.bf16.mxu0 0
  %3983 = vmatpush1.bf16.msra.mxu0 0
  %3984 = vmatprep.mubr.bf16.mxu0 %v3950
  %3985 = vmatmul.mubr.bf16.gmra.mrb[0].mxu0 %v3947
  %v3986 = vpop.f32.mrb[0].mxu0
  %v3987 = vadd.f32 0.0, %v3986
  %v3988 = vpop.f32.mrb[0].mxu0
  %v3989 = vadd.f32 0.0, %v3988
  %v3990 = vpop.f32.mrb[0].mxu0
  %v3991 = vpop.f32.mrb[0].mxu0
  %3992 = vdwg.mxu0
  %v3993 = vmax.f32 %v3899, %v3987
  %v3994 = vmax.f32 %v3900, %v3989
  %v3995 = vsub.f32 %v3899, %v3993
  %v3996 = vsub.f32 %v3900, %v3994
  %v3997 = vmul.f32 %v3995, 1.442695
  %v3998 = vpow.pop %v3997
  %v3999 = vmul.f32 %v3996, 1.442695
  %v4000 = vpow.pop %v3999
  %v4001 = vsub.f32 %v3987, %v3993
  %v4002 = vsub.f32 %v3989, %v3994
  %v4003 = vmul.f32 %v4001, 1.442695
  %v4004 = vpow.pop %v4003
  %v4005 = vmul.f32 %v4002, 1.442695
  %v4006 = vpow.pop %v4005
  %v4007 = vmul.f32 %v3998, %v3915
  %v4008 = vmul.f32 %v4000, %v3916
  %v4009 = vadd.f32 %v4007, %v4004
  %v4010 = vadd.f32 %v4008, %v4006
  %v4011 = vmul.f32 %v3998, %v3932
  %v4012 = vmul.f32 %v4000, %v3933
  %4013 = vrot.lane.b32.xlu0 %v1606, 120
  %v4014 = vpop.permute.xlu0 %4013
  %4015 = vrot.lane.b32.xlu0 %v1686, 120
  %v4016 = vpop.permute.xlu0 %4015
  %vm4017 = vcmask 982016
  %v4018 = vsel %vm4017, %v4014, %v4016
  %v4021 = vmul.f32 %v4004, %v4018
  %v4022 = vmul.f32 %v4006, %v4016
  %v4023 = vadd.f32 %v4011, %v4021
  %v4024 = vadd.f32 %v4012, %v4022
  %4025 = vrot.lane.b32.xlu0 %v1442, 49
  %v4026 = vpop.permute.xlu0 %4025
  %4027 = vrot.lane.b32.xlu0 %v1522, 49
  %v4028 = vpop.permute.xlu0 %4027
  %4029 = vrot.lane.b32.xlu0 %v1524, 49
  %v4030 = vpop.permute.xlu0 %4029
  %vm4031 = vcmask 400384
  %v4032 = vsel %vm4031, %v4026, %v4028
  %v4033 = vsel %vm4031, %v4028, %v4030
  %v4036 = vmul.f32 %v1440, %v4032
  %v4037 = vmul.f32 %v1442, %v4033
  %v4038 = vpack.c.bf16 %v4036, %v4036
  %v4039 = vpack.c.bf16 %v4037, %v4037
  %v4041 = vsel %vm1921, %v4039, 0
  %4043 = vmatprep.subr.bf16.mxu0 %v1864
  %4044 = vmatpush1.bf16.msra.mxu0 %v1863
  %4045 = vmatprep.subr.bf16.mxu0 %v1866
  %4046 = vmatpush1.bf16.msra.mxu0 %v1865
  %4047 = vmatprep.subr.bf16.mxu0 %v1868
  %4048 = vmatpush1.bf16.msra.mxu0 %v1867
  %4049 = vmatprep.subr.bf16.mxu0 %v1870
  %4050 = vmatpush1.bf16.msra.mxu0 %v1869
  %4051 = vmatprep.subr.bf16.mxu0 %v1872
  %4052 = vmatpush1.bf16.msra.mxu0 %v1871
  %4053 = vmatprep.subr.bf16.mxu0 %v1874
  %4054 = vmatpush1.bf16.msra.mxu0 %v1873
  %4055 = vmatprep.subr.bf16.mxu0 %v1876
  %4056 = vmatpush1.bf16.msra.mxu0 %v1875
  %4057 = vmatprep.subr.bf16.mxu0 %v1878
  %4058 = vmatpush1.bf16.msra.mxu0 %v1877
  %4059 = vmatprep.subr.bf16.mxu0 %v1880
  %4060 = vmatpush1.bf16.msra.mxu0 %v1879
  %4061 = vmatprep.subr.bf16.mxu0 %v1882
  %4062 = vmatpush1.bf16.msra.mxu0 %v1881
  %4063 = vmatprep.subr.bf16.mxu0 %v1884
  %4064 = vmatpush1.bf16.msra.mxu0 %v1883
  %4065 = vmatprep.subr.bf16.mxu0 %v1886
  %4066 = vmatpush1.bf16.msra.mxu0 %v1885
  %4067 = vmatprep.subr.bf16.mxu0 %v1888
  %4068 = vmatpush1.bf16.msra.mxu0 %v1887
  %4069 = vmatprep.subr.bf16.mxu0 %v1890
  %4070 = vmatpush1.bf16.msra.mxu0 %v1889
  %4071 = vmatprep.subr.bf16.mxu0 %v1932
  %4072 = vmatpush1.bf16.msra.mxu0 %v1929
  %4073 = vmatprep.subr.bf16.mxu0 0
  %4074 = vmatpush1.bf16.msra.mxu0 0
  %4075 = vmatprep.mubr.bf16.mxu0 %v4041
  %4076 = vmatmul.mubr.bf16.gmra.mrb[0].mxu0 %v4038
  %v4077 = vpop.f32.mrb[0].mxu0
  %v4078 = vadd.f32 0.0, %v4077
  %v4079 = vpop.f32.mrb[0].mxu0
  %v4080 = vadd.f32 0.0, %v4079
  %v4081 = vpop.f32.mrb[0].mxu0
  %v4082 = vpop.f32.mrb[0].mxu0
  %4083 = vdwg.mxu0
  %v4084 = vmax.f32 %v3993, %v4078
  %v4085 = vmax.f32 %v3994, %v4080
  %v4086 = vsub.f32 %v3993, %v4084
  %v4087 = vsub.f32 %v3994, %v4085
  %v4088 = vmul.f32 %v4086, 1.442695
  %v4089 = vpow.pop %v4088
  %v4090 = vmul.f32 %v4087, 1.442695
  %v4091 = vpow.pop %v4090
  %v4092 = vsub.f32 %v4078, %v4084
  %v4093 = vsub.f32 %v4080, %v4085
  %v4094 = vmul.f32 %v4092, 1.442695
  %v4095 = vpow.pop %v4094
  %v4096 = vmul.f32 %v4093, 1.442695
  %v4097 = vpow.pop %v4096
  %v4098 = vmul.f32 %v4089, %v4009
  %v4099 = vmul.f32 %v4091, %v4010
  %v4100 = vadd.f32 %v4098, %v4095
  %v4101 = vadd.f32 %v4099, %v4097
  %v4102 = vmul.f32 %v4089, %v4023
  %v4103 = vmul.f32 %v4091, %v4024
  %4104 = vrot.lane.b32.xlu0 %v1606, 111
  %v4105 = vpop.permute.xlu0 %4104
  %4106 = vrot.lane.b32.xlu0 %v1686, 111
  %v4107 = vpop.permute.xlu0 %4106
  %vm4108 = vcmask 908288
  %v4109 = vsel %vm4108, %v4105, %v4107
  %v4112 = vmul.f32 %v4095, %v4109
  %v4113 = vmul.f32 %v4097, %v4107
  %v4114 = vadd.f32 %v4102, %v4112
  %v4115 = vadd.f32 %v4103, %v4113
  %4116 = vrot.lane.b32.xlu0 %v1442, 40
  %v4117 = vpop.permute.xlu0 %4116
  %4118 = vrot.lane.b32.xlu0 %v1522, 40
  %v4119 = vpop.permute.xlu0 %4118
  %4120 = vrot.lane.b32.xlu0 %v1524, 40
  %v4121 = vpop.permute.xlu0 %4120
  %vm4122 = vcmask 326656
  %v4123 = vsel %vm4122, %v4117, %v4119
  %v4124 = vsel %vm4122, %v4119, %v4121
  %v4127 = vmul.f32 %v1440, %v4123
  %v4128 = vmul.f32 %v1442, %v4124
  %v4129 = vpack.c.bf16 %v4127, %v4127
  %v4130 = vpack.c.bf16 %v4128, %v4128
  %v4132 = vsel %vm1921, %v4130, 0
  %4134 = vmatprep.subr.bf16.mxu0 %v1864
  %4135 = vmatpush1.bf16.msra.mxu0 %v1863
  %4136 = vmatprep.subr.bf16.mxu0 %v1866
  %4137 = vmatpush1.bf16.msra.mxu0 %v1865
  %4138 = vmatprep.subr.bf16.mxu0 %v1868
  %4139 = vmatpush1.bf16.msra.mxu0 %v1867
  %4140 = vmatprep.subr.bf16.mxu0 %v1870
  %4141 = vmatpush1.bf16.msra.mxu0 %v1869
  %4142 = vmatprep.subr.bf16.mxu0 %v1872
  %4143 = vmatpush1.bf16.msra.mxu0 %v1871
  %4144 = vmatprep.subr.bf16.mxu0 %v1874
  %4145 = vmatpush1.bf16.msra.mxu0 %v1873
  %4146 = vmatprep.subr.bf16.mxu0 %v1876
  %4147 = vmatpush1.bf16.msra.mxu0 %v1875
  %4148 = vmatprep.subr.bf16.mxu0 %v1878
  %4149 = vmatpush1.bf16.msra.mxu0 %v1877
  %4150 = vmatprep.subr.bf16.mxu0 %v1880
  %4151 = vmatpush1.bf16.msra.mxu0 %v1879
  %4152 = vmatprep.subr.bf16.mxu0 %v1882
  %4153 = vmatpush1.bf16.msra.mxu0 %v1881
  %4154 = vmatprep.subr.bf16.mxu0 %v1884
  %4155 = vmatpush1.bf16.msra.mxu0 %v1883
  %4156 = vmatprep.subr.bf16.mxu0 %v1886
  %4157 = vmatpush1.bf16.msra.mxu0 %v1885
  %4158 = vmatprep.subr.bf16.mxu0 %v1888
  %4159 = vmatpush1.bf16.msra.mxu0 %v1887
  %4160 = vmatprep.subr.bf16.mxu0 %v1890
  %4161 = vmatpush1.bf16.msra.mxu0 %v1889
  %4162 = vmatprep.subr.bf16.mxu0 %v1932
  %4163 = vmatpush1.bf16.msra.mxu0 %v1929
  %4164 = vmatprep.subr.bf16.mxu0 0
  %4165 = vmatpush1.bf16.msra.mxu0 0
  %4166 = vmatprep.mubr.bf16.mxu0 %v4132
  %4167 = vmatmul.mubr.bf16.gmra.mrb[0].mxu0 %v4129
  %v4168 = vpop.f32.mrb[0].mxu0
  %v4169 = vadd.f32 0.0, %v4168
  %v4170 = vpop.f32.mrb[0].mxu0
  %v4171 = vadd.f32 0.0, %v4170
  %v4172 = vpop.f32.mrb[0].mxu0
  %v4173 = vpop.f32.mrb[0].mxu0
  %4174 = vdwg.mxu0
  %v4175 = vmax.f32 %v4084, %v4169
  %v4176 = vmax.f32 %v4085, %v4171
  %v4177 = vsub.f32 %v4084, %v4175
  %v4178 = vsub.f32 %v4085, %v4176
  %v4179 = vmul.f32 %v4177, 1.442695
  %v4180 = vpow.pop %v4179
  %v4181 = vmul.f32 %v4178, 1.442695
  %v4182 = vpow.pop %v4181
  %v4183 = vsub.f32 %v4169, %v4175
  %v4184 = vsub.f32 %v4171, %v4176
  %v4185 = vmul.f32 %v4183, 1.442695
  %v4186 = vpow.pop %v4185
  %v4187 = vmul.f32 %v4184, 1.442695
  %v4188 = vpow.pop %v4187
  %v4189 = vmul.f32 %v4180, %v4100
  %v4190 = vmul.f32 %v4182, %v4101
  %v4191 = vadd.f32 %v4189, %v4186
  %v4192 = vadd.f32 %v4190, %v4188
  %v4193 = vmul.f32 %v4180, %v4114
  %v4194 = vmul.f32 %v4182, %v4115
  %4195 = vrot.lane.b32.xlu0 %v1606, 102
  %v4196 = vpop.permute.xlu0 %4195
  %4197 = vrot.lane.b32.xlu0 %v1686, 102
  %v4198 = vpop.permute.xlu0 %4197
  %vm4199 = vcmask 834560
  %v4200 = vsel %vm4199, %v4196, %v4198
  %v4203 = vmul.f32 %v4186, %v4200
  %v4204 = vmul.f32 %v4188, %v4198
  %v4205 = vadd.f32 %v4193, %v4203
  %v4206 = vadd.f32 %v4194, %v4204
  %v4207 = vrcp.pop %v4191
  %v4208 = vrcp.pop %v4192
  %v4209 = vmul.f32 %v4205, %v4207
  %v4210 = vmul.f32 %v4206, %v4208
  %4213 = vrot.lane.b32.xlu0 %v1688, 124
  %v4214 = vpop.permute.xlu0 %4213
  %4215 = vrot.lane.b32.xlu0 %v1767, 124
  %v4216 = vpop.permute.xlu0 %4215
  %vm4217 = vcmask 1014784
  %v4218 = vsel %vm4217, %v4214, %v4216
  %v4221 = vadd.f32 %v4209, %v4218
  %v4222 = vadd.f32 %v4210, %v4216
  %v4223 = vpack.c.bf16 %v4221, %v4221
  %v4224 = vpack.c.bf16 %v4222, %v4222
  %v4226 = vsel %vm1921, %v4224, 0
  %4228 = vmatprep.subr.bf16.mxu0 %v1864
  %4229 = vmatpush1.bf16.msra.mxu0 %v1863
  %4230 = vmatprep.subr.bf16.mxu0 %v1866
  %4231 = vmatpush1.bf16.msra.mxu0 %v1865
  %4232 = vmatprep.subr.bf16.mxu0 %v1868
  %4233 = vmatpush1.bf16.msra.mxu0 %v1867
  %4234 = vmatprep.subr.bf16.mxu0 %v1870
  %4235 = vmatpush1.bf16.msra.mxu0 %v1869
  %4236 = vmatprep.subr.bf16.mxu0 %v1872
  %4237 = vmatpush1.bf16.msra.mxu0 %v1871
  %4238 = vmatprep.subr.bf16.mxu0 %v1874
  %4239 = vmatpush1.bf16.msra.mxu0 %v1873
  %4240 = vmatprep.subr.bf16.mxu0 %v1876
  %4241 = vmatpush1.bf16.msra.mxu0 %v1875
  %4242 = vmatprep.subr.bf16.mxu0 %v1878
  %4243 = vmatpush1.bf16.msra.mxu0 %v1877
  %4244 = vmatprep.subr.bf16.mxu0 %v1880
  %4245 = vmatpush1.bf16.msra.mxu0 %v1879
  %4246 = vmatprep.subr.bf16.mxu0 %v1882
  %4247 = vmatpush1.bf16.msra.mxu0 %v1881
  %4248 = vmatprep.subr.bf16.mxu0 %v1884
  %4249 = vmatpush1.bf16.msra.mxu0 %v1883
  %4250 = vmatprep.subr.bf16.mxu0 %v1886
  %4251 = vmatpush1.bf16.msra.mxu0 %v1885
  %4252 = vmatprep.subr.bf16.mxu0 %v1888
  %4253 = vmatpush1.bf16.msra.mxu0 %v1887
  %4254 = vmatprep.subr.bf16.mxu0 %v1890
  %4255 = vmatpush1.bf16.msra.mxu0 %v1889
  %4256 = vmatprep.subr.bf16.mxu0 %v1932
  %4257 = vmatpush1.bf16.msra.mxu0 %v1929
  %4258 = vmatprep.subr.bf16.mxu0 0
  %4259 = vmatpush1.bf16.msra.mxu0 0
  %4260 = vmatprep.mubr.bf16.mxu0 %v4226
  %4261 = vmatmul.mubr.bf16.gmra.mrb[0].mxu0 %v4223
  %v4262 = vpop.f32.mrb[0].mxu0
  %v4263 = vadd.f32 0.0, %v4262
  %v4264 = vpop.f32.mrb[0].mxu0
  %v4265 = vadd.f32 0.0, %v4264
  %v4266 = vpop.f32.mrb[0].mxu0
  %v4267 = vpop.f32.mrb[0].mxu0
  %4268 = vdwg.mxu0
  %v4269 = vmul.f32 %v4263, 0.11111111
  %v4270 = vmul.f32 %v4265, 0.11111111
  %v4271 = vsub.f32 %v4221, %v4269
  %v4272 = vsub.f32 %v4222, %v4270
  %v4273 = vmul.f32 %v4271, %v4271
  %v4274 = vmul.f32 %v4272, %v4272
  %v4275 = vpack.c.bf16 %v4273, %v4273
  %v4276 = vpack.c.bf16 %v4274, %v4274
  %v4278 = vsel %vm1921, %v4276, 0
  %4280 = vmatprep.subr.bf16.mxu0 %v1864
  %4281 = vmatpush1.bf16.msra.mxu0 %v1863
  %4282 = vmatprep.subr.bf16.mxu0 %v1866
  %4283 = vmatpush1.bf16.msra.mxu0 %v1865
  %4284 = vmatprep.subr.bf16.mxu0 %v1868
  %4285 = vmatpush1.bf16.msra.mxu0 %v1867
  %4286 = vmatprep.subr.bf16.mxu0 %v1870
  %4287 = vmatpush1.bf16.msra.mxu0 %v1869
  %4288 = vmatprep.subr.bf16.mxu0 %v1872
  %4289 = vmatpush1.bf16.msra.mxu0 %v1871
  %4290 = vmatprep.subr.bf16.mxu0 %v1874
  %4291 = vmatpush1.bf16.msra.mxu0 %v1873
  %4292 = vmatprep.subr.bf16.mxu0 %v1876
  %4293 = vmatpush1.bf16.msra.mxu0 %v1875
  %4294 = vmatprep.subr.bf16.mxu0 %v1878
  %4295 = vmatpush1.bf16.msra.mxu0 %v1877
  %4296 = vmatprep.subr.bf16.mxu0 %v1880
  %4297 = vmatpush1.bf16.msra.mxu0 %v1879
  %4298 = vmatprep.subr.bf16.mxu0 %v1882
  %4299 = vmatpush1.bf16.msra.mxu0 %v1881
  %4300 = vmatprep.subr.bf16.mxu0 %v1884
  %4301 = vmatpush1.bf16.msra.mxu0 %v1883
  %4302 = vmatprep.subr.bf16.mxu0 %v1886
  %4303 = vmatpush1.bf16.msra.mxu0 %v1885
  %4304 = vmatprep.subr.bf16.mxu0 %v1888
  %4305 = vmatpush1.bf16.msra.mxu0 %v1887
  %4306 = vmatprep.subr.bf16.mxu0 %v1890
  %4307 = vmatpush1.bf16.msra.mxu0 %v1889
  %4308 = vmatprep.subr.bf16.mxu0 %v1932
  %4309 = vmatpush1.bf16.msra.mxu0 %v1929
  %4310 = vmatprep.subr.bf16.mxu0 0
  %4311 = vmatpush1.bf16.msra.mxu0 0
  %4312 = vmatprep.mubr.bf16.mxu0 %v4278
  %4313 = vmatmul.mubr.bf16.gmra.mrb[0].mxu0 %v4275
  %v4314 = vpop.f32.mrb[0].mxu0
  %v4315 = vadd.f32 0.0, %v4314
  %v4316 = vpop.f32.mrb[0].mxu0
  %v4317 = vadd.f32 0.0, %v4316
  %v4318 = vpop.f32.mrb[0].mxu0
  %v4319 = vpop.f32.mrb[0].mxu0
  %4320 = vdwg.mxu0
  %v4321 = vmul.f32 %v4315, 0.11111111
  %v4322 = vmul.f32 %v4317, 0.11111111
  %v4323 = vadd.f32 %v4321, 1e-05
  %v4324 = vadd.f32 %v4322, 1e-05
  %v4325 = vrsqrt.pop %v4323
  %v4326 = vrsqrt.pop %v4324
  %v4327 = vmul.f32 %v4271, %v4325
  %v4328 = vmul.f32 %v4272, %v4326
  %v4329 = vld [vmem:[%s5] sm:$0x3]
  %v4331 = vlaneseq
  %v4332 = vshrl.u32 %v4331, 7
  %v4333 = vsub.s32 0, %v4332
  %v4334 = vrot.slane %v4329, %v4333
  %v4335 = vlaneseq
  %v4336 = vshrl.u32 %v4335, 7
  %v4337 = vsub.s32 1, %v4336
  %v4338 = vrot.slane %v4329, %v4337
  %v4341 = vmul.f32 %v4327, %v4334
  %v4342 = vmul.f32 %v4328, %v4338
  %v4343 = vld [vmem:[%s6] sm:$0x3]
  %v4345 = vlaneseq
  %v4346 = vshrl.u32 %v4345, 7
  %v4347 = vsub.s32 0, %v4346
  %v4348 = vrot.slane %v4343, %v4347
  %v4349 = vlaneseq
  %v4350 = vshrl.u32 %v4349, 7
  %v4351 = vsub.s32 1, %v4350
  %v4352 = vrot.slane %v4343, %v4351
  %v4355 = vadd.f32 %v4341, %v4348
  %v4356 = vadd.f32 %v4342, %v4352
  %v4357 = vld [vmem:[%s1] sm:$0x3]
  %v4358 = vpack.c.bf16 %v4355, %v4355
  %v4359 = vpack.c.bf16 %v4356, %v4356
  %v4360 = vld [vmem:[%s7] sm:$0xf]
  %v4361 = vld [vmem:[%s7 + $0x4] sm:$0xf]
  %v4362 = vld [vmem:[%s7 + $0x8] sm:$0xf]
  %v4363 = vld [vmem:[%s7 + $0xc] sm:$0xf]
  %v4364 = vld [vmem:[%s7 + $0x10] sm:$0xf]
  %v4365 = vld [vmem:[%s7 + $0x14] sm:$0xf]
  %v4366 = vld [vmem:[%s7 + $0x18] sm:$0xf]
  %v4367 = vld [vmem:[%s7 + $0x1c] sm:$0xf]
  %v4368 = vld [vmem:[%s7 + $0x20] sm:$0xf]
  %v4369 = vld [vmem:[%s7 + $0x24] sm:$0xf]
  %v4370 = vld [vmem:[%s7 + $0x28] sm:$0xf]
  %v4371 = vld [vmem:[%s7 + $0x2c] sm:$0xf]
  %v4372 = vld [vmem:[%s7 + $0x30] sm:$0xf]
  %v4373 = vld [vmem:[%s7 + $0x34] sm:$0xf]
  %v4374 = vld [vmem:[%s7 + $0x38] sm:$0xf]
  %v4375 = vld [vmem:[%s7 + $0x3c] sm:$0xf]
  %v4376 = vld [vmem:[%s7 + $0x40] sm:$0xf]
  %v4377 = vld [vmem:[%s7 + $0x44] sm:$0xf]
  %v4378 = vld [vmem:[%s7 + $0x48] sm:$0xf]
  %v4379 = vld [vmem:[%s7 + $0x4c] sm:$0xf]
  %v4380 = vld [vmem:[%s7 + $0x50] sm:$0xf]
  %v4381 = vld [vmem:[%s7 + $0x54] sm:$0xf]
  %v4382 = vld [vmem:[%s7 + $0x58] sm:$0xf]
  %v4383 = vld [vmem:[%s7 + $0x5c] sm:$0xf]
  %v4384 = vld [vmem:[%s7 + $0x60] sm:$0xf]
  %v4385 = vld [vmem:[%s7 + $0x64] sm:$0xf]
  %v4386 = vld [vmem:[%s7 + $0x68] sm:$0xf]
  %v4387 = vld [vmem:[%s7 + $0x6c] sm:$0xf]
  %v4388 = vld [vmem:[%s7 + $0x70] sm:$0x1]
  %v4389 = vpack.c.bf16 %v4357, %v4357
  %v4390 = vld [vmem:[%s8] sm:$0xf]
  %v4391 = vld [vmem:[%s8 + $0x4] sm:$0xf]
  %v4392 = vld [vmem:[%s8 + $0x8] sm:$0xf]
  %v4393 = vld [vmem:[%s8 + $0xc] sm:$0xf]
  %v4398 = vunpack.c.l.b16 %v4390
  %v4399 = vunpack.c.l.b16 %v4391
  %v4400 = vunpack.c.l.b16 %v4392
  %v4401 = vunpack.c.l.b16 %v4393
  %v4402 = vpack.c.b16 %v4399, %v4398
  %v4403 = vpack.c.b16 %v4401, %v4400
  %vm4406 = vcmask 261120
  %v4408 = vsel %vm4406, %v4389, 0
  %4410 = vmatprep.subr.bf16.mxu0 0
  %4411 = vmatpush1.bf16.msra.mxu0 %v4402
  %4412 = vmatprep.subr.bf16.mxu0 0
  %4413 = vmatpush1.bf16.msra.mxu0 %v4403
  %4414 = vmatprep.subr.bf16.mxu0 0
  %4415 = vmatpush1.bf16.msra.mxu0 0
  %4416 = vmatprep.subr.bf16.mxu0 0
  %4417 = vmatpush1.bf16.msra.mxu0 0
  %4418 = vmatprep.subr.bf16.mxu0 0
  %4419 = vmatpush1.bf16.msra.mxu0 0
  %4420 = vmatprep.subr.bf16.mxu0 0
  %4421 = vmatpush1.bf16.msra.mxu0 0
  %4422 = vmatprep.subr.bf16.mxu0 0
  %4423 = vmatpush1.bf16.msra.mxu0 0
  %4424 = vmatprep.subr.bf16.mxu0 0
  %4425 = vmatpush1.bf16.msra.mxu0 0
  %4426 = vmatprep.subr.bf16.mxu0 0
  %4427 = vmatpush1.bf16.msra.mxu0 0
  %4428 = vmatprep.subr.bf16.mxu0 0
  %4429 = vmatpush1.bf16.msra.mxu0 0
  %4430 = vmatprep.subr.bf16.mxu0 0
  %4431 = vmatpush1.bf16.msra.mxu0 0
  %4432 = vmatprep.subr.bf16.mxu0 0
  %4433 = vmatpush1.bf16.msra.mxu0 0
  %4434 = vmatprep.subr.bf16.mxu0 0
  %4435 = vmatpush1.bf16.msra.mxu0 0
  %4436 = vmatprep.subr.bf16.mxu0 0
  %4437 = vmatpush1.bf16.msra.mxu0 0
  %4438 = vmatprep.subr.bf16.mxu0 0
  %4439 = vmatpush1.bf16.msra.mxu0 0
  %4440 = vmatprep.subr.bf16.mxu0 0
  %4441 = vmatpush1.bf16.msra.mxu0 0
  %4442 = vmatprep.mubr.bf16.mxu0 0
  %4443 = vmatmul.mubr.bf16.gmra.mrb[0].mxu0 %v4408
  %v4444 = vpop.f32.mrb[0].mxu0
  %v4445 = vadd.f32 0.0, %v4444
  %v4446 = vpop.f32.mrb[0].mxu0
  %v4447 = vpop.f32.mrb[0].mxu0
  %v4448 = vpop.f32.mrb[0].mxu0
  %4449 = vdwg.mxu0
  %v4479 = vunpack.c.l.b16 %v4360
  %v4480 = vunpack.c.l.b16 %v4361
  %v4481 = vunpack.c.l.b16 %v4362
  %v4482 = vunpack.c.l.b16 %v4363
  %v4483 = vunpack.c.l.b16 %v4364
  %v4484 = vunpack.c.l.b16 %v4365
  %v4485 = vunpack.c.l.b16 %v4366
  %v4486 = vunpack.c.l.b16 %v4367
  %v4487 = vunpack.c.l.b16 %v4368
  %v4488 = vunpack.c.l.b16 %v4369
  %v4489 = vunpack.c.l.b16 %v4370
  %v4490 = vunpack.c.l.b16 %v4371
  %v4491 = vunpack.c.l.b16 %v4372
  %v4492 = vunpack.c.l.b16 %v4373
  %v4493 = vunpack.c.l.b16 %v4374
  %v4494 = vunpack.c.l.b16 %v4375
  %v4495 = vunpack.c.l.b16 %v4376
  %v4496 = vunpack.c.l.b16 %v4377
  %v4497 = vunpack.c.l.b16 %v4378
  %v4498 = vunpack.c.l.b16 %v4379
  %v4499 = vunpack.c.l.b16 %v4380
  %v4500 = vunpack.c.l.b16 %v4381
  %v4501 = vunpack.c.l.b16 %v4382
  %v4502 = vunpack.c.l.b16 %v4383
  %v4503 = vunpack.c.l.b16 %v4384
  %v4504 = vunpack.c.l.b16 %v4385
  %v4505 = vunpack.c.l.b16 %v4386
  %v4506 = vunpack.c.l.b16 %v4387
  %v4507 = vunpack.c.l.b16 %v4388
  %v4508 = vpack.c.b16 %v4480, %v4479
  %v4509 = vpack.c.b16 %v4482, %v4481
  %v4510 = vpack.c.b16 %v4484, %v4483
  %v4511 = vpack.c.b16 %v4486, %v4485
  %v4512 = vpack.c.b16 %v4488, %v4487
  %v4513 = vpack.c.b16 %v4490, %v4489
  %v4514 = vpack.c.b16 %v4492, %v4491
  %v4515 = vpack.c.b16 %v4494, %v4493
  %v4516 = vpack.c.b16 %v4496, %v4495
  %v4517 = vpack.c.b16 %v4498, %v4497
  %v4518 = vpack.c.b16 %v4500, %v4499
  %v4519 = vpack.c.b16 %v4502, %v4501
  %v4520 = vpack.c.b16 %v4504, %v4503
  %v4521 = vpack.c.b16 %v4506, %v4505
  %v4522 = vpack.c.b16 %v4507, %v4507
  %v4538 = vsel %vm1921, %v4359, 0
  %v4541 = vand.u32 %v4522, %v1927
  %4543 = vmatprep.subr.bf16.mxu0 0
  %4544 = vmatpush1.bf16.msra.mxu0 %v4508
  %4545 = vmatprep.subr.bf16.mxu0 0
  %4546 = vmatpush1.bf16.msra.mxu0 %v4509
  %4547 = vmatprep.subr.bf16.mxu0 0
  %4548 = vmatpush1.bf16.msra.mxu0 %v4510
  %4549 = vmatprep.subr.bf16.mxu0 0
  %4550 = vmatpush1.bf16.msra.mxu0 %v4511
  %4551 = vmatprep.subr.bf16.mxu0 0
  %4552 = vmatpush1.bf16.msra.mxu0 %v4512
  %4553 = vmatprep.subr.bf16.mxu0 0
  %4554 = vmatpush1.bf16.msra.mxu0 %v4513
  %4555 = vmatprep.subr.bf16.mxu0 0
  %4556 = vmatpush1.bf16.msra.mxu0 %v4514
  %4557 = vmatprep.subr.bf16.mxu0 0
  %4558 = vmatpush1.bf16.msra.mxu0 %v4515
  %4559 = vmatprep.subr.bf16.mxu0 0
  %4560 = vmatpush1.bf16.msra.mxu0 %v4516
  %4561 = vmatprep.subr.bf16.mxu0 0
  %4562 = vmatpush1.bf16.msra.mxu0 %v4517
  %4563 = vmatprep.subr.bf16.mxu0 0
  %4564 = vmatpush1.bf16.msra.mxu0 %v4518
  %4565 = vmatprep.subr.bf16.mxu0 0
  %4566 = vmatpush1.bf16.msra.mxu0 %v4519
  %4567 = vmatprep.subr.bf16.mxu0 0
  %4568 = vmatpush1.bf16.msra.mxu0 %v4520
  %4569 = vmatprep.subr.bf16.mxu0 0
  %4570 = vmatpush1.bf16.msra.mxu0 %v4521
  %4571 = vmatprep.subr.bf16.mxu0 0
  %4572 = vmatpush1.bf16.msra.mxu0 %v4541
  %4573 = vmatprep.subr.bf16.mxu0 0
  %4574 = vmatpush1.bf16.msra.mxu0 0
  %4575 = vmatprep.mubr.bf16.mxu0 %v4538
  %4576 = vmatmul.mubr.bf16.gmra.mrb[0].mxu0 %v4358
  %v4577 = vpop.f32.mrb[0].mxu0
  %v4578 = vadd.f32 %v4445, %v4577
  %v4579 = vpop.f32.mrb[0].mxu0
  %v4580 = vpop.f32.mrb[0].mxu0
  %v4581 = vpop.f32.mrb[0].mxu0
  %4582 = vdwg.mxu0
  %v4583 = vld [vmem:[%s9] sm:$0x1]
  %v4585 = vlaneseq
  %v4586 = vshrl.u32 %v4585, 7
  %v4587 = vsub.s32 0, %v4586
  %v4588 = vrot.slane %v4583, %v4587
  %v4590 = vadd.f32 %v4578, %v4588
  %v4591 = vxor.u32 %v4590, 2147483648
  %v4592 = vmul.f32 %v4591, 1.442695
  %v4593 = vpow.pop %v4592
  %v4594 = vadd.f32 %v4593, 1.0
  %v4595 = vrcp.pop %v4594
  %v4596 = vmul.f32 1.0, %v4595
  %v4597 = vtanh.pop %v4590
  %4599 = vrot.lane.b32.xlu0 %v4357, 96
  %v4600 = vpop.permute.xlu0 %4599
  %v4602 = vmul.f32 %v4596, %v4600
  %4604 = vrot.lane.b32.xlu0 %v4597, 64
  %v4605 = vpop.permute.xlu0 %4604
  %v4607 = vmul.f32 %v4596, %v4605
  %4609 = vrot.lane.b32.xlu0 %v4607, 32
  %v4610 = vpop.permute.xlu0 %4609
  %v4612 = vadd.f32 %v4602, %v4610
  %v4613 = vtanh.pop %v4612
  %4615 = vrot.lane.b32.xlu0 %v4613, 64
  %v4616 = vpop.permute.xlu0 %4615
  %v4618 = vmul.f32 %v4596, %v4616
  %v4619 = vpack.c.bf16 %v4618, %v4618
  %v4620 = vld [vmem:[%s10] sm:$0xf]
  %v4621 = vld [vmem:[%s10 + $0x4] sm:$0xf]
  %v4622 = vld [vmem:[%s10 + $0x8] sm:$0xf]
  %v4623 = vld [vmem:[%s10 + $0xc] sm:$0xf]
  %v4624 = vld [vmem:[%s11] sm:$0xf]
  %v4625 = vld [vmem:[%s11 + $0x4] sm:$0xf]
  %v4626 = vld [vmem:[%s11 + $0x8] sm:$0xf]
  %v4627 = vld [vmem:[%s11 + $0xc] sm:$0xf]
  %4629 = vrot.lane.b32.xlu0 %v4389, 96
  %v4630 = vpop.permute.xlu0 %4629
  %v4635 = vunpack.c.l.b16 %v4624
  %v4636 = vunpack.c.l.b16 %v4625
  %v4637 = vunpack.c.l.b16 %v4626
  %v4638 = vunpack.c.l.b16 %v4627
  %v4639 = vpack.c.b16 %v4636, %v4635
  %v4640 = vpack.c.b16 %v4638, %v4637
  %v4644 = vsel %vm4406, %v4630, 0
  %4646 = vmatprep.subr.bf16.mxu0 0
  %4647 = vmatpush1.bf16.msra.mxu0 %v4639
  %4648 = vmatprep.subr.bf16.mxu0 0
  %4649 = vmatpush1.bf16.msra.mxu0 %v4640
  %4650 = vmatprep.subr.bf16.mxu0 0
  %4651 = vmatpush1.bf16.msra.mxu0 0
  %4652 = vmatprep.subr.bf16.mxu0 0
  %4653 = vmatpush1.bf16.msra.mxu0 0
  %4654 = vmatprep.subr.bf16.mxu0 0
  %4655 = vmatpush1.bf16.msra.mxu0 0
  %4656 = vmatprep.subr.bf16.mxu0 0
  %4657 = vmatpush1.bf16.msra.mxu0 0
  %4658 = vmatprep.subr.bf16.mxu0 0
  %4659 = vmatpush1.bf16.msra.mxu0 0
  %4660 = vmatprep.subr.bf16.mxu0 0
  %4661 = vmatpush1.bf16.msra.mxu0 0
  %4662 = vmatprep.subr.bf16.mxu0 0
  %4663 = vmatpush1.bf16.msra.mxu0 0
  %4664 = vmatprep.subr.bf16.mxu0 0
  %4665 = vmatpush1.bf16.msra.mxu0 0
  %4666 = vmatprep.subr.bf16.mxu0 0
  %4667 = vmatpush1.bf16.msra.mxu0 0
  %4668 = vmatprep.subr.bf16.mxu0 0
  %4669 = vmatpush1.bf16.msra.mxu0 0
  %4670 = vmatprep.subr.bf16.mxu0 0
  %4671 = vmatpush1.bf16.msra.mxu0 0
  %4672 = vmatprep.subr.bf16.mxu0 0
  %4673 = vmatpush1.bf16.msra.mxu0 0
  %4674 = vmatprep.subr.bf16.mxu0 0
  %4675 = vmatpush1.bf16.msra.mxu0 0
  %4676 = vmatprep.subr.bf16.mxu0 0
  %4677 = vmatpush1.bf16.msra.mxu0 0
  %4678 = vmatprep.mubr.bf16.mxu0 0
  %4679 = vmatmul.mubr.bf16.gmra.mrb[0].mxu0 %v4644
  %v4680 = vpop.f32.mrb[0].mxu0
  %v4681 = vadd.f32 0.0, %v4680
  %v4682 = vpop.f32.mrb[0].mxu0
  %v4683 = vpop.f32.mrb[0].mxu0
  %v4684 = vpop.f32.mrb[0].mxu0
  %4685 = vdwg.mxu0
  %4687 = vrot.lane.b32.xlu0 %v4619, 32
  %v4688 = vpop.permute.xlu0 %4687
  %v4693 = vunpack.c.l.b16 %v4620
  %v4694 = vunpack.c.l.b16 %v4621
  %v4695 = vunpack.c.l.b16 %v4622
  %v4696 = vunpack.c.l.b16 %v4623
  %v4697 = vpack.c.b16 %v4694, %v4693
  %v4698 = vpack.c.b16 %v4696, %v4695
  %v4702 = vsel %vm4406, %v4688, 0
  %4704 = vmatprep.subr.bf16.mxu0 0
  %4705 = vmatpush1.bf16.msra.mxu0 %v4697
  %4706 = vmatprep.subr.bf16.mxu0 0
  %4707 = vmatpush1.bf16.msra.mxu0 %v4698
  %4708 = vmatprep.subr.bf16.mxu0 0
  %4709 = vmatpush1.bf16.msra.mxu0 0
  %4710 = vmatprep.subr.bf16.mxu0 0
  %4711 = vmatpush1.bf16.msra.mxu0 0
  %4712 = vmatprep.subr.bf16.mxu0 0
  %4713 = vmatpush1.bf16.msra.mxu0 0
  %4714 = vmatprep.subr.bf16.mxu0 0
  %4715 = vmatpush1.bf16.msra.mxu0 0
  %4716 = vmatprep.subr.bf16.mxu0 0
  %4717 = vmatpush1.bf16.msra.mxu0 0
  %4718 = vmatprep.subr.bf16.mxu0 0
  %4719 = vmatpush1.bf16.msra.mxu0 0
  %4720 = vmatprep.subr.bf16.mxu0 0
  %4721 = vmatpush1.bf16.msra.mxu0 0
  %4722 = vmatprep.subr.bf16.mxu0 0
  %4723 = vmatpush1.bf16.msra.mxu0 0
  %4724 = vmatprep.subr.bf16.mxu0 0
  %4725 = vmatpush1.bf16.msra.mxu0 0
  %4726 = vmatprep.subr.bf16.mxu0 0
  %4727 = vmatpush1.bf16.msra.mxu0 0
  %4728 = vmatprep.subr.bf16.mxu0 0
  %4729 = vmatpush1.bf16.msra.mxu0 0
  %4730 = vmatprep.subr.bf16.mxu0 0
  %4731 = vmatpush1.bf16.msra.mxu0 0
  %4732 = vmatprep.subr.bf16.mxu0 0
  %4733 = vmatpush1.bf16.msra.mxu0 0
  %4734 = vmatprep.subr.bf16.mxu0 0
  %4735 = vmatpush1.bf16.msra.mxu0 0
  %4736 = vmatprep.mubr.bf16.mxu0 0
  %4737 = vmatmul.mubr.bf16.gmra.mrb[0].mxu0 %v4702
  %v4738 = vpop.f32.mrb[0].mxu0
  %v4739 = vadd.f32 %v4681, %v4738
  %v4740 = vpop.f32.mrb[0].mxu0
  %v4741 = vpop.f32.mrb[0].mxu0
  %v4742 = vpop.f32.mrb[0].mxu0
  %4743 = vdwg.mxu0
  %v4744 = vld [vmem:[%s12] sm:$0x1]
  %v4746 = vlaneseq
  %v4747 = vshrl.u32 %v4746, 7
  %v4748 = vsub.s32 0, %v4747
  %v4749 = vrot.slane %v4744, %v4748
  %v4751 = vadd.f32 %v4739, %v4749
  %v4752 = vxor.u32 %v4751, 2147483648
  %v4753 = vmul.f32 %v4752, 1.442695
  %v4754 = vpow.pop %v4753
  %v4755 = vadd.f32 %v4754, 1.0
  %v4756 = vrcp.pop %v4755
  %v4757 = vmul.f32 1.0, %v4756
  %v4758 = vtanh.pop %v4751
  %4759 = vrot.lane.b32.xlu0 %v4357, 64
  %v4760 = vpop.permute.xlu0 %4759
  %v4762 = vmul.f32 %v4757, %v4760
  %4764 = vrot.lane.b32.xlu0 %v4758, 64
  %v4765 = vpop.permute.xlu0 %4764
  %v4767 = vmul.f32 %v4757, %v4765
  %4769 = vrot.lane.b32.xlu0 %v4767, 32
  %v4770 = vpop.permute.xlu0 %4769
  %v4772 = vadd.f32 %v4762, %v4770
  %v4773 = vtanh.pop %v4772
  %4775 = vrot.lane.b32.xlu0 %v4773, 64
  %v4776 = vpop.permute.xlu0 %4775
  %v4778 = vmul.f32 %v4757, %v4776
  %4780 = vrot.lane.b32.xlu0 %v4778, 32
  %v4781 = vpop.permute.xlu0 %4780
  %vm4783 = vcmask 254976
  %v4784 = vsel %vm4783, %v4781, 0.0
  %4785 = vadd.xlane.f32.xlu0 %v4784
  %v4786 = vpop.xlane.xlu0 %4785
  %v4787 = vrcp.pop 32.0
  %v4788 = vmul.f32 %v4786, %v4787
  %v4789 = vsub.f32 %v4778, %v4788
  %v4790 = vmul.f32 %v4789, %v4789
  %4792 = vrot.lane.b32.xlu0 %v4790, 32
  %v4793 = vpop.permute.xlu0 %4792
  %v4795 = vsel %vm4783, %v4793, 0.0
  %4796 = vadd.xlane.f32.xlu0 %v4795
  %v4797 = vpop.xlane.xlu0 %4796
  %v4798 = vmul.f32 %v4797, %v4787
  %v4799 = vadd.f32 %v4798, 1e-05
  %v4800 = vrsqrt.pop %v4799
  %v4801 = vmul.f32 %v4789, %v4800
  %v4802 = vld [vmem:[%s13] sm:$0x1]
  %v4804 = vlaneseq
  %v4805 = vshrl.u32 %v4804, 7
  %v4806 = vsub.s32 0, %v4805
  %v4807 = vrot.slane %v4802, %v4806
  %4808 = vrot.lane.b32.xlu0 %v4807, 96
  %v4809 = vpop.permute.xlu0 %4808
  %v4811 = vmul.f32 %v4801, %v4809
  %v4812 = vld [vmem:[%s14] sm:$0x1]
  %v4814 = vlaneseq
  %v4815 = vshrl.u32 %v4814, 7
  %v4816 = vsub.s32 0, %v4815
  %v4817 = vrot.slane %v4812, %v4816
  %4818 = vrot.lane.b32.xlu0 %v4817, 96
  %v4819 = vpop.permute.xlu0 %4818
  %v4821 = vadd.f32 %v4811, %v4819
  %v4822 = vld [vmem:[%s15] sm:$0xf]
  %v4823 = vld [vmem:[%s15 + $0x4] sm:$0xf]
  %v4824 = vld [vmem:[%s15 + $0x8] sm:$0xf]
  %v4825 = vld [vmem:[%s15 + $0xc] sm:$0xf]
  %v4826 = vld [vmem:[%s15 + $0x10] sm:$0xf]
  %v4827 = vld [vmem:[%s15 + $0x14] sm:$0xf]
  %v4828 = vld [vmem:[%s15 + $0x18] sm:$0xf]
  %v4829 = vld [vmem:[%s15 + $0x1c] sm:$0xf]
  %v4830 = vld [vmem:[%s15 + $0x20] sm:$0xf]
  %v4831 = vld [vmem:[%s15 + $0x24] sm:$0xf]
  %v4832 = vld [vmem:[%s15 + $0x28] sm:$0xf]
  %v4833 = vld [vmem:[%s15 + $0x2c] sm:$0xf]
  %v4834 = vld [vmem:[%s15 + $0x30] sm:$0xf]
  %v4835 = vld [vmem:[%s15 + $0x34] sm:$0xf]
  %v4836 = vld [vmem:[%s15 + $0x38] sm:$0xf]
  %v4837 = vld [vmem:[%s15 + $0x3c] sm:$0xf]
  %v4838 = vld [vmem:[%s15 + $0x40] sm:$0xf]
  %v4839 = vld [vmem:[%s15 + $0x44] sm:$0xf]
  %v4840 = vld [vmem:[%s15 + $0x48] sm:$0xf]
  %v4841 = vld [vmem:[%s15 + $0x4c] sm:$0xf]
  %v4842 = vld [vmem:[%s15 + $0x50] sm:$0xf]
  %v4843 = vld [vmem:[%s15 + $0x54] sm:$0xf]
  %v4844 = vld [vmem:[%s15 + $0x58] sm:$0xf]
  %v4845 = vld [vmem:[%s15 + $0x5c] sm:$0xf]
  %v4846 = vld [vmem:[%s15 + $0x60] sm:$0xf]
  %v4847 = vld [vmem:[%s15 + $0x64] sm:$0xf]
  %v4848 = vld [vmem:[%s15 + $0x68] sm:$0xf]
  %v4849 = vld [vmem:[%s15 + $0x6c] sm:$0xf]
  %v4850 = vld [vmem:[%s15 + $0x70] sm:$0xf]
  %v4851 = vld [vmem:[%s15 + $0x74] sm:$0xf]
  %v4852 = vld [vmem:[%s15 + $0x78] sm:$0xf]
  %v4853 = vld [vmem:[%s15 + $0x7c] sm:$0xf]
  %v4854 = vld [vmem:[%s15 + $0x80] sm:$0xf]
  %v4855 = vld [vmem:[%s15 + $0x84] sm:$0xf]
  %v4856 = vld [vmem:[%s15 + $0x88] sm:$0xf]
  %v4857 = vld [vmem:[%s15 + $0x8c] sm:$0xf]
  %v4858 = vld [vmem:[%s15 + $0x90] sm:$0xf]
  %v4859 = vld [vmem:[%s15 + $0x94] sm:$0xf]
  %v4860 = vld [vmem:[%s15 + $0x98] sm:$0xf]
  %v4861 = vld [vmem:[%s15 + $0x9c] sm:$0xf]
  %v4862 = vld [vmem:[%s15 + $0xa0] sm:$0xf]
  %v4863 = vld [vmem:[%s15 + $0xa4] sm:$0x1]
  %v4864 = vld [vmem:[%s16] sm:$0x1]
  %v4866 = vlaneseq
  %v4867 = vshrl.u32 %v4866, 7
  %v4868 = vsub.s32 0, %v4867
  %v4869 = vrot.slane %v4864, %v4868
  %v4913 = vunpack.c.l.b16 %v4822
  %v4914 = vunpack.c.l.b16 %v4823
  %v4915 = vunpack.c.l.b16 %v4824
  %v4916 = vunpack.c.l.b16 %v4825
  %v4917 = vunpack.c.l.b16 %v4826
  %v4918 = vunpack.c.l.b16 %v4827
  %v4919 = vunpack.c.l.b16 %v4828
  %v4920 = vunpack.c.l.b16 %v4829
  %v4921 = vunpack.c.l.b16 %v4830
  %v4922 = vunpack.c.l.b16 %v4831
  %v4923 = vunpack.c.l.b16 %v4832
  %v4924 = vunpack.c.l.b16 %v4833
  %v4925 = vunpack.c.l.b16 %v4834
  %v4926 = vunpack.c.l.b16 %v4835
  %v4927 = vunpack.c.l.b16 %v4836
  %v4928 = vunpack.c.l.b16 %v4837
  %v4929 = vunpack.c.l.b16 %v4838
  %v4930 = vunpack.c.l.b16 %v4839
  %v4931 = vunpack.c.l.b16 %v4840
  %v4932 = vunpack.c.l.b16 %v4841
  %v4933 = vunpack.c.l.b16 %v4842
  %v4934 = vunpack.c.l.b16 %v4843
  %v4935 = vunpack.c.l.b16 %v4844
  %v4936 = vunpack.c.l.b16 %v4845
  %v4937 = vunpack.c.l.b16 %v4846
  %v4938 = vunpack.c.l.b16 %v4847
  %v4939 = vunpack.c.l.b16 %v4848
  %v4940 = vunpack.c.l.b16 %v4849
  %v4941 = vunpack.c.l.b16 %v4850
  %v4942 = vunpack.c.l.b16 %v4851
  %v4943 = vunpack.c.l.b16 %v4852
  %v4944 = vunpack.c.l.b16 %v4853
  %v4945 = vunpack.c.l.b16 %v4854
  %v4946 = vunpack.c.l.b16 %v4855
  %v4947 = vunpack.c.l.b16 %v4856
  %v4948 = vunpack.c.l.b16 %v4857
  %v4949 = vunpack.c.l.b16 %v4858
  %v4950 = vunpack.c.l.b16 %v4859
  %v4951 = vunpack.c.l.b16 %v4860
  %v4952 = vunpack.c.l.b16 %v4861
  %v4953 = vunpack.c.l.b16 %v4862
  %v4954 = vunpack.c.l.b16 %v4863
  %v4955 = vpack.c.b16 %v4914, %v4913
  %v4956 = vpack.c.b16 %v4916, %v4915
  %v4957 = vpack.c.b16 %v4918, %v4917
  %v4958 = vpack.c.b16 %v4920, %v4919
  %v4959 = vpack.c.b16 %v4922, %v4921
  %v4960 = vpack.c.b16 %v4924, %v4923
  %v4961 = vpack.c.b16 %v4926, %v4925
  %v4962 = vpack.c.b16 %v4928, %v4927
  %v4963 = vpack.c.b16 %v4930, %v4929
  %v4964 = vpack.c.b16 %v4932, %v4931
  %v4965 = vpack.c.b16 %v4934, %v4933
  %v4966 = vpack.c.b16 %v4936, %v4935
  %v4967 = vpack.c.b16 %v4938, %v4937
  %v4968 = vpack.c.b16 %v4940, %v4939
  %v4969 = vpack.c.b16 %v4942, %v4941
  %v4970 = vpack.c.b16 %v4944, %v4943
  %v4971 = vpack.c.b16 %v4946, %v4945
  %v4972 = vpack.c.b16 %v4948, %v4947
  %v4973 = vpack.c.b16 %v4950, %v4949
  %v4974 = vpack.c.b16 %v4952, %v4951
  %v4975 = vpack.c.b16 %v4954, %v4953
  %v4997 = vand.u32 %v4975, %v1336
  %4999 = vmatprep.subr.bf16.mxu0 0
  %5000 = vmatpush1.bf16.msra.mxu0 %v4955
  %5001 = vmatprep.subr.bf16.mxu0 0
  %5002 = vmatpush1.bf16.msra.mxu0 %v4956
  %5003 = vmatprep.subr.bf16.mxu0 0
  %5004 = vmatpush1.bf16.msra.mxu0 %v4957
  %5005 = vmatprep.subr.bf16.mxu0 0
  %5006 = vmatpush1.bf16.msra.mxu0 %v4958
  %5007 = vmatprep.subr.bf16.mxu0 0
  %5008 = vmatpush1.bf16.msra.mxu0 %v4959
  %5009 = vmatprep.subr.bf16.mxu0 0
  %5010 = vmatpush1.bf16.msra.mxu0 %v4960
  %5011 = vmatprep.subr.bf16.mxu0 0
  %5012 = vmatpush1.bf16.msra.mxu0 %v4961
  %5013 = vmatprep.subr.bf16.mxu0 0
  %5014 = vmatpush1.bf16.msra.mxu0 %v4962
  %5015 = vmatprep.subr.bf16.mxu0 0
  %5016 = vmatpush1.bf16.msra.mxu0 %v4963
  %5017 = vmatprep.subr.bf16.mxu0 0
  %5018 = vmatpush1.bf16.msra.mxu0 %v4964
  %5019 = vmatprep.subr.bf16.mxu0 0
  %5020 = vmatpush1.bf16.msra.mxu0 %v4965
  %5021 = vmatprep.subr.bf16.mxu0 0
  %5022 = vmatpush1.bf16.msra.mxu0 %v4966
  %5023 = vmatprep.subr.bf16.mxu0 0
  %5024 = vmatpush1.bf16.msra.mxu0 %v4967
  %5025 = vmatprep.subr.bf16.mxu0 0
  %5026 = vmatpush1.bf16.msra.mxu0 %v4968
  %5027 = vmatprep.subr.bf16.mxu0 0
  %5028 = vmatpush1.bf16.msra.mxu0 %v4969
  %5029 = vmatprep.subr.bf16.mxu0 0
  %5030 = vmatpush1.bf16.msra.mxu0 %v4970
  %5031 = vmatprep.mubr.bf16.mxu0 %v368
  %5032 = vmatmul.mubr.bf16.gmra.mrb[0].mxu0 %v361
  %v5033 = vpop.f32.mrb[0].mxu0
  %v5034 = vadd.f32 %v4869, %v5033
  %v5035 = vpop.f32.mrb[0].mxu0
  %v5036 = vpop.f32.mrb[0].mxu0
  %v5037 = vpop.f32.mrb[0].mxu0
  %5038 = vdwg.mxu0
  %5039 = vmatprep.subr.bf16.mxu0 0
  %5040 = vmatpush1.bf16.msra.mxu0 %v4971
  %5041 = vmatprep.subr.bf16.mxu0 0
  %5042 = vmatpush1.bf16.msra.mxu0 %v4972
  %5043 = vmatprep.subr.bf16.mxu0 0
  %5044 = vmatpush1.bf16.msra.mxu0 %v4973
  %5045 = vmatprep.subr.bf16.mxu0 0
  %5046 = vmatpush1.bf16.msra.mxu0 %v4974
  %5047 = vmatprep.subr.bf16.mxu0 0
  %5048 = vmatpush1.bf16.msra.mxu0 %v4997
  %5049 = vmatprep.subr.bf16.mxu0 0
  %5050 = vmatpush1.bf16.msra.mxu0 0
  %5051 = vmatprep.subr.bf16.mxu0 0
  %5052 = vmatpush1.bf16.msra.mxu0 0
  %5053 = vmatprep.subr.bf16.mxu0 0
  %5054 = vmatpush1.bf16.msra.mxu0 0
  %5055 = vmatprep.subr.bf16.mxu0 0
  %5056 = vmatpush1.bf16.msra.mxu0 0
  %5057 = vmatprep.subr.bf16.mxu0 0
  %5058 = vmatpush1.bf16.msra.mxu0 0
  %5059 = vmatprep.subr.bf16.mxu0 0
  %5060 = vmatpush1.bf16.msra.mxu0 0
  %5061 = vmatprep.subr.bf16.mxu0 0
  %5062 = vmatpush1.bf16.msra.mxu0 0
  %5063 = vmatprep.subr.bf16.mxu0 0
  %5064 = vmatpush1.bf16.msra.mxu0 0
  %5065 = vmatprep.subr.bf16.mxu0 0
  %5066 = vmatpush1.bf16.msra.mxu0 0
  %5067 = vmatprep.subr.bf16.mxu0 0
  %5068 = vmatpush1.bf16.msra.mxu0 0
  %5069 = vmatprep.subr.bf16.mxu0 0
  %5070 = vmatpush1.bf16.msra.mxu0 0
  %5071 = vmatprep.mubr.bf16.mxu0 0
  %5072 = vmatmul.mubr.bf16.gmra.mrb[0].mxu0 %v1331
  %v5073 = vpop.f32.mrb[0].mxu0
  %v5074 = vadd.f32 %v5034, %v5073
  %v5075 = vpop.f32.mrb[0].mxu0
  %v5076 = vpop.f32.mrb[0].mxu0
  %v5077 = vpop.f32.mrb[0].mxu0
  %5078 = vdwg.mxu0
  %5080 = vrot.lane.b32.xlu0 %v4821, 32
  %v5081 = vpop.permute.xlu0 %5080
  %v5083 = vadd.f32 %v5074, %v5081
  %5084 = vst.msk [vmem:[%s17] sm:$0x3] %vm4783, %v5083
  %v5087 = vunpack.c.l.s4 1983009808
  %v5088 = vunpack.c.0.s8 %v5087
  %v5089 = vlaneseq
  %v5090 = vshrl.u32 %v5089, 7
  %v5091 = vsub.s32 %v5088, %v5090
  %v5092 = vrot.slane %v4618, %v5091
  %5093 = vrot.lane.b32.xlu0 %v5092, 64
  %v5094 = vpop.permute.xlu0 %5093
  %vm5096 = vcmask 517376
  %5097 = vst.msk [vmem:[%s17] sm:$0x3] %vm5096, %v5094
  %v5099 = vunpack.c.l.s4 1983009808
  %v5100 = vunpack.c.0.s8 %v5099
  %v5101 = vlaneseq
  %v5102 = vshrl.u32 %v5101, 7
  %v5103 = vsub.s32 %v5100, %v5102
  %v5104 = vrot.slane %v4778, %v5103
  %5105 = vrot.lane.b32.xlu0 %v5104, 96
  %v5106 = vpop.permute.xlu0 %5105
  %vm5108 = vcmask 779776
  %5109 = vst.msk [vmem:[%s17] sm:$0x3] %vm5108, %v5106
  %v5112 = vunpack.c.l.s4 1983009808
  %v5113 = vunpack.c.0.s8 %v5112
  %v5114 = vlaneseq
  %v5115 = vshrl.u32 %v5114, 7
  %v5116 = vsub.s32 %v5113, %v5115
  %v5117 = vrot.slane %v4612, %v5116
  %5118 = vrot.lane.b32.xlu0 %v5117, 64
  %v5119 = vpop.permute.xlu0 %5118
  %vm5121 = vcmask 1042176
  %5122 = vst.msk [vmem:[%s17] sm:$0x3] %vm5121, %v5119
  %v5125 = vunpack.c.l.s4 1983009808
  %v5126 = vunpack.c.0.s8 %v5125
  %v5127 = vlaneseq
  %v5128 = vshrl.u32 %v5127, 7
  %v5129 = vsub.s32 %v5126, %v5128
  %v5130 = vrot.slane %v4772, %v5129
  %5131 = vrot.lane.b32.xlu0 %v5130, 96
  %v5132 = vpop.permute.xlu0 %5131
  %5134 = vst.msk [vmem:[%s17 + $0x2] sm:$0x3] %vm4783, %v5132
  // Predicated region
  $region70: #{lazy_planner_starter.1} parent=0 // pred_check
    _
  $region71: #{lazy_planner_starter.1} parent=0 // pred_check_branch
    %5136 = sbr.rel (0) target = $region73
  $region72: #{lazy_planner_starter.1} parent=0 // pred_region
    _
  $region73: #{lazy_planner_starter.1} parent=0 // pred_fallthru
    _
  // Predicated region
  $region74: #{lazy_planner_starter.1} parent=0 // pred_check
    _
  $region75: #{lazy_planner_starter.1} parent=0 // pred_check_branch
    %5138 = sbr.rel (0) target = $region77
  $region76: #{lazy_planner_starter.1} parent=0 // pred_region
    _
  $region77: #{lazy_planner_starter.1} parent=0 // pred_fallthru
    _

</llo_original>
